<compile_context>
chip_gen: v7x
topology: tpu7x:2x2x1
jax: 0.10.0
libtpu: 0.0.40
codegen_flags: <defaults>
</compile_context>

<pallas_src>
import jax
import jax.numpy as jnp
from jax.experimental import pallas as pl
from jax.experimental.pallas import tpu as pltpu

# ------------------------- configuration (small shapes) ----------------------
B = 2          # batch
IN_CH = 3      # image channels
IMG = 16       # image H = W
PATCH = 4      # patch size
EMBED_DIM = 32
MLP_DIM = 256  # LatentMLP hidden dim (reference: LatentMLP(dim, 2, 256))
H = 4          # number of frames / hierarchy depth (reference default 11)
NUM_TOKENS = (IMG // PATCH) * (IMG // PATCH)   # 16
PATCH_DIM = PATCH * PATCH * IN_CH              # 48
BN_TOK = B * NUM_TOKENS                        # 32 rows per frame
LN_EPS = 1e-5
BN_EPS = 1e-5
LEAKY_SLOPE = 0.01


def full_spec(shape):
    """Whole-array block for a trivially-gridded pallas_call (grid=(1,))."""
    return pl.BlockSpec(shape, lambda i: (0,) * len(shape))


# ------------------------------- Pallas kernels -------------------------------
def patch_embed_kernel(p_ref, w_ref, b_ref, pos_ref, o_ref):
    # p: (H*B*N, Pd)  w: (Pd, D)  b: (1, D)  pos: (H*B*N, D)  o: (H*B*N, D)
    o_ref[...] = (
        jnp.dot(p_ref[...], w_ref[...], preferred_element_type=jnp.float32)
        + b_ref[...]
        + pos_ref[...]
    )


def jepa_layers_kernel(
    xf_ref, yf_ref,
    exw_ref, exb_ref, eyw_ref, eyb_ref,
    hxw_ref, hxb_ref, hyw_ref, hyb_ref,
    lng_ref, lnb_ref,
    w1_ref, b1_ref, bng_ref, bnb_ref, w2_ref, b2_ref,
    pw_ref, pb_ref,
    pred_ref, sx_ref, sy_ref, loss_ref,
    sumx_ref, sumy_ref,
):
    """One fused JEPA layer per grid step; history carried in VMEM scratch."""
    l = pl.program_id(0)

    @pl.when(l == 0)
    def _init():
        sumx_ref[...] = jnp.zeros_like(sumx_ref)
        sumy_ref[...] = jnp.zeros_like(sumy_ref)
        loss_ref[...] = jnp.zeros_like(loss_ref)

    g = lng_ref[0]          # (1, D)
    bt = lnb_ref[0]         # (1, D)

    def layer_norm(v):
        mu = jnp.mean(v, axis=-1, keepdims=True)
        var = jnp.mean((v - mu) ** 2, axis=-1, keepdims=True)
        return (v - mu) * jax.lax.rsqrt(var + LN_EPS) * g + bt

    inv_hist = 1.0 / (l + 1).astype(jnp.float32)

    # ---- x branch: encoder -> LN -> history mean -> hsa -> LN ----
    x = xf_ref[0]                                                   # (BN, D)
    x_e = layer_norm(
        jnp.dot(x, exw_ref[0], preferred_element_type=jnp.float32) + exb_ref[0])
    sumx_ref[...] = sumx_ref[...] + x_e
    x_h = layer_norm(
        jnp.dot(sumx_ref[...] * inv_hist, hxw_ref[0],
                preferred_element_type=jnp.float32) + hxb_ref[0])

    # ---- y branch (torch wraps it in no_grad; forward math identical) ----
    y = yf_ref[0]
    y_e = layer_norm(
        jnp.dot(y, eyw_ref[0], preferred_element_type=jnp.float32) + eyb_ref[0])
    sumy_ref[...] = sumy_ref[...] + y_e
    y_h = layer_norm(
        jnp.dot(sumy_ref[...] * inv_hist, hyw_ref[0],
                preferred_element_type=jnp.float32) + hyb_ref[0])

    # ---- LatentMLP projection: 2 fused (Linear -> BN -> LeakyReLU -> Linear) blocks
    z = x_h
    for blk in range(2):  # static unroll; hidden (BN, 256) stays resident
        h = jnp.dot(z, w1_ref[0, blk], preferred_element_type=jnp.float32) + b1_ref[0, blk]
        mu = jnp.mean(h, axis=0, keepdims=True)
        var = jnp.mean((h - mu) ** 2, axis=0, keepdims=True)       # training-mode BN stats
        hn = (h - mu) * jax.lax.rsqrt(var + BN_EPS) * bng_ref[0, blk] + bnb_ref[0, blk]
        a = jnp.where(hn > 0, hn, LEAKY_SLOPE * hn)
        z = jnp.dot(a, w2_ref[0, blk], preferred_element_type=jnp.float32) + b2_ref[0, blk]

    # ---- fused L1 latent loss: mean over (B, D) of sum_N |z| == sum|z| / (B*D)
    val = jnp.sum(jnp.abs(z)) / jnp.float32(B * EMBED_DIM)
    col = jax.lax.broadcasted_iota(jnp.int32, loss_ref.shape, 1)
    loss_ref[...] = loss_ref[...] + jnp.where(col == l, val, 0.0)

    # ---- residual + predictor + outputs ----
    xz = x_h + z
    pred_ref[0] = jnp.dot(xz, pw_ref[0], preferred_element_type=jnp.float32) + pb_ref[0]
    sx_ref[0] = xz
    sy_ref[0] = y_h


# ---------------------------- pallas_call wrappers ----------------------------
def patch_embed_call(patches2d, w, b, pos_full):
    R, Pd = patches2d.shape
    D = w.shape[1]
    return pl.pallas_call(
        patch_embed_kernel,
        out_shape=jax.ShapeDtypeStruct((R, D), jnp.float32),
        grid=(1,),
        in_specs=[full_spec((R, Pd)), full_spec((Pd, D)),
                  full_spec((1, D)), full_spec((R, D))],
        out_specs=full_spec((R, D)),
    )(patches2d, w, b, pos_full)


def jepa_layers_call(frames_embed, p):
    L = H - 1
    BN = BN_TOK
    D = EMBED_DIM

    def per_layer(*tail):
        zeros = (0,) * len(tail)

        def idx(l):
            return (l,) + zeros

        return pl.BlockSpec((1,) + tail, idx)

    in_specs = [
        pl.BlockSpec((1, BN, D), lambda l: (l + 1, 0, 0)),   # x = frame l+1
        pl.BlockSpec((1, BN, D), lambda l: (l, 0, 0)),       # y = frame l
        per_layer(D, D), per_layer(1, D),                    # enc_x
        per_layer(D, D), per_layer(1, D),                    # enc_y
        per_layer(D, D), per_layer(1, D),                    # hsa_x
        per_layer(D, D), per_layer(1, D),                    # hsa_y
        per_layer(1, D), per_layer(1, D),                    # LN gamma/beta
        per_layer(2, D, MLP_DIM), per_layer(2, 1, MLP_DIM),  # proj w1/b1
        per_layer(2, 1, MLP_DIM), per_layer(2, 1, MLP_DIM),  # proj bn g/b
        per_layer(2, MLP_DIM, D), per_layer(2, 1, D),        # proj w2/b2
        per_layer(D, D), per_layer(1, D),                    # predictor
    ]
    out_specs = [
        pl.BlockSpec((1, BN, D), lambda l: (l, 0, 0)),       # preds
        pl.BlockSpec((1, BN, D), lambda l: (l, 0, 0)),       # sx embeds
        pl.BlockSpec((1, BN, D), lambda l: (l, 0, 0)),       # sy embeds
        pl.BlockSpec((1, L), lambda l: (0, 0)),              # losses (resident)
    ]
    out_shape = [
        jax.ShapeDtypeStruct((L, BN, D), jnp.float32),
        jax.ShapeDtypeStruct((L, BN, D), jnp.float32),
        jax.ShapeDtypeStruct((L, BN, D), jnp.float32),
        jax.ShapeDtypeStruct((1, L), jnp.float32),
    ]
    return pl.pallas_call(
        jepa_layers_kernel,
        out_shape=out_shape,
        grid=(L,),
        in_specs=in_specs,
        out_specs=out_specs,
        scratch_shapes=[
            pltpu.VMEM((BN, D), jnp.float32),   # running sum of enc_xs
            pltpu.VMEM((BN, D), jnp.float32),   # running sum of enc_ys
        ],
        compiler_params=pltpu.CompilerParams(
            dimension_semantics=("arbitrary",)),   # history carried across layers
    )(
        frames_embed, frames_embed,
        p["enc_x_w"], p["enc_x_b"], p["enc_y_w"], p["enc_y_b"],
        p["hsa_x_w"], p["hsa_x_b"], p["hsa_y_w"], p["hsa_y_b"],
        p["ln_g"], p["ln_b"],
        p["proj_w1"], p["proj_b1"], p["bn_g"], p["bn_b"], p["proj_w2"], p["proj_b2"],
        p["pred_w"], p["pred_b"],
    )


# ------------------------------- model glue -----------------------------------
def patchify(frames, p):
    # frames: (F, C, H, W) -> (F, num_tokens, C*p*p); patch flattened as (C, ph, pw)
    F, C, Hh, Ww = frames.shape
    nh, nw = Hh // p, Ww // p
    x = frames.reshape(F, C, nh, p, nw, p)
    x = jnp.transpose(x, (0, 2, 4, 1, 3, 5))
    return x.reshape(F, nh * nw, C * p * p)


def hjepa_forward(video, params):
    # video: (B, C, IMG, IMG, T=H)
    L = H - 1
    frames = jnp.moveaxis(video, -1, 0)                               # (H, B, C, IMG, IMG)
    patches = patchify(frames.reshape(H * B, IN_CH, IMG, IMG), PATCH)  # (H*B, N, Pd)
    patches2d = patches.reshape(H * B * NUM_TOKENS, PATCH_DIM)
    pos_full = jnp.tile(params["pos"], (H * B, 1))                    # (H*B*N, D)

    emb2d = patch_embed_call(patches2d, params["patch_w"], params["patch_b"], pos_full)
    frames_embed = emb2d.reshape(H, BN_TOK, EMBED_DIM)                # (H, B*N, D)

    preds, sx, sy, losses = jepa_layers_call(frames_embed, params)

    s_preds = [preds[i].reshape(B, NUM_TOKENS, EMBED_DIM) for i in range(L)]
    sx_embeds = [sx[i].reshape(B, NUM_TOKENS, EMBED_DIM) for i in range(L)]
    sy_embeds = [sy[i].reshape(B, NUM_TOKENS, EMBED_DIM) for i in range(L)]
    loss_list = [losses[0, i] for i in range(L)]
    return s_preds, sx_embeds, sy_embeds, loss_list


hjepa_forward_jit = jax.jit(hjepa_forward)


# ------------------------------ parameter init --------------------------------
def init_params(key):
    ks = iter(jax.random.split(key, 64))
    L = H - 1

    def nrm(shape, scale=0.02):
        return scale * jax.random.normal(next(ks), shape, dtype=jnp.float32)

    p = {}
    conv_w = nrm((EMBED_DIM, IN_CH, PATCH, PATCH), scale=1.0 / (PATCH_DIM ** 0.5))
    p["patch_w"] = conv_w.reshape(EMBED_DIM, PATCH_DIM).T             # (Pd, D)
    p["patch_b"] = jnp.zeros((1, EMBED_DIM), jnp.float32)
    p["pos"] = jax.random.normal(next(ks), (NUM_TOKENS, EMBED_DIM), dtype=jnp.float32)

    def lin_stack():
        return nrm((L, EMBED_DIM, EMBED_DIM)), jnp.zeros((L, 1, EMBED_DIM), jnp.float32)

    p["enc_x_w"], p["enc_x_b"] = lin_stack()
    p["enc_y_w"], p["enc_y_b"] = lin_stack()
    p["hsa_x_w"], p["hsa_x_b"] = lin_stack()
    p["hsa_y_w"], p["hsa_y_b"] = lin_stack()
    p["pred_w"], p["pred_b"] = lin_stack()
    p["ln_g"] = jnp.ones((L, 1, EMBED_DIM), jnp.float32)
    p["ln_b"] = jnp.zeros((L, 1, EMBED_DIM), jnp.float32)

    p["proj_w1"] = nrm((L, 2, EMBED_DIM, MLP_DIM))
    p["proj_b1"] = jnp.zeros((L, 2, 1, MLP_DIM), jnp.float32)
    p["bn_g"] = jnp.ones((L, 2, 1, MLP_DIM), jnp.float32)
    p["bn_b"] = jnp.zeros((L, 2, 1, MLP_DIM), jnp.float32)
    p["proj_w2"] = nrm((L, 2, MLP_DIM, EMBED_DIM))
    p["proj_b2"] = jnp.zeros((L, 2, 1, EMBED_DIM), jnp.float32)
    return p


# ----------------------------------- main --------------------------------------
if __name__ == "__main__":
    key = jax.random.PRNGKey(0)
    k_video, k_params = jax.random.split(key)
    video = jax.random.normal(k_video, (B, IN_CH, IMG, IMG, H), dtype=jnp.float32)
    params = init_params(k_params)

    s_preds, sx_embeds, sy_embeds, losses = hjepa_forward_jit(video, params)
    jax.block_until_ready((s_preds, sx_embeds, sy_embeds, losses))

    # light sanity checks on shapes
    assert len(s_preds) == H - 1
    assert len(losses) == H - 1
    assert s_preds[0].shape == (B, NUM_TOKENS, EMBED_DIM)
    assert sx_embeds[0].shape == (B, NUM_TOKENS, EMBED_DIM)
    assert sy_embeds[-1].shape == (B, NUM_TOKENS, EMBED_DIM)
    print("KERNEL_OK")
</pallas_src>

<mosaic_0001>
module attributes {stable_mosaic.version = 11 : i64} {
  func.func @patch_embed_kernel(%arg0: i32, %arg1: memref<128x48xf32, #tpu.memory_space<vmem>>, %arg2: memref<48x32xf32, #tpu.memory_space<vmem>>, %arg3: memref<1x32xf32, #tpu.memory_space<vmem>>, %arg4: memref<128x32xf32, #tpu.memory_space<vmem>>, %arg5: memref<128x32xf32, #tpu.memory_space<vmem>>) attributes {dimension_semantics = [#tpu.dimension_semantics<arbitrary>], iteration_bounds = array<i64: 1>, scalar_prefetch = 0 : i64, scratch_operands = 0 : i64, tpu.core_type = #tpu.core_type<tc>, window_params = [{pipeline_mode = #tpu.pipeline_mode<synchronous>, transform_indices = @transform_0, window_bounds = array<i64: 128, 48>}, {pipeline_mode = #tpu.pipeline_mode<synchronous>, transform_indices = @transform_1, window_bounds = array<i64: 48, 32>}, {pipeline_mode = #tpu.pipeline_mode<synchronous>, transform_indices = @transform_2, window_bounds = array<i64: 1, 32>}, {pipeline_mode = #tpu.pipeline_mode<synchronous>, transform_indices = @transform_3, window_bounds = array<i64: 128, 32>}, {pipeline_mode = #tpu.pipeline_mode<synchronous>, transform_indices = @transform_4, window_bounds = array<i64: 128, 32>}]} {
    %c0 = arith.constant 0 : index
    %c0_0 = arith.constant 0 : index
    %0 = vector.load %arg1[%c0, %c0_0] : memref<128x48xf32, #tpu.memory_space<vmem>>, vector<128x48xf32>
    %c0_1 = arith.constant 0 : index
    %c0_2 = arith.constant 0 : index
    %1 = vector.load %arg2[%c0_1, %c0_2] : memref<48x32xf32, #tpu.memory_space<vmem>>, vector<48x32xf32>
    %cst = arith.constant dense<0.000000e+00> : vector<128x32xf32>
    %2 = tpu.matmul %0, %1, %cst {dimension_numbers = #tpu.dot_dimension_numbers<[1], [0], [0], [1], [0, 0, 1, 1], [], []>} : vector<128x48xf32>, vector<48x32xf32>, vector<128x32xf32> -> vector<128x32xf32>
    %c0_3 = arith.constant 0 : index
    %c0_4 = arith.constant 0 : index
    %3 = vector.load %arg3[%c0_3, %c0_4] : memref<1x32xf32, #tpu.memory_space<vmem>>, vector<1x32xf32>
    %4 = vector.broadcast %3 : vector<1x32xf32> to vector<128x32xf32>
    %5 = arith.addf %2, %4 : vector<128x32xf32>
    %c0_5 = arith.constant 0 : index
    %c0_6 = arith.constant 0 : index
    %6 = vector.load %arg4[%c0_5, %c0_6] : memref<128x32xf32, #tpu.memory_space<vmem>>, vector<128x32xf32>
    %7 = arith.addf %5, %6 : vector<128x32xf32>
    %c0_7 = arith.constant 0 : index
    %c0_8 = arith.constant 0 : index
    %8 = vector.load %arg5[%c0_7, %c0_8] : memref<128x32xf32, #tpu.memory_space<vmem>>, vector<128x32xf32>
    tpu.vector_store %arg5[%c0_7, %c0_8], %7 {strides = array<i32>} : memref<128x32xf32, #tpu.memory_space<vmem>>, vector<128x32xf32>,
    return
  }
  func.func @transform_0(%arg0: i32) -> (i32, i32) {
    %c0_i32 = arith.constant 0 : i32
    %c0_i32_0 = arith.constant 0 : i32
    %c0_i32_1 = arith.constant 0 : i32
    return %c0_i32, %c0_i32_0 : i32, i32
  }
  func.func @transform_1(%arg0: i32) -> (i32, i32) {
    %c0_i32 = arith.constant 0 : i32
    %c0_i32_0 = arith.constant 0 : i32
    %c0_i32_1 = arith.constant 0 : i32
    return %c0_i32, %c0_i32_0 : i32, i32
  }
  func.func @transform_2(%arg0: i32) -> (i32, i32) {
    %c0_i32 = arith.constant 0 : i32
    %c0_i32_0 = arith.constant 0 : i32
    %c0_i32_1 = arith.constant 0 : i32
    return %c0_i32, %c0_i32_0 : i32, i32
  }
  func.func @transform_3(%arg0: i32) -> (i32, i32) {
    %c0_i32 = arith.constant 0 : i32
    %c0_i32_0 = arith.constant 0 : i32
    %c0_i32_1 = arith.constant 0 : i32
    return %c0_i32, %c0_i32_0 : i32, i32
  }
  func.func @transform_4(%arg0: i32) -> (i32, i32) {
    %c0_i32 = arith.constant 0 : i32
    %c0_i32_0 = arith.constant 0 : i32
    %c0_i32_1 = arith.constant 0 : i32
    return %c0_i32, %c0_i32_0 : i32, i32
  }
}

module attributes {stable_mosaic.version = 11 : i64} {
  func.func @jepa_layers_kernel(%arg0: i32, %arg1: memref<1x32x32xf32, #tpu.memory_space<vmem>>, %arg2: memref<1x32x32xf32, #tpu.memory_space<vmem>>, %arg3: memref<1x32x32xf32, #tpu.memory_space<vmem>>, %arg4: memref<1x1x32xf32, #tpu.memory_space<vmem>>, %arg5: memref<1x32x32xf32, #tpu.memory_space<vmem>>, %arg6: memref<1x1x32xf32, #tpu.memory_space<vmem>>, %arg7: memref<1x32x32xf32, #tpu.memory_space<vmem>>, %arg8: memref<1x1x32xf32, #tpu.memory_space<vmem>>, %arg9: memref<1x32x32xf32, #tpu.memory_space<vmem>>, %arg10: memref<1x1x32xf32, #tpu.memory_space<vmem>>, %arg11: memref<1x1x32xf32, #tpu.memory_space<vmem>>, %arg12: memref<1x1x32xf32, #tpu.memory_space<vmem>>, %arg13: memref<1x2x32x256xf32, #tpu.memory_space<vmem>>, %arg14: memref<1x2x1x256xf32, #tpu.memory_space<vmem>>, %arg15: memref<1x2x1x256xf32, #tpu.memory_space<vmem>>, %arg16: memref<1x2x1x256xf32, #tpu.memory_space<vmem>>, %arg17: memref<1x2x256x32xf32, #tpu.memory_space<vmem>>, %arg18: memref<1x2x1x32xf32, #tpu.memory_space<vmem>>, %arg19: memref<1x32x32xf32, #tpu.memory_space<vmem>>, %arg20: memref<1x1x32xf32, #tpu.memory_space<vmem>>, %arg21: memref<1x32x32xf32, #tpu.memory_space<vmem>>, %arg22: memref<1x32x32xf32, #tpu.memory_space<vmem>>, %arg23: memref<1x32x32xf32, #tpu.memory_space<vmem>>, %arg24: memref<1x3xf32, #tpu.memory_space<vmem>>, %arg25: memref<32x32xf32, #tpu.memory_space<vmem>>, %arg26: memref<32x32xf32, #tpu.memory_space<vmem>>) attributes {dimension_semantics = [#tpu.dimension_semantics<arbitrary>], iteration_bounds = array<i64: 3>, scalar_prefetch = 0 : i64, scratch_operands = 2 : i64, tpu.core_type = #tpu.core_type<tc>, window_params = [{transform_indices = @transform_0, window_bounds = array<i64: 1, 32, 32>}, {transform_indices = @transform_1, window_bounds = array<i64: 1, 32, 32>}, {transform_indices = @transform_2, window_bounds = array<i64: 1, 32, 32>}, {transform_indices = @transform_3, window_bounds = array<i64: 1, 1, 32>}, {transform_indices = @transform_4, window_bounds = array<i64: 1, 32, 32>}, {transform_indices = @transform_5, window_bounds = array<i64: 1, 1, 32>}, {transform_indices = @transform_6, window_bounds = array<i64: 1, 32, 32>}, {transform_indices = @transform_7, window_bounds = array<i64: 1, 1, 32>}, {transform_indices = @transform_8, window_bounds = array<i64: 1, 32, 32>}, {transform_indices = @transform_9, window_bounds = array<i64: 1, 1, 32>}, {transform_indices = @transform_10, window_bounds = array<i64: 1, 1, 32>}, {transform_indices = @transform_11, window_bounds = array<i64: 1, 1, 32>}, {transform_indices = @transform_12, window_bounds = array<i64: 1, 2, 32, 256>}, {transform_indices = @transform_13, window_bounds = array<i64: 1, 2, 1, 256>}, {transform_indices = @transform_14, window_bounds = array<i64: 1, 2, 1, 256>}, {transform_indices = @transform_15, window_bounds = array<i64: 1, 2, 1, 256>}, {transform_indices = @transform_16, window_bounds = array<i64: 1, 2, 256, 32>}, {transform_indices = @transform_17, window_bounds = array<i64: 1, 2, 1, 32>}, {transform_indices = @transform_18, window_bounds = array<i64: 1, 32, 32>}, {transform_indices = @transform_19, window_bounds = array<i64: 1, 1, 32>}, {transform_indices = @transform_20, window_bounds = array<i64: 1, 32, 32>}, {transform_indices = @transform_21, window_bounds = array<i64: 1, 32, 32>}, {transform_indices = @transform_22, window_bounds = array<i64: 1, 32, 32>}, {pipeline_mode = #tpu.pipeline_mode<synchronous>, transform_indices = @transform_23, window_bounds = array<i64: 1, 3>}]} {
    %c0_i32 = arith.constant 0 : i32
    %0 = arith.cmpi eq, %arg0, %c0_i32 : i32
    %1 = arith.extui %0 : i1 to i32
    %c0_i32_0 = arith.constant 0 : i32
    %2 = arith.cmpi ne, %1, %c0_i32_0 : i32
    scf.if %2 {
      %cst_160 = arith.constant 0.000000e+00 : f32
      %264 = vector.broadcast %cst_160 : f32 to vector<32x32xf32>
      %c0_161 = arith.constant 0 : index
      %c0_162 = arith.constant 0 : index
      %265 = vector.load %arg25[%c0_161, %c0_162] : memref<32x32xf32, #tpu.memory_space<vmem>>, vector<32x32xf32>
      tpu.vector_store %arg25[%c0_161, %c0_162], %264 {strides = array<i32>} : memref<32x32xf32, #tpu.memory_space<vmem>>, vector<32x32xf32>,
      %cst_163 = arith.constant 0.000000e+00 : f32
      %266 = vector.broadcast %cst_163 : f32 to vector<32x32xf32>
      %c0_164 = arith.constant 0 : index
      %c0_165 = arith.constant 0 : index
      %267 = vector.load %arg26[%c0_164, %c0_165] : memref<32x32xf32, #tpu.memory_space<vmem>>, vector<32x32xf32>
      tpu.vector_store %arg26[%c0_164, %c0_165], %266 {strides = array<i32>} : memref<32x32xf32, #tpu.memory_space<vmem>>, vector<32x32xf32>,
      %cst_166 = arith.constant 0.000000e+00 : f32
      %268 = vector.broadcast %cst_166 : f32 to vector<1x3xf32>
      %c0_167 = arith.constant 0 : index
      %c0_168 = arith.constant 0 : index
      %269 = vector.load %arg24[%c0_167, %c0_168] : memref<1x3xf32, #tpu.memory_space<vmem>>, vector<1x3xf32>
      tpu.vector_store %arg24[%c0_167, %c0_168], %268 {strides = array<i32>} : memref<1x3xf32, #tpu.memory_space<vmem>>, vector<1x3xf32>,
    } else {
    }
    %c0 = arith.constant 0 : index
    %c0_1 = arith.constant 0 : index
    %c0_2 = arith.constant 0 : index
    %3 = vector.load %arg11[%c0, %c0_1, %c0_2] : memref<1x1x32xf32, #tpu.memory_space<vmem>>, vector<1x1x32xf32>
    %4 = vector.shape_cast %3 : vector<1x1x32xf32> to vector<1x32xf32>
    %c0_3 = arith.constant 0 : index
    %c0_4 = arith.constant 0 : index
    %c0_5 = arith.constant 0 : index
    %5 = vector.load %arg12[%c0_3, %c0_4, %c0_5] : memref<1x1x32xf32, #tpu.memory_space<vmem>>, vector<1x1x32xf32>
    %6 = vector.shape_cast %5 : vector<1x1x32xf32> to vector<1x32xf32>
    %c1_i32 = arith.constant 1 : i32
    %7 = arith.addi %arg0, %c1_i32 : i32
    %8 = arith.sitofp %7 : i32 to f32
    %cst = arith.constant 1.000000e+00 : f32
    %9 = arith.divf %cst, %8 : f32
    %c0_6 = arith.constant 0 : index
    %c0_7 = arith.constant 0 : index
    %c0_8 = arith.constant 0 : index
    %10 = vector.load %arg1[%c0_6, %c0_7, %c0_8] : memref<1x32x32xf32, #tpu.memory_space<vmem>>, vector<1x32x32xf32>
    %11 = vector.shape_cast %10 : vector<1x32x32xf32> to vector<32x32xf32>
    %c0_9 = arith.constant 0 : index
    %c0_10 = arith.constant 0 : index
    %c0_11 = arith.constant 0 : index
    %12 = vector.load %arg3[%c0_9, %c0_10, %c0_11] : memref<1x32x32xf32, #tpu.memory_space<vmem>>, vector<1x32x32xf32>
    %13 = vector.shape_cast %12 : vector<1x32x32xf32> to vector<32x32xf32>
    %cst_12 = arith.constant dense<0.000000e+00> : vector<32x32xf32>
    %14 = tpu.matmul %11, %13, %cst_12 {dimension_numbers = #tpu.dot_dimension_numbers<[1], [0], [0], [1], [0, 0, 1, 1], [], []>} : vector<32x32xf32>, vector<32x32xf32>, vector<32x32xf32> -> vector<32x32xf32>
    %c0_13 = arith.constant 0 : index
    %c0_14 = arith.constant 0 : index
    %c0_15 = arith.constant 0 : index
    %15 = vector.load %arg4[%c0_13, %c0_14, %c0_15] : memref<1x1x32xf32, #tpu.memory_space<vmem>>, vector<1x1x32xf32>
    %16 = vector.shape_cast %15 : vector<1x1x32xf32> to vector<1x32xf32>
    %17 = vector.broadcast %16 : vector<1x32xf32> to vector<32x32xf32>
    %18 = arith.addf %14, %17 : vector<32x32xf32>
    %cst_16 = arith.constant dense<0.000000e+00> : vector<32xf32>
    %19 = vector.multi_reduction <add>, %18, %cst_16 [1] : vector<32x32xf32> to vector<32xf32>
    %20 = vector.shape_cast %19 : vector<32xf32> to vector<32x1xf32>
    %cst_17 = arith.constant 3.200000e+01 : f32
    %21 = vector.broadcast %cst_17 : f32 to vector<32x1xf32>
    %22 = arith.divf %20, %21 : vector<32x1xf32>
    %23 = vector.broadcast %22 : vector<32x1xf32> to vector<32x32xf32>
    %24 = arith.subf %18, %23 : vector<32x32xf32>
    %25 = arith.mulf %24, %24 : vector<32x32xf32>
    %cst_18 = arith.constant dense<0.000000e+00> : vector<32xf32>
    %26 = vector.multi_reduction <add>, %25, %cst_18 [1] : vector<32x32xf32> to vector<32xf32>
    %27 = vector.shape_cast %26 : vector<32xf32> to vector<32x1xf32>
    %cst_19 = arith.constant 3.200000e+01 : f32
    %28 = vector.broadcast %cst_19 : f32 to vector<32x1xf32>
    %29 = arith.divf %27, %28 : vector<32x1xf32>
    %30 = vector.broadcast %22 : vector<32x1xf32> to vector<32x32xf32>
    %31 = arith.subf %18, %30 : vector<32x32xf32>
    %cst_20 = arith.constant 9.99999974E-6 : f32
    %32 = vector.broadcast %cst_20 : f32 to vector<32x1xf32>
    %33 = arith.addf %29, %32 : vector<32x1xf32>
    %34 = math.rsqrt %33 : vector<32x1xf32>
    %35 = vector.broadcast %34 : vector<32x1xf32> to vector<32x32xf32>
    %36 = arith.mulf %31, %35 : vector<32x32xf32>
    %37 = vector.broadcast %4 : vector<1x32xf32> to vector<32x32xf32>
    %38 = arith.mulf %36, %37 : vector<32x32xf32>
    %39 = vector.broadcast %6 : vector<1x32xf32> to vector<32x32xf32>
    %40 = arith.addf %38, %39 : vector<32x32xf32>
    %c0_21 = arith.constant 0 : index
    %c0_22 = arith.constant 0 : index
    %41 = vector.load %arg25[%c0_21, %c0_22] : memref<32x32xf32, #tpu.memory_space<vmem>>, vector<32x32xf32>
    %42 = arith.addf %41, %40 : vector<32x32xf32>
    %c0_23 = arith.constant 0 : index
    %c0_24 = arith.constant 0 : index
    %43 = vector.load %arg25[%c0_23, %c0_24] : memref<32x32xf32, #tpu.memory_space<vmem>>, vector<32x32xf32>
    tpu.vector_store %arg25[%c0_23, %c0_24], %42 {strides = array<i32>} : memref<32x32xf32, #tpu.memory_space<vmem>>, vector<32x32xf32>,
    %c0_25 = arith.constant 0 : index
    %c0_26 = arith.constant 0 : index
    %44 = vector.load %arg25[%c0_25, %c0_26] : memref<32x32xf32, #tpu.memory_space<vmem>>, vector<32x32xf32>
    %45 = vector.broadcast %9 : f32 to vector<32x32xf32>
    %46 = arith.mulf %44, %45 : vector<32x32xf32>
    %c0_27 = arith.constant 0 : index
    %c0_28 = arith.constant 0 : index
    %c0_29 = arith.constant 0 : index
    %47 = vector.load %arg7[%c0_27, %c0_28, %c0_29] : memref<1x32x32xf32, #tpu.memory_space<vmem>>, vector<1x32x32xf32>
    %48 = vector.shape_cast %47 : vector<1x32x32xf32> to vector<32x32xf32>
    %cst_30 = arith.constant dense<0.000000e+00> : vector<32x32xf32>
    %49 = tpu.matmul %46, %48, %cst_30 {dimension_numbers = #tpu.dot_dimension_numbers<[1], [0], [0], [1], [0, 0, 1, 1], [], []>} : vector<32x32xf32>, vector<32x32xf32>, vector<32x32xf32> -> vector<32x32xf32>
    %c0_31 = arith.constant 0 : index
    %c0_32 = arith.constant 0 : index
    %c0_33 = arith.constant 0 : index
    %50 = vector.load %arg8[%c0_31, %c0_32, %c0_33] : memref<1x1x32xf32, #tpu.memory_space<vmem>>, vector<1x1x32xf32>
    %51 = vector.shape_cast %50 : vector<1x1x32xf32> to vector<1x32xf32>
    %52 = vector.broadcast %51 : vector<1x32xf32> to vector<32x32xf32>
    %53 = arith.addf %49, %52 : vector<32x32xf32>
    %cst_34 = arith.constant dense<0.000000e+00> : vector<32xf32>
    %54 = vector.multi_reduction <add>, %53, %cst_34 [1] : vector<32x32xf32> to vector<32xf32>
    %55 = vector.shape_cast %54 : vector<32xf32> to vector<32x1xf32>
    %cst_35 = arith.constant 3.200000e+01 : f32
    %56 = vector.broadcast %cst_35 : f32 to vector<32x1xf32>
    %57 = arith.divf %55, %56 : vector<32x1xf32>
    %58 = vector.broadcast %57 : vector<32x1xf32> to vector<32x32xf32>
    %59 = arith.subf %53, %58 : vector<32x32xf32>
    %60 = arith.mulf %59, %59 : vector<32x32xf32>
    %cst_36 = arith.constant dense<0.000000e+00> : vector<32xf32>
    %61 = vector.multi_reduction <add>, %60, %cst_36 [1] : vector<32x32xf32> to vector<32xf32>
    %62 = vector.shape_cast %61 : vector<32xf32> to vector<32x1xf32>
    %cst_37 = arith.constant 3.200000e+01 : f32
    %63 = vector.broadcast %cst_37 : f32 to vector<32x1xf32>
    %64 = arith.divf %62, %63 : vector<32x1xf32>
    %65 = vector.broadcast %57 : vector<32x1xf32> to vector<32x32xf32>
    %66 = arith.subf %53, %65 : vector<32x32xf32>
    %cst_38 = arith.constant 9.99999974E-6 : f32
    %67 = vector.broadcast %cst_38 : f32 to vector<32x1xf32>
    %68 = arith.addf %64, %67 : vector<32x1xf32>
    %69 = math.rsqrt %68 : vector<32x1xf32>
    %70 = vector.broadcast %69 : vector<32x1xf32> to vector<32x32xf32>
    %71 = arith.mulf %66, %70 : vector<32x32xf32>
    %72 = vector.broadcast %4 : vector<1x32xf32> to vector<32x32xf32>
    %73 = arith.mulf %71, %72 : vector<32x32xf32>
    %74 = vector.broadcast %6 : vector<1x32xf32> to vector<32x32xf32>
    %75 = arith.addf %73, %74 : vector<32x32xf32>
    %c0_39 = arith.constant 0 : index
    %c0_40 = arith.constant 0 : index
    %c0_41 = arith.constant 0 : index
    %76 = vector.load %arg2[%c0_39, %c0_40, %c0_41] : memref<1x32x32xf32, #tpu.memory_space<vmem>>, vector<1x32x32xf32>
    %77 = vector.shape_cast %76 : vector<1x32x32xf32> to vector<32x32xf32>
    %c0_42 = arith.constant 0 : index
    %c0_43 = arith.constant 0 : index
    %c0_44 = arith.constant 0 : index
    %78 = vector.load %arg5[%c0_42, %c0_43, %c0_44] : memref<1x32x32xf32, #tpu.memory_space<vmem>>, vector<1x32x32xf32>
    %79 = vector.shape_cast %78 : vector<1x32x32xf32> to vector<32x32xf32>
    %cst_45 = arith.constant dense<0.000000e+00> : vector<32x32xf32>
    %80 = tpu.matmul %77, %79, %cst_45 {dimension_numbers = #tpu.dot_dimension_numbers<[1], [0], [0], [1], [0, 0, 1, 1], [], []>} : vector<32x32xf32>, vector<32x32xf32>, vector<32x32xf32> -> vector<32x32xf32>
    %c0_46 = arith.constant 0 : index
    %c0_47 = arith.constant 0 : index
    %c0_48 = arith.constant 0 : index
    %81 = vector.load %arg6[%c0_46, %c0_47, %c0_48] : memref<1x1x32xf32, #tpu.memory_space<vmem>>, vector<1x1x32xf32>
    %82 = vector.shape_cast %81 : vector<1x1x32xf32> to vector<1x32xf32>
    %83 = vector.broadcast %82 : vector<1x32xf32> to vector<32x32xf32>
    %84 = arith.addf %80, %83 : vector<32x32xf32>
    %cst_49 = arith.constant dense<0.000000e+00> : vector<32xf32>
    %85 = vector.multi_reduction <add>, %84, %cst_49 [1] : vector<32x32xf32> to vector<32xf32>
    %86 = vector.shape_cast %85 : vector<32xf32> to vector<32x1xf32>
    %cst_50 = arith.constant 3.200000e+01 : f32
    %87 = vector.broadcast %cst_50 : f32 to vector<32x1xf32>
    %88 = arith.divf %86, %87 : vector<32x1xf32>
    %89 = vector.broadcast %88 : vector<32x1xf32> to vector<32x32xf32>
    %90 = arith.subf %84, %89 : vector<32x32xf32>
    %91 = arith.mulf %90, %90 : vector<32x32xf32>
    %cst_51 = arith.constant dense<0.000000e+00> : vector<32xf32>
    %92 = vector.multi_reduction <add>, %91, %cst_51 [1] : vector<32x32xf32> to vector<32xf32>
    %93 = vector.shape_cast %92 : vector<32xf32> to vector<32x1xf32>
    %cst_52 = arith.constant 3.200000e+01 : f32
    %94 = vector.broadcast %cst_52 : f32 to vector<32x1xf32>
    %95 = arith.divf %93, %94 : vector<32x1xf32>
    %96 = vector.broadcast %88 : vector<32x1xf32> to vector<32x32xf32>
    %97 = arith.subf %84, %96 : vector<32x32xf32>
    %cst_53 = arith.constant 9.99999974E-6 : f32
    %98 = vector.broadcast %cst_53 : f32 to vector<32x1xf32>
    %99 = arith.addf %95, %98 : vector<32x1xf32>
    %100 = math.rsqrt %99 : vector<32x1xf32>
    %101 = vector.broadcast %100 : vector<32x1xf32> to vector<32x32xf32>
    %102 = arith.mulf %97, %101 : vector<32x32xf32>
    %103 = vector.broadcast %4 : vector<1x32xf32> to vector<32x32xf32>
    %104 = arith.mulf %102, %103 : vector<32x32xf32>
    %105 = vector.broadcast %6 : vector<1x32xf32> to vector<32x32xf32>
    %106 = arith.addf %104, %105 : vector<32x32xf32>
    %c0_54 = arith.constant 0 : index
    %c0_55 = arith.constant 0 : index
    %107 = vector.load %arg26[%c0_54, %c0_55] : memref<32x32xf32, #tpu.memory_space<vmem>>, vector<32x32xf32>
    %108 = arith.addf %107, %106 : vector<32x32xf32>
    %c0_56 = arith.constant 0 : index
    %c0_57 = arith.constant 0 : index
    %109 = vector.load %arg26[%c0_56, %c0_57] : memref<32x32xf32, #tpu.memory_space<vmem>>, vector<32x32xf32>
    tpu.vector_store %arg26[%c0_56, %c0_57], %108 {strides = array<i32>} : memref<32x32xf32, #tpu.memory_space<vmem>>, vector<32x32xf32>,
    %c0_58 = arith.constant 0 : index
    %c0_59 = arith.constant 0 : index
    %110 = vector.load %arg26[%c0_58, %c0_59] : memref<32x32xf32, #tpu.memory_space<vmem>>, vector<32x32xf32>
    %111 = vector.broadcast %9 : f32 to vector<32x32xf32>
    %112 = arith.mulf %110, %111 : vector<32x32xf32>
    %c0_60 = arith.constant 0 : index
    %c0_61 = arith.constant 0 : index
    %c0_62 = arith.constant 0 : index
    %113 = vector.load %arg9[%c0_60, %c0_61, %c0_62] : memref<1x32x32xf32, #tpu.memory_space<vmem>>, vector<1x32x32xf32>
    %114 = vector.shape_cast %113 : vector<1x32x32xf32> to vector<32x32xf32>
    %cst_63 = arith.constant dense<0.000000e+00> : vector<32x32xf32>
    %115 = tpu.matmul %112, %114, %cst_63 {dimension_numbers = #tpu.dot_dimension_numbers<[1], [0], [0], [1], [0, 0, 1, 1], [], []>} : vector<32x32xf32>, vector<32x32xf32>, vector<32x32xf32> -> vector<32x32xf32>
    %c0_64 = arith.constant 0 : index
    %c0_65 = arith.constant 0 : index
    %c0_66 = arith.constant 0 : index
    %116 = vector.load %arg10[%c0_64, %c0_65, %c0_66] : memref<1x1x32xf32, #tpu.memory_space<vmem>>, vector<1x1x32xf32>
    %117 = vector.shape_cast %116 : vector<1x1x32xf32> to vector<1x32xf32>
    %118 = vector.broadcast %117 : vector<1x32xf32> to vector<32x32xf32>
    %119 = arith.addf %115, %118 : vector<32x32xf32>
    %cst_67 = arith.constant dense<0.000000e+00> : vector<32xf32>
    %120 = vector.multi_reduction <add>, %119, %cst_67 [1] : vector<32x32xf32> to vector<32xf32>
    %121 = vector.shape_cast %120 : vector<32xf32> to vector<32x1xf32>
    %cst_68 = arith.constant 3.200000e+01 : f32
    %122 = vector.broadcast %cst_68 : f32 to vector<32x1xf32>
    %123 = arith.divf %121, %122 : vector<32x1xf32>
    %124 = vector.broadcast %123 : vector<32x1xf32> to vector<32x32xf32>
    %125 = arith.subf %119, %124 : vector<32x32xf32>
    %126 = arith.mulf %125, %125 : vector<32x32xf32>
    %cst_69 = arith.constant dense<0.000000e+00> : vector<32xf32>
    %127 = vector.multi_reduction <add>, %126, %cst_69 [1] : vector<32x32xf32> to vector<32xf32>
    %128 = vector.shape_cast %127 : vector<32xf32> to vector<32x1xf32>
    %cst_70 = arith.constant 3.200000e+01 : f32
    %129 = vector.broadcast %cst_70 : f32 to vector<32x1xf32>
    %130 = arith.divf %128, %129 : vector<32x1xf32>
    %131 = vector.broadcast %123 : vector<32x1xf32> to vector<32x32xf32>
    %132 = arith.subf %119, %131 : vector<32x32xf32>
    %cst_71 = arith.constant 9.99999974E-6 : f32
    %133 = vector.broadcast %cst_71 : f32 to vector<32x1xf32>
    %134 = arith.addf %130, %133 : vector<32x1xf32>
    %135 = math.rsqrt %134 : vector<32x1xf32>
    %136 = vector.broadcast %135 : vector<32x1xf32> to vector<32x32xf32>
    %137 = arith.mulf %132, %136 : vector<32x32xf32>
    %138 = vector.broadcast %4 : vector<1x32xf32> to vector<32x32xf32>
    %139 = arith.mulf %137, %138 : vector<32x32xf32>
    %140 = vector.broadcast %6 : vector<1x32xf32> to vector<32x32xf32>
    %141 = arith.addf %139, %140 : vector<32x32xf32>
    %c0_72 = arith.constant 0 : index
    %c0_73 = arith.constant 0 : index
    %c0_74 = arith.constant 0 : index
    %c0_75 = arith.constant 0 : index
    %142 = vector.load %arg13[%c0_72, %c0_73, %c0_74, %c0_75] : memref<1x2x32x256xf32, #tpu.memory_space<vmem>>, vector<1x1x32x256xf32>
    %143 = vector.shape_cast %142 : vector<1x1x32x256xf32> to vector<32x256xf32>
    %cst_76 = arith.constant dense<0.000000e+00> : vector<32x256xf32>
    %144 = tpu.matmul %75, %143, %cst_76 {dimension_numbers = #tpu.dot_dimension_numbers<[1], [0], [0], [1], [0, 0, 1, 1], [], []>} : vector<32x32xf32>, vector<32x256xf32>, vector<32x256xf32> -> vector<32x256xf32>
    %c0_77 = arith.constant 0 : index
    %c0_78 = arith.constant 0 : index
    %c0_79 = arith.constant 0 : index
    %c0_80 = arith.constant 0 : index
    %145 = vector.load %arg14[%c0_77, %c0_78, %c0_79, %c0_80] : memref<1x2x1x256xf32, #tpu.memory_space<vmem>>, vector<1x1x1x256xf32>
    %146 = vector.shape_cast %145 : vector<1x1x1x256xf32> to vector<1x256xf32>
    %147 = vector.broadcast %146 : vector<1x256xf32> to vector<32x256xf32>
    %148 = arith.addf %144, %147 : vector<32x256xf32>
    %cst_81 = arith.constant dense<0.000000e+00> : vector<256xf32>
    %149 = vector.multi_reduction <add>, %148, %cst_81 [0] : vector<32x256xf32> to vector<256xf32>
    %150 = vector.shape_cast %149 : vector<256xf32> to vector<1x256xf32>
    %cst_82 = arith.constant 3.200000e+01 : f32
    %151 = vector.broadcast %cst_82 : f32 to vector<1x256xf32>
    %152 = arith.divf %150, %151 : vector<1x256xf32>
    %153 = vector.broadcast %152 : vector<1x256xf32> to vector<32x256xf32>
    %154 = arith.subf %148, %153 : vector<32x256xf32>
    %155 = arith.mulf %154, %154 : vector<32x256xf32>
    %cst_83 = arith.constant dense<0.000000e+00> : vector<256xf32>
    %156 = vector.multi_reduction <add>, %155, %cst_83 [0] : vector<32x256xf32> to vector<256xf32>
    %157 = vector.shape_cast %156 : vector<256xf32> to vector<1x256xf32>
    %cst_84 = arith.constant 3.200000e+01 : f32
    %158 = vector.broadcast %cst_84 : f32 to vector<1x256xf32>
    %159 = arith.divf %157, %158 : vector<1x256xf32>
    %160 = vector.broadcast %152 : vector<1x256xf32> to vector<32x256xf32>
    %161 = arith.subf %148, %160 : vector<32x256xf32>
    %cst_85 = arith.constant 9.99999974E-6 : f32
    %162 = vector.broadcast %cst_85 : f32 to vector<1x256xf32>
    %163 = arith.addf %159, %162 : vector<1x256xf32>
    %164 = math.rsqrt %163 : vector<1x256xf32>
    %165 = vector.broadcast %164 : vector<1x256xf32> to vector<32x256xf32>
    %166 = arith.mulf %161, %165 : vector<32x256xf32>
    %c0_86 = arith.constant 0 : index
    %c0_87 = arith.constant 0 : index
    %c0_88 = arith.constant 0 : index
    %c0_89 = arith.constant 0 : index
    %167 = vector.load %arg15[%c0_86, %c0_87, %c0_88, %c0_89] : memref<1x2x1x256xf32, #tpu.memory_space<vmem>>, vector<1x1x1x256xf32>
    %168 = vector.shape_cast %167 : vector<1x1x1x256xf32> to vector<1x256xf32>
    %169 = vector.broadcast %168 : vector<1x256xf32> to vector<32x256xf32>
    %170 = arith.mulf %166, %169 : vector<32x256xf32>
    %c0_90 = arith.constant 0 : index
    %c0_91 = arith.constant 0 : index
    %c0_92 = arith.constant 0 : index
    %c0_93 = arith.constant 0 : index
    %171 = vector.load %arg16[%c0_90, %c0_91, %c0_92, %c0_93] : memref<1x2x1x256xf32, #tpu.memory_space<vmem>>, vector<1x1x1x256xf32>
    %172 = vector.shape_cast %171 : vector<1x1x1x256xf32> to vector<1x256xf32>
    %173 = vector.broadcast %172 : vector<1x256xf32> to vector<32x256xf32>
    %174 = arith.addf %170, %173 : vector<32x256xf32>
    %cst_94 = arith.constant 0.000000e+00 : f32
    %175 = vector.broadcast %cst_94 : f32 to vector<32x256xf32>
    %176 = arith.cmpf ogt, %174, %175 : vector<32x256xf32>
    %cst_95 = arith.constant 0.00999999977 : f32
    %177 = vector.broadcast %cst_95 : f32 to vector<32x256xf32>
    %178 = arith.mulf %177, %174 : vector<32x256xf32>
    %179 = arith.select %176, %174, %178 : vector<32x256xi1>, vector<32x256xf32>
    %c0_96 = arith.constant 0 : index
    %c0_97 = arith.constant 0 : index
    %c0_98 = arith.constant 0 : index
    %c0_99 = arith.constant 0 : index
    %180 = vector.load %arg17[%c0_96, %c0_97, %c0_98, %c0_99] : memref<1x2x256x32xf32, #tpu.memory_space<vmem>>, vector<1x1x256x32xf32>
    %181 = vector.shape_cast %180 : vector<1x1x256x32xf32> to vector<256x32xf32>
    %cst_100 = arith.constant dense<0.000000e+00> : vector<32x32xf32>
    %182 = tpu.matmul %179, %181, %cst_100 {dimension_numbers = #tpu.dot_dimension_numbers<[1], [0], [0], [1], [0, 0, 1, 1], [], []>} : vector<32x256xf32>, vector<256x32xf32>, vector<32x32xf32> -> vector<32x32xf32>
    %c0_101 = arith.constant 0 : index
    %c0_102 = arith.constant 0 : index
    %c0_103 = arith.constant 0 : index
    %c0_104 = arith.constant 0 : index
    %183 = vector.load %arg18[%c0_101, %c0_102, %c0_103, %c0_104] : memref<1x2x1x32xf32, #tpu.memory_space<vmem>>, vector<1x1x1x32xf32>
    %184 = vector.shape_cast %183 : vector<1x1x1x32xf32> to vector<1x32xf32>
    %185 = vector.broadcast %184 : vector<1x32xf32> to vector<32x32xf32>
    %186 = arith.addf %182, %185 : vector<32x32xf32>
    %c0_105 = arith.constant 0 : index
    %c1 = arith.constant 1 : index
    %c0_106 = arith.constant 0 : index
    %c0_107 = arith.constant 0 : index
    %187 = vector.load %arg13[%c0_105, %c1, %c0_106, %c0_107] : memref<1x2x32x256xf32, #tpu.memory_space<vmem>>, vector<1x1x32x256xf32>
    %188 = vector.shape_cast %187 : vector<1x1x32x256xf32> to vector<32x256xf32>
    %cst_108 = arith.constant dense<0.000000e+00> : vector<32x256xf32>
    %189 = tpu.matmul %186, %188, %cst_108 {dimension_numbers = #tpu.dot_dimension_numbers<[1], [0], [0], [1], [0, 0, 1, 1], [], []>} : vector<32x32xf32>, vector<32x256xf32>, vector<32x256xf32> -> vector<32x256xf32>
    %c0_109 = arith.constant 0 : index
    %c1_110 = arith.constant 1 : index
    %c0_111 = arith.constant 0 : index
    %c0_112 = arith.constant 0 : index
    %190 = vector.load %arg14[%c0_109, %c1_110, %c0_111, %c0_112] : memref<1x2x1x256xf32, #tpu.memory_space<vmem>>, vector<1x1x1x256xf32>
    %191 = vector.shape_cast %190 : vector<1x1x1x256xf32> to vector<1x256xf32>
    %192 = vector.broadcast %191 : vector<1x256xf32> to vector<32x256xf32>
    %193 = arith.addf %189, %192 : vector<32x256xf32>
    %cst_113 = arith.constant dense<0.000000e+00> : vector<256xf32>
    %194 = vector.multi_reduction <add>, %193, %cst_113 [0] : vector<32x256xf32> to vector<256xf32>
    %195 = vector.shape_cast %194 : vector<256xf32> to vector<1x256xf32>
    %cst_114 = arith.constant 3.200000e+01 : f32
    %196 = vector.broadcast %cst_114 : f32 to vector<1x256xf32>
    %197 = arith.divf %195, %196 : vector<1x256xf32>
    %198 = vector.broadcast %197 : vector<1x256xf32> to vector<32x256xf32>
    %199 = arith.subf %193, %198 : vector<32x256xf32>
    %200 = arith.mulf %199, %199 : vector<32x256xf32>
    %cst_115 = arith.constant dense<0.000000e+00> : vector<256xf32>
    %201 = vector.multi_reduction <add>, %200, %cst_115 [0] : vector<32x256xf32> to vector<256xf32>
    %202 = vector.shape_cast %201 : vector<256xf32> to vector<1x256xf32>
    %cst_116 = arith.constant 3.200000e+01 : f32
    %203 = vector.broadcast %cst_116 : f32 to vector<1x256xf32>
    %204 = arith.divf %202, %203 : vector<1x256xf32>
    %205 = vector.broadcast %197 : vector<1x256xf32> to vector<32x256xf32>
    %206 = arith.subf %193, %205 : vector<32x256xf32>
    %cst_117 = arith.constant 9.99999974E-6 : f32
    %207 = vector.broadcast %cst_117 : f32 to vector<1x256xf32>
    %208 = arith.addf %204, %207 : vector<1x256xf32>
    %209 = math.rsqrt %208 : vector<1x256xf32>
    %210 = vector.broadcast %209 : vector<1x256xf32> to vector<32x256xf32>
    %211 = arith.mulf %206, %210 : vector<32x256xf32>
    %c0_118 = arith.constant 0 : index
    %c1_119 = arith.constant 1 : index
    %c0_120 = arith.constant 0 : index
    %c0_121 = arith.constant 0 : index
    %212 = vector.load %arg15[%c0_118, %c1_119, %c0_120, %c0_121] : memref<1x2x1x256xf32, #tpu.memory_space<vmem>>, vector<1x1x1x256xf32>
    %213 = vector.shape_cast %212 : vector<1x1x1x256xf32> to vector<1x256xf32>
    %214 = vector.broadcast %213 : vector<1x256xf32> to vector<32x256xf32>
    %215 = arith.mulf %211, %214 : vector<32x256xf32>
    %c0_122 = arith.constant 0 : index
    %c1_123 = arith.constant 1 : index
    %c0_124 = arith.constant 0 : index
    %c0_125 = arith.constant 0 : index
    %216 = vector.load %arg16[%c0_122, %c1_123, %c0_124, %c0_125] : memref<1x2x1x256xf32, #tpu.memory_space<vmem>>, vector<1x1x1x256xf32>
    %217 = vector.shape_cast %216 : vector<1x1x1x256xf32> to vector<1x256xf32>
    %218 = vector.broadcast %217 : vector<1x256xf32> to vector<32x256xf32>
    %219 = arith.addf %215, %218 : vector<32x256xf32>
    %cst_126 = arith.constant 0.000000e+00 : f32
    %220 = vector.broadcast %cst_126 : f32 to vector<32x256xf32>
    %221 = arith.cmpf ogt, %219, %220 : vector<32x256xf32>
    %cst_127 = arith.constant 0.00999999977 : f32
    %222 = vector.broadcast %cst_127 : f32 to vector<32x256xf32>
    %223 = arith.mulf %222, %219 : vector<32x256xf32>
    %224 = arith.select %221, %219, %223 : vector<32x256xi1>, vector<32x256xf32>
    %c0_128 = arith.constant 0 : index
    %c1_129 = arith.constant 1 : index
    %c0_130 = arith.constant 0 : index
    %c0_131 = arith.constant 0 : index
    %225 = vector.load %arg17[%c0_128, %c1_129, %c0_130, %c0_131] : memref<1x2x256x32xf32, #tpu.memory_space<vmem>>, vector<1x1x256x32xf32>
    %226 = vector.shape_cast %225 : vector<1x1x256x32xf32> to vector<256x32xf32>
    %cst_132 = arith.constant dense<0.000000e+00> : vector<32x32xf32>
    %227 = tpu.matmul %224, %226, %cst_132 {dimension_numbers = #tpu.dot_dimension_numbers<[1], [0], [0], [1], [0, 0, 1, 1], [], []>} : vector<32x256xf32>, vector<256x32xf32>, vector<32x32xf32> -> vector<32x32xf32>
    %c0_133 = arith.constant 0 : index
    %c1_134 = arith.constant 1 : index
    %c0_135 = arith.constant 0 : index
    %c0_136 = arith.constant 0 : index
    %228 = vector.load %arg18[%c0_133, %c1_134, %c0_135, %c0_136] : memref<1x2x1x32xf32, #tpu.memory_space<vmem>>, vector<1x1x1x32xf32>
    %229 = vector.shape_cast %228 : vector<1x1x1x32xf32> to vector<1x32xf32>
    %230 = vector.broadcast %229 : vector<1x32xf32> to vector<32x32xf32>
    %231 = arith.addf %227, %230 : vector<32x32xf32>
    %232 = math.absf %231 : vector<32x32xf32>
    %233 = vector.shape_cast %232 : vector<32x32xf32> to vector<1x32x32xf32>
    %cst_137 = arith.constant dense<0.000000e+00> : vector<1xf32>
    %234 = vector.multi_reduction <add>, %233, %cst_137 [1, 2] : vector<1x32x32xf32> to vector<1xf32>
    %235 = vector.shape_cast %234 : vector<1xf32> to vector<1x1x1xf32>
    %236 = vector.extract %235[0, 0, 0] : f32 from vector<1x1x1xf32>
    %cst_138 = arith.constant 6.400000e+01 : f32
    %237 = arith.divf %236, %cst_138 : f32
    %238 = tpu.iota {dimensions = array<i32: 1>} : vector<1x3xi32>
    %c0_139 = arith.constant 0 : index
    %c0_140 = arith.constant 0 : index
    %239 = vector.load %arg24[%c0_139, %c0_140] : memref<1x3xf32, #tpu.memory_space<vmem>>, vector<1x3xf32>
    %240 = vector.broadcast %arg0 : i32 to vector<1x3xi32>
    %241 = arith.cmpi eq, %238, %240 : vector<1x3xi32>
    %cst_141 = arith.constant 0.000000e+00 : f32
    %242 = vector.broadcast %237 : f32 to vector<1x3xf32>
    %243 = vector.broadcast %cst_141 : f32 to vector<1x3xf32>
    %244 = arith.select %241, %242, %243 : vector<1x3xi1>, vector<1x3xf32>
    %245 = arith.addf %239, %244 : vector<1x3xf32>
    %c0_142 = arith.constant 0 : index
    %c0_143 = arith.constant 0 : index
    %246 = vector.load %arg24[%c0_142, %c0_143] : memref<1x3xf32, #tpu.memory_space<vmem>>, vector<1x3xf32>
    tpu.vector_store %arg24[%c0_142, %c0_143], %245 {strides = array<i32>} : memref<1x3xf32, #tpu.memory_space<vmem>>, vector<1x3xf32>,
    %247 = arith.addf %75, %231 : vector<32x32xf32>
    %c0_144 = arith.constant 0 : index
    %c0_145 = arith.constant 0 : index
    %c0_146 = arith.constant 0 : index
    %248 = vector.load %arg19[%c0_144, %c0_145, %c0_146] : memref<1x32x32xf32, #tpu.memory_space<vmem>>, vector<1x32x32xf32>
    %249 = vector.shape_cast %248 : vector<1x32x32xf32> to vector<32x32xf32>
    %cst_147 = arith.constant dense<0.000000e+00> : vector<32x32xf32>
    %250 = tpu.matmul %247, %249, %cst_147 {dimension_numbers = #tpu.dot_dimension_numbers<[1], [0], [0], [1], [0, 0, 1, 1], [], []>} : vector<32x32xf32>, vector<32x32xf32>, vector<32x32xf32> -> vector<32x32xf32>
    %c0_148 = arith.constant 0 : index
    %c0_149 = arith.constant 0 : index
    %c0_150 = arith.constant 0 : index
    %251 = vector.load %arg20[%c0_148, %c0_149, %c0_150] : memref<1x1x32xf32, #tpu.memory_space<vmem>>, vector<1x1x32xf32>
    %252 = vector.shape_cast %251 : vector<1x1x32xf32> to vector<1x32xf32>
    %253 = vector.broadcast %252 : vector<1x32xf32> to vector<32x32xf32>
    %254 = arith.addf %250, %253 : vector<32x32xf32>
    %c0_151 = arith.constant 0 : index
    %c0_152 = arith.constant 0 : index
    %c0_153 = arith.constant 0 : index
    %255 = vector.load %arg21[%c0_151, %c0_152, %c0_153] : memref<1x32x32xf32, #tpu.memory_space<vmem>>, vector<1x32x32xf32>
    %256 = vector.shape_cast %255 : vector<1x32x32xf32> to vector<32x32xf32>
    %257 = vector.shape_cast %254 : vector<32x32xf32> to vector<1x32x32xf32>
    tpu.vector_store %arg21[%c0_151, %c0_152, %c0_153], %257 {strides = array<i32>} : memref<1x32x32xf32, #tpu.memory_space<vmem>>, vector<1x32x32xf32>,
    %c0_154 = arith.constant 0 : index
    %c0_155 = arith.constant 0 : index
    %c0_156 = arith.constant 0 : index
    %258 = vector.load %arg22[%c0_154, %c0_155, %c0_156] : memref<1x32x32xf32, #tpu.memory_space<vmem>>, vector<1x32x32xf32>
    %259 = vector.shape_cast %258 : vector<1x32x32xf32> to vector<32x32xf32>
    %260 = vector.shape_cast %247 : vector<32x32xf32> to vector<1x32x32xf32>
    tpu.vector_store %arg22[%c0_154, %c0_155, %c0_156], %260 {strides = array<i32>} : memref<1x32x32xf32, #tpu.memory_space<vmem>>, vector<1x32x32xf32>,
    %c0_157 = arith.constant 0 : index
    %c0_158 = arith.constant 0 : index
    %c0_159 = arith.constant 0 : index
    %261 = vector.load %arg23[%c0_157, %c0_158, %c0_159] : memref<1x32x32xf32, #tpu.memory_space<vmem>>, vector<1x32x32xf32>
    %262 = vector.shape_cast %261 : vector<1x32x32xf32> to vector<32x32xf32>
    %263 = vector.shape_cast %141 : vector<32x32xf32> to vector<1x32x32xf32>
    tpu.vector_store %arg23[%c0_157, %c0_158, %c0_159], %263 {strides = array<i32>} : memref<1x32x32xf32, #tpu.memory_space<vmem>>, vector<1x32x32xf32>,
    return
  }
  func.func @transform_0(%arg0: i32) -> (i32, i32, i32) {
    %c1_i32 = arith.constant 1 : i32
    %0 = arith.addi %arg0, %c1_i32 : i32
    %c0_i32 = arith.constant 0 : i32
    %c0_i32_0 = arith.constant 0 : i32
    %c0_i32_1 = arith.constant 0 : i32
    return %0, %c0_i32, %c0_i32_0 : i32, i32, i32
  }
  func.func @transform_1(%arg0: i32) -> (i32, i32, i32) {
    %c0_i32 = arith.constant 0 : i32
    %c0_i32_0 = arith.constant 0 : i32
    %c0_i32_1 = arith.constant 0 : i32
    return %arg0, %c0_i32, %c0_i32_0 : i32, i32, i32
  }
  func.func @transform_2(%arg0: i32) -> (i32, i32, i32) {
    %c0_i32 = arith.constant 0 : i32
    %c0_i32_0 = arith.constant 0 : i32
    %c0_i32_1 = arith.constant 0 : i32
    return %arg0, %c0_i32, %c0_i32_0 : i32, i32, i32
  }
  func.func @transform_3(%arg0: i32) -> (i32, i32, i32) {
    %c0_i32 = arith.constant 0 : i32
    %c0_i32_0 = arith.constant 0 : i32
    %c0_i32_1 = arith.constant 0 : i32
    return %arg0, %c0_i32, %c0_i32_0 : i32, i32, i32
  }
  func.func @transform_4(%arg0: i32) -> (i32, i32, i32) {
    %c0_i32 = arith.constant 0 : i32
    %c0_i32_0 = arith.constant 0 : i32
    %c0_i32_1 = arith.constant 0 : i32
    return %arg0, %c0_i32, %c0_i32_0 : i32, i32, i32
  }
  func.func @transform_5(%arg0: i32) -> (i32, i32, i32) {
    %c0_i32 = arith.constant 0 : i32
    %c0_i32_0 = arith.constant 0 : i32
    %c0_i32_1 = arith.constant 0 : i32
    return %arg0, %c0_i32, %c0_i32_0 : i32, i32, i32
  }
  func.func @transform_6(%arg0: i32) -> (i32, i32, i32) {
    %c0_i32 = arith.constant 0 : i32
    %c0_i32_0 = arith.constant 0 : i32
    %c0_i32_1 = arith.constant 0 : i32
    return %arg0, %c0_i32, %c0_i32_0 : i32, i32, i32
  }
  func.func @transform_7(%arg0: i32) -> (i32, i32, i32) {
    %c0_i32 = arith.constant 0 : i32
    %c0_i32_0 = arith.constant 0 : i32
    %c0_i32_1 = arith.constant 0 : i32
    return %arg0, %c0_i32, %c0_i32_0 : i32, i32, i32
  }
  func.func @transform_8(%arg0: i32) -> (i32, i32, i32) {
    %c0_i32 = arith.constant 0 : i32
    %c0_i32_0 = arith.constant 0 : i32
    %c0_i32_1 = arith.constant 0 : i32
    return %arg0, %c0_i32, %c0_i32_0 : i32, i32, i32
  }
  func.func @transform_9(%arg0: i32) -> (i32, i32, i32) {
    %c0_i32 = arith.constant 0 : i32
    %c0_i32_0 = arith.constant 0 : i32
    %c0_i32_1 = arith.constant 0 : i32
    return %arg0, %c0_i32, %c0_i32_0 : i32, i32, i32
  }
  func.func @transform_10(%arg0: i32) -> (i32, i32, i32) {
    %c0_i32 = arith.constant 0 : i32
    %c0_i32_0 = arith.constant 0 : i32
    %c0_i32_1 = arith.constant 0 : i32
    return %arg0, %c0_i32, %c0_i32_0 : i32, i32, i32
  }
  func.func @transform_11(%arg0: i32) -> (i32, i32, i32) {
    %c0_i32 = arith.constant 0 : i32
    %c0_i32_0 = arith.constant 0 : i32
    %c0_i32_1 = arith.constant 0 : i32
    return %arg0, %c0_i32, %c0_i32_0 : i32, i32, i32
  }
  func.func @transform_12(%arg0: i32) -> (i32, i32, i32, i32) {
    %c0_i32 = arith.constant 0 : i32
    %c0_i32_0 = arith.constant 0 : i32
    %c0_i32_1 = arith.constant 0 : i32
    %c0_i32_2 = arith.constant 0 : i32
    return %arg0, %c0_i32, %c0_i32_0, %c0_i32_1 : i32, i32, i32, i32
  }
  func.func @transform_13(%arg0: i32) -> (i32, i32, i32, i32) {
    %c0_i32 = arith.constant 0 : i32
    %c0_i32_0 = arith.constant 0 : i32
    %c0_i32_1 = arith.constant 0 : i32
    %c0_i32_2 = arith.constant 0 : i32
    return %arg0, %c0_i32, %c0_i32_0, %c0_i32_1 : i32, i32, i32, i32
  }
  func.func @transform_14(%arg0: i32) -> (i32, i32, i32, i32) {
    %c0_i32 = arith.constant 0 : i32
    %c0_i32_0 = arith.constant 0 : i32
    %c0_i32_1 = arith.constant 0 : i32
    %c0_i32_2 = arith.constant 0 : i32
    return %arg0, %c0_i32, %c0_i32_0, %c0_i32_1 : i32, i32, i32, i32
  }
  func.func @transform_15(%arg0: i32) -> (i32, i32, i32, i32) {
    %c0_i32 = arith.constant 0 : i32
    %c0_i32_0 = arith.constant 0 : i32
    %c0_i32_1 = arith.constant 0 : i32
    %c0_i32_2 = arith.constant 0 : i32
    return %arg0, %c0_i32, %c0_i32_0, %c0_i32_1 : i32, i32, i32, i32
  }
  func.func @transform_16(%arg0: i32) -> (i32, i32, i32, i32) {
    %c0_i32 = arith.constant 0 : i32
    %c0_i32_0 = arith.constant 0 : i32
    %c0_i32_1 = arith.constant 0 : i32
    %c0_i32_2 = arith.constant 0 : i32
    return %arg0, %c0_i32, %c0_i32_0, %c0_i32_1 : i32, i32, i32, i32
  }
  func.func @transform_17(%arg0: i32) -> (i32, i32, i32, i32) {
    %c0_i32 = arith.constant 0 : i32
    %c0_i32_0 = arith.constant 0 : i32
    %c0_i32_1 = arith.constant 0 : i32
    %c0_i32_2 = arith.constant 0 : i32
    return %arg0, %c0_i32, %c0_i32_0, %c0_i32_1 : i32, i32, i32, i32
  }
  func.func @transform_18(%arg0: i32) -> (i32, i32, i32) {
    %c0_i32 = arith.constant 0 : i32
    %c0_i32_0 = arith.constant 0 : i32
    %c0_i32_1 = arith.constant 0 : i32
    return %arg0, %c0_i32, %c0_i32_0 : i32, i32, i32
  }
  func.func @transform_19(%arg0: i32) -> (i32, i32, i32) {
    %c0_i32 = arith.constant 0 : i32
    %c0_i32_0 = arith.constant 0 : i32
    %c0_i32_1 = arith.constant 0 : i32
    return %arg0, %c0_i32, %c0_i32_0 : i32, i32, i32
  }
  func.func @transform_20(%arg0: i32) -> (i32, i32, i32) {
    %c0_i32 = arith.constant 0 : i32
    %c0_i32_0 = arith.constant 0 : i32
    %c0_i32_1 = arith.constant 0 : i32
    return %arg0, %c0_i32, %c0_i32_0 : i32, i32, i32
  }
  func.func @transform_21(%arg0: i32) -> (i32, i32, i32) {
    %c0_i32 = arith.constant 0 : i32
    %c0_i32_0 = arith.constant 0 : i32
    %c0_i32_1 = arith.constant 0 : i32
    return %arg0, %c0_i32, %c0_i32_0 : i32, i32, i32
  }
  func.func @transform_22(%arg0: i32) -> (i32, i32, i32) {
    %c0_i32 = arith.constant 0 : i32
    %c0_i32_0 = arith.constant 0 : i32
    %c0_i32_1 = arith.constant 0 : i32
    return %arg0, %c0_i32, %c0_i32_0 : i32, i32, i32
  }
  func.func @transform_23(%arg0: i32) -> (i32, i32) {
    %c0_i32 = arith.constant 0 : i32
    %c0_i32_0 = arith.constant 0 : i32
    %c0_i32_1 = arith.constant 0 : i32
    return %c0_i32, %c0_i32_0 : i32, i32
  }
}

</mosaic_0001>

<llo_original>
// kernel: hjepa_forward.2
$region0: #{hjepa_forward.2}
  #allocation0 [shape = 'u32[]', space=smem, size = 0x4, offset = 0x4, fixed_abs, tag = 'smem constant byte address 0x4 - core index']
  #allocation1 [shape = 'u32[144,128]{1,0:T(1,128)}', space=vmem, size = 0x12000, scoped, tag = 'internal scratch']
  %s0 = inlined_call_operand.vmem [shape: f32[128,48], index: 0, kind: input, shape index: {}]
  %s1 = inlined_call_operand.vmem [shape: f32[48,32], index: 1, kind: input, shape index: {}]
  %s2 = inlined_call_operand.vmem [shape: f32[1,32], index: 2, kind: input, shape index: {}]
  %s3 = inlined_call_operand.vmem [shape: f32[128,32], index: 3, kind: input, shape index: {}]
  %s4 = inlined_call_operand.vmem [shape: f32[128,32], index: 4, kind: output, shape index: {}]
  %s5 = sld [smem:[#allocation0]]
  $region26: #{hjepa_forward.2} parent=0
    _
  %s7 = ssub.s32 1, %s5
  %s8 = scalar_select 0, %s7, %s5
  // Predicated region
  $region2: #{hjepa_forward.2} parent=0 // pred_check
    _
  $region3: #{hjepa_forward.2} parent=0 // pred_check_branch
    %10 = sbr.rel (0) target = $region5
  $region4: #{hjepa_forward.2} parent=0 // pred_region
    _
  $region5: #{hjepa_forward.2} parent=0 // pred_fallthru
    _
  // Predicated region
  $region6: #{hjepa_forward.2} parent=0 // pred_check
    _
  $region7: #{hjepa_forward.2} parent=0 // pred_check_branch
    %12 = sbr.rel (0) target = $region9
  $region8: #{hjepa_forward.2} parent=0 // pred_region
    _
  $region9: #{hjepa_forward.2} parent=0 // pred_fallthru
    _
  // Predicated region
  $region10: #{hjepa_forward.2} parent=0 // pred_check
    _
  $region11: #{hjepa_forward.2} parent=0 // pred_check_branch
    %14 = sbr.rel (0) target = $region13
  $region12: #{hjepa_forward.2} parent=0 // pred_region
    _
  $region13: #{hjepa_forward.2} parent=0 // pred_fallthru
    _
  // Predicated region
  $region14: #{hjepa_forward.2} parent=0 // pred_check
    _
  $region15: #{hjepa_forward.2} parent=0 // pred_check_branch
    %16 = sbr.rel (0) target = $region17
  $region16: #{hjepa_forward.2} parent=0 // pred_region
    _
  $region17: #{hjepa_forward.2} parent=0 // pred_fallthru
    _
  %v17 = vld [vmem:[%s0] sm:$0xff]
  %v18 = vld [vmem:[%s0 + $0x8] sm:$0xff]
  %v19 = vld [vmem:[%s0 + $0x10] sm:$0xff]
  %v20 = vld [vmem:[%s0 + $0x18] sm:$0xff]
  %v21 = vld [vmem:[%s0 + $0x20] sm:$0xff]
  %v22 = vld [vmem:[%s0 + $0x28] sm:$0xff]
  %v23 = vld [vmem:[%s0 + $0x30] sm:$0xff]
  %v24 = vld [vmem:[%s0 + $0x38] sm:$0xff]
  %v25 = vld [vmem:[%s0 + $0x40] sm:$0xff]
  %v26 = vld [vmem:[%s0 + $0x48] sm:$0xff]
  %v27 = vld [vmem:[%s0 + $0x50] sm:$0xff]
  %v28 = vld [vmem:[%s0 + $0x58] sm:$0xff]
  %v29 = vld [vmem:[%s0 + $0x60] sm:$0xff]
  %v30 = vld [vmem:[%s0 + $0x68] sm:$0xff]
  %v31 = vld [vmem:[%s0 + $0x70] sm:$0xff]
  %v32 = vld [vmem:[%s0 + $0x78] sm:$0xff]
  %v33 = vld [vmem:[%s1] sm:$0xff]
  %v34 = vld [vmem:[%s1 + $0x8] sm:$0xff]
  %v35 = vld [vmem:[%s1 + $0x10] sm:$0xff]
  %v36 = vld [vmem:[%s1 + $0x18] sm:$0xff]
  %v37 = vld [vmem:[%s1 + $0x20] sm:$0xff]
  %v38 = vld [vmem:[%s1 + $0x28] sm:$0xff]
  %v39 = vld [vmem:[%s2] sm:$0x1]
  %v41 = vlaneseq
  %v42 = vshrl.u32 %v41, 7
  %v43 = vsub.s32 0, %v42
  %v44 = vrot.slane %v39, %v43
  %vm46 = vcmask 392192
  %v48 = vsel %vm46, %v17, 0
  %v51 = vsel %vm46, %v18, 0
  %v54 = vsel %vm46, %v19, 0
  %v57 = vsel %vm46, %v20, 0
  %v60 = vsel %vm46, %v21, 0
  %v63 = vsel %vm46, %v22, 0
  %v66 = vsel %vm46, %v23, 0
  %v69 = vsel %vm46, %v24, 0
  %v72 = vsel %vm46, %v25, 0
  %v75 = vsel %vm46, %v26, 0
  %v78 = vsel %vm46, %v27, 0
  %v81 = vsel %vm46, %v28, 0
  %v84 = vsel %vm46, %v29, 0
  %v87 = vsel %vm46, %v30, 0
  %v90 = vsel %vm46, %v31, 0
  %v93 = vsel %vm46, %v32, 0
  %95 = vmatprep.subr.mxu0 0.0
  %96 = vmatpush1.msra.mxu0 %v33
  %97 = vmatprep.subr.mxu0 0.0
  %98 = vmatpush1.msra.mxu0 %v34
  %99 = vmatprep.subr.mxu0 0.0
  %100 = vmatpush1.msra.mxu0 %v35
  %101 = vmatprep.subr.mxu0 0.0
  %102 = vmatpush1.msra.mxu0 %v36
  %103 = vmatprep.subr.mxu0 0.0
  %104 = vmatpush1.msra.mxu0 %v37
  %105 = vmatprep.subr.mxu0 0.0
  %106 = vmatpush1.msra.mxu0 %v38
  %107 = vmatprep.subr.mxu0 0.0
  %108 = vmatpush1.msra.mxu0 0.0
  %109 = vmatprep.subr.mxu0 0.0
  %110 = vmatpush1.msra.mxu0 0.0
  %111 = vmatprep.subr.mxu0 0.0
  %112 = vmatpush1.msra.mxu0 0.0
  %113 = vmatprep.subr.mxu0 0.0
  %114 = vmatpush1.msra.mxu0 0.0
  %115 = vmatprep.subr.mxu0 0.0
  %116 = vmatpush1.msra.mxu0 0.0
  %117 = vmatprep.subr.mxu0 0.0
  %118 = vmatpush1.msra.mxu0 0.0
  %119 = vmatprep.subr.mxu0 0.0
  %120 = vmatpush1.msra.mxu0 0.0
  %121 = vmatprep.subr.mxu0 0.0
  %122 = vmatpush1.msra.mxu0 0.0
  %123 = vmatprep.subr.mxu0 0.0
  %124 = vmatpush1.msra.mxu0 0.0
  %125 = vmatprep.subr.mxu0 0.0
  %126 = vmatpush1.msra.mxu0 0.0
  %127 = vmatprep.subr.mxu0 0.0
  %128 = vmatpush1.msra.mxu0 0.0
  %129 = vmatprep.subr.mxu0 0.0
  %130 = vmatpush1.msra.mxu0 0.0
  %131 = vmatprep.subr.mxu0 0.0
  %132 = vmatpush1.msra.mxu0 0.0
  %133 = vmatprep.subr.mxu0 0.0
  %134 = vmatpush1.msra.mxu0 0.0
  %135 = vmatprep.subr.mxu0 0.0
  %136 = vmatpush1.msra.mxu0 0.0
  %137 = vmatprep.subr.mxu0 0.0
  %138 = vmatpush1.msra.mxu0 0.0
  %139 = vmatprep.subr.mxu0 0.0
  %140 = vmatpush1.msra.mxu0 0.0
  %141 = vmatprep.subr.mxu0 0.0
  %142 = vmatpush1.msra.mxu0 0.0
  %143 = vmatprep.subr.mxu0 0.0
  %144 = vmatpush1.msra.mxu0 0.0
  %145 = vmatprep.subr.mxu0 0.0
  %146 = vmatpush1.msra.mxu0 0.0
  %147 = vmatprep.subr.mxu0 0.0
  %148 = vmatpush1.msra.mxu0 0.0
  %149 = vmatprep.subr.mxu0 0.0
  %150 = vmatpush1.msra.mxu0 0.0
  %151 = vmatprep.subr.mxu0 0.0
  %152 = vmatpush1.msra.mxu0 0.0
  %153 = vmatprep.subr.mxu0 0.0
  %154 = vmatpush1.msra.mxu0 0.0
  %155 = vmatprep.subr.mxu0 0.0
  %156 = vmatpush1.msra.mxu0 0.0
  %157 = vmatprep.subr.mxu0 0.0
  %158 = vmatpush1.msra.mxu0 0.0
  %159 = vmatprep.mubr.f32.mxu0 0.0
  %160 = vmatmul.mubr.f32.gmra.mrb[0].mxu0 %v48
  %v161 = vpop.f32.mrb[0].mxu0
  %v162 = vadd.f32 %v44, %v161
  %v163 = vpop.f32.mrb[0].mxu0
  %164 = vmatprep.mubr.f32.mxu0 0.0
  %165 = vmatmul.mubr.f32.gmra.mrb[0].mxu0 %v51
  %v166 = vpop.f32.mrb[0].mxu0
  %v167 = vadd.f32 %v44, %v166
  %v168 = vpop.f32.mrb[0].mxu0
  %169 = vmatprep.mubr.f32.mxu0 0.0
  %170 = vmatmul.mubr.f32.gmra.mrb[0].mxu0 %v54
  %v171 = vpop.f32.mrb[0].mxu0
  %v172 = vadd.f32 %v44, %v171
  %v173 = vpop.f32.mrb[0].mxu0
  %174 = vmatprep.mubr.f32.mxu0 0.0
  %175 = vmatmul.mubr.f32.gmra.mrb[0].mxu0 %v57
  %v176 = vpop.f32.mrb[0].mxu0
  %v177 = vadd.f32 %v44, %v176
  %v178 = vpop.f32.mrb[0].mxu0
  %179 = vmatprep.mubr.f32.mxu0 0.0
  %180 = vmatmul.mubr.f32.gmra.mrb[0].mxu0 %v60
  %v181 = vpop.f32.mrb[0].mxu0
  %v182 = vadd.f32 %v44, %v181
  %v183 = vpop.f32.mrb[0].mxu0
  %184 = vmatprep.mubr.f32.mxu0 0.0
  %185 = vmatmul.mubr.f32.gmra.mrb[0].mxu0 %v63
  %v186 = vpop.f32.mrb[0].mxu0
  %v187 = vadd.f32 %v44, %v186
  %v188 = vpop.f32.mrb[0].mxu0
  %189 = vmatprep.mubr.f32.mxu0 0.0
  %190 = vmatmul.mubr.f32.gmra.mrb[0].mxu0 %v66
  %v191 = vpop.f32.mrb[0].mxu0
  %v192 = vadd.f32 %v44, %v191
  %v193 = vpop.f32.mrb[0].mxu0
  %194 = vmatprep.mubr.f32.mxu0 0.0
  %195 = vmatmul.mubr.f32.gmra.mrb[0].mxu0 %v69
  %v196 = vpop.f32.mrb[0].mxu0
  %v197 = vadd.f32 %v44, %v196
  %v198 = vpop.f32.mrb[0].mxu0
  %199 = vmatprep.mubr.f32.mxu0 0.0
  %200 = vmatmul.mubr.f32.gmra.mrb[0].mxu0 %v72
  %v201 = vpop.f32.mrb[0].mxu0
  %v202 = vadd.f32 %v44, %v201
  %v203 = vpop.f32.mrb[0].mxu0
  %204 = vmatprep.mubr.f32.mxu0 0.0
  %205 = vmatmul.mubr.f32.gmra.mrb[0].mxu0 %v75
  %v206 = vpop.f32.mrb[0].mxu0
  %v207 = vadd.f32 %v44, %v206
  %v208 = vpop.f32.mrb[0].mxu0
  %209 = vmatprep.mubr.f32.mxu0 0.0
  %210 = vmatmul.mubr.f32.gmra.mrb[0].mxu0 %v78
  %v211 = vpop.f32.mrb[0].mxu0
  %v212 = vadd.f32 %v44, %v211
  %v213 = vpop.f32.mrb[0].mxu0
  %214 = vmatprep.mubr.f32.mxu0 0.0
  %215 = vmatmul.mubr.f32.gmra.mrb[0].mxu0 %v81
  %v216 = vpop.f32.mrb[0].mxu0
  %v217 = vadd.f32 %v44, %v216
  %v218 = vpop.f32.mrb[0].mxu0
  %219 = vmatprep.mubr.f32.mxu0 0.0
  %220 = vmatmul.mubr.f32.gmra.mrb[0].mxu0 %v84
  %v221 = vpop.f32.mrb[0].mxu0
  %v222 = vadd.f32 %v44, %v221
  %v223 = vpop.f32.mrb[0].mxu0
  %224 = vmatprep.mubr.f32.mxu0 0.0
  %225 = vmatmul.mubr.f32.gmra.mrb[0].mxu0 %v87
  %v226 = vpop.f32.mrb[0].mxu0
  %v227 = vadd.f32 %v44, %v226
  %v228 = vpop.f32.mrb[0].mxu0
  %229 = vmatprep.mubr.f32.mxu0 0.0
  %230 = vmatmul.mubr.f32.gmra.mrb[0].mxu0 %v90
  %v231 = vpop.f32.mrb[0].mxu0
  %v232 = vadd.f32 %v44, %v231
  %v233 = vpop.f32.mrb[0].mxu0
  %234 = vmatprep.mubr.f32.mxu0 0.0
  %235 = vmatmul.mubr.f32.gmra.mrb[0].mxu0 %v93
  %v236 = vpop.f32.mrb[0].mxu0
  %v237 = vadd.f32 %v44, %v236
  %v238 = vpop.f32.mrb[0].mxu0
  %239 = vdwg.mxu0
  %v240 = vld [vmem:[%s3] sm:$0xff]
  %v241 = vld [vmem:[%s3 + $0x8] sm:$0xff]
  %v242 = vld [vmem:[%s3 + $0x10] sm:$0xff]
  %v243 = vld [vmem:[%s3 + $0x18] sm:$0xff]
  %v244 = vld [vmem:[%s3 + $0x20] sm:$0xff]
  %v245 = vld [vmem:[%s3 + $0x28] sm:$0xff]
  %v246 = vld [vmem:[%s3 + $0x30] sm:$0xff]
  %v247 = vld [vmem:[%s3 + $0x38] sm:$0xff]
  %v248 = vld [vmem:[%s3 + $0x40] sm:$0xff]
  %v249 = vld [vmem:[%s3 + $0x48] sm:$0xff]
  %v250 = vld [vmem:[%s3 + $0x50] sm:$0xff]
  %v251 = vld [vmem:[%s3 + $0x58] sm:$0xff]
  %v252 = vld [vmem:[%s3 + $0x60] sm:$0xff]
  %v253 = vld [vmem:[%s3 + $0x68] sm:$0xff]
  %v254 = vld [vmem:[%s3 + $0x70] sm:$0xff]
  %v255 = vld [vmem:[%s3 + $0x78] sm:$0xff]
  %v256 = vadd.f32 %v162, %v240
  %v257 = vadd.f32 %v167, %v241
  %v258 = vadd.f32 %v172, %v242
  %v259 = vadd.f32 %v177, %v243
  %v260 = vadd.f32 %v182, %v244
  %v261 = vadd.f32 %v187, %v245
  %v262 = vadd.f32 %v192, %v246
  %v263 = vadd.f32 %v197, %v247
  %v264 = vadd.f32 %v202, %v248
  %v265 = vadd.f32 %v207, %v249
  %v266 = vadd.f32 %v212, %v250
  %v267 = vadd.f32 %v217, %v251
  %v268 = vadd.f32 %v222, %v252
  %v269 = vadd.f32 %v227, %v253
  %v270 = vadd.f32 %v232, %v254
  %v271 = vadd.f32 %v237, %v255
  %vm272 = vcmask 261120
  %273 = vst.msk [vmem:[%s4] sm:$0xff] %vm272, %v256
  %274 = vst.msk [vmem:[%s4 + $0x8] sm:$0xff] %vm272, %v257
  %275 = vst.msk [vmem:[%s4 + $0x10] sm:$0xff] %vm272, %v258
  %276 = vst.msk [vmem:[%s4 + $0x18] sm:$0xff] %vm272, %v259
  %277 = vst.msk [vmem:[%s4 + $0x20] sm:$0xff] %vm272, %v260
  %278 = vst.msk [vmem:[%s4 + $0x28] sm:$0xff] %vm272, %v261
  %279 = vst.msk [vmem:[%s4 + $0x30] sm:$0xff] %vm272, %v262
  %280 = vst.msk [vmem:[%s4 + $0x38] sm:$0xff] %vm272, %v263
  %281 = vst.msk [vmem:[%s4 + $0x40] sm:$0xff] %vm272, %v264
  %282 = vst.msk [vmem:[%s4 + $0x48] sm:$0xff] %vm272, %v265
  %283 = vst.msk [vmem:[%s4 + $0x50] sm:$0xff] %vm272, %v266
  %284 = vst.msk [vmem:[%s4 + $0x58] sm:$0xff] %vm272, %v267
  %285 = vst.msk [vmem:[%s4 + $0x60] sm:$0xff] %vm272, %v268
  %286 = vst.msk [vmem:[%s4 + $0x68] sm:$0xff] %vm272, %v269
  %287 = vst.msk [vmem:[%s4 + $0x70] sm:$0xff] %vm272, %v270
  %288 = vst.msk [vmem:[%s4 + $0x78] sm:$0xff] %vm272, %v271
  // Predicated region
  $region18: #{hjepa_forward.2} parent=0 // pred_check
    _
  $region19: #{hjepa_forward.2} parent=0 // pred_check_branch
    %290 = sbr.rel (0) target = $region21
  $region20: #{hjepa_forward.2} parent=0 // pred_region
    _
  $region21: #{hjepa_forward.2} parent=0 // pred_fallthru
    _
  // Predicated region
  $region22: #{hjepa_forward.2} parent=0 // pred_check
    _
  $region23: #{hjepa_forward.2} parent=0 // pred_check_branch
    %292 = sbr.rel (0) target = $region25
  $region24: #{hjepa_forward.2} parent=0 // pred_region
    _
  $region25: #{hjepa_forward.2} parent=0 // pred_fallthru
    _

// kernel: hjepa_forward.3
$region0: #{hjepa_forward.3}
  #allocation0 [shape = 'u32[]', space=smem, size = 0x4, offset = 0x4, fixed_abs, tag = 'smem constant byte address 0x4 - core index']
  #allocation1 [shape = 'u32[144,128]{1,0:T(1,128)}', space=vmem, size = 0x12000, scoped, tag = 'internal scratch']
  #allocation2 [shape = 'f32[32,32]{1,0:T(8,128)}', space=vmem, size = 0x4000, scoped, tag = 'scratch operand']
  #allocation3 [shape = 'f32[32,32]{1,0:T(8,128)}', space=vmem, size = 0x4000, scoped, tag = 'scratch operand']
  %s0 = inlined_call_operand.vmem [shape: f32[4,32,32], index: 0, kind: input, shape index: {}, may-alias: {0,1}]
  %s1 = inlined_call_operand.vmem [shape: f32[4,32,32], index: 1, kind: input, shape index: {}, may-alias: {0,1}]
  %s2 = inlined_call_operand.vmem [shape: f32[3,32,32], index: 2, kind: input, shape index: {}]
  %s3 = inlined_call_operand.vmem [shape: f32[3,1,32], index: 3, kind: input, shape index: {}]
  %s4 = inlined_call_operand.vmem [shape: f32[3,32,32], index: 4, kind: input, shape index: {}]
  %s5 = inlined_call_operand.vmem [shape: f32[3,1,32], index: 5, kind: input, shape index: {}]
  %s6 = inlined_call_operand.vmem [shape: f32[3,32,32], index: 6, kind: input, shape index: {}]
  %s7 = inlined_call_operand.vmem [shape: f32[3,1,32], index: 7, kind: input, shape index: {}]
  %s8 = inlined_call_operand.vmem [shape: f32[3,32,32], index: 8, kind: input, shape index: {}]
  %s9 = inlined_call_operand.vmem [shape: f32[3,1,32], index: 9, kind: input, shape index: {}]
  %s10 = inlined_call_operand.vmem [shape: f32[3,1,32], index: 10, kind: input, shape index: {}]
  %s11 = inlined_call_operand.vmem [shape: f32[3,1,32], index: 11, kind: input, shape index: {}]
  %s12 = inlined_call_operand.vmem [shape: f32[3,2,32,256], index: 12, kind: input, shape index: {}]
  %s13 = inlined_call_operand.vmem [shape: f32[3,2,1,256], index: 13, kind: input, shape index: {}]
  %s14 = inlined_call_operand.vmem [shape: f32[3,2,1,256], index: 14, kind: input, shape index: {}]
  %s15 = inlined_call_operand.vmem [shape: f32[3,2,1,256], index: 15, kind: input, shape index: {}]
  %s16 = inlined_call_operand.vmem [shape: f32[3,2,256,32], index: 16, kind: input, shape index: {}]
  %s17 = inlined_call_operand.vmem [shape: f32[3,2,1,32], index: 17, kind: input, shape index: {}]
  %s18 = inlined_call_operand.vmem [shape: f32[3,32,32], index: 18, kind: input, shape index: {}]
  %s19 = inlined_call_operand.vmem [shape: f32[3,1,32], index: 19, kind: input, shape index: {}]
  %s20 = inlined_call_operand.vmem [shape: f32[3,32,32], index: 20, kind: output, shape index: {0}]
  %s21 = inlined_call_operand.vmem [shape: f32[3,32,32], index: 21, kind: output, shape index: {1}]
  %s22 = inlined_call_operand.vmem [shape: f32[3,32,32], index: 22, kind: output, shape index: {2}]
  %s23 = inlined_call_operand.vmem [shape: f32[1,3], index: 23, kind: output, shape index: {3}]
  %24 = xla_tuple %s20, %s21, %s22, %s23
  %s25 = sld [smem:[#allocation0]]
  $region141: #{hjepa_forward.3} parent=0
    _
  %s27 = ssub.s32 1, %s25
  %s28 = scalar_select 0, %s27, %s25
  loop: start=0, step=1, limit=5
  $region2: #{hjepa_forward.3} parent=0 // loop_pre_header
    _
  $region3: #{hjepa_forward.3} parent=0 // loop_header
    %s30 = sphi 0, %s34
    %p31 = scmp.ge.s32.totalorder %s30, 5
    %s42 = sphi 0, %s44
    %s45 = sphi 0, %s42
    %s46 = sphi 0, %s45
    %s62 = sphi 0, %s46
    %s68 = sphi 0, %s70
    %s71 = sphi 0, %s68
    %s72 = sphi 0, %s71
    %s88 = sphi 0, %s72
    %s94 = sphi 0, %s96
    %s97 = sphi 0, %s94
    %s98 = sphi 0, %s97
    %s114 = sphi 0, %s98
    %s120 = sphi 0, %s122
    %s123 = sphi 0, %s120
    %s124 = sphi 0, %s123
    %s140 = sphi 0, %s124
    %s146 = sphi 0, %s148
    %s149 = sphi 0, %s146
    %s150 = sphi 0, %s149
    %s166 = sphi 0, %s150
    %s172 = sphi 0, %s174
    %s175 = sphi 0, %s172
    %s176 = sphi 0, %s175
    %s192 = sphi 0, %s176
    %s198 = sphi 0, %s200
    %s201 = sphi 0, %s198
    %s202 = sphi 0, %s201
    %s218 = sphi 0, %s202
    %s224 = sphi 0, %s226
    %s227 = sphi 0, %s224
    %s228 = sphi 0, %s227
    %s244 = sphi 0, %s228
    %s250 = sphi 0, %s252
    %s253 = sphi 0, %s250
    %s254 = sphi 0, %s253
    %s270 = sphi 0, %s254
    %s276 = sphi 0, %s278
    %s279 = sphi 0, %s276
    %s280 = sphi 0, %s279
    %s296 = sphi 0, %s280
    %s302 = sphi 0, %s304
    %s305 = sphi 0, %s302
    %s306 = sphi 0, %s305
    %s322 = sphi 0, %s306
    %s328 = sphi 0, %s330
    %s331 = sphi 0, %s328
    %s332 = sphi 0, %s331
    %s348 = sphi 0, %s332
    %s354 = sphi 0, %s356
    %s357 = sphi 0, %s354
    %s358 = sphi 0, %s357
    %s374 = sphi 0, %s358
    %s380 = sphi 0, %s382
    %s383 = sphi 0, %s380
    %s384 = sphi 0, %s383
    %s400 = sphi 0, %s384
    %s406 = sphi 0, %s408
    %s409 = sphi 0, %s406
    %s410 = sphi 0, %s409
    %s426 = sphi 0, %s410
    %s432 = sphi 0, %s434
    %s435 = sphi 0, %s432
    %s436 = sphi 0, %s435
    %s452 = sphi 0, %s436
    %s458 = sphi 0, %s460
    %s461 = sphi 0, %s458
    %s462 = sphi 0, %s461
    %s478 = sphi 0, %s462
    %s484 = sphi 0, %s486
    %s487 = sphi 0, %s484
    %s488 = sphi 0, %s487
    %s504 = sphi 0, %s488
    %s510 = sphi 0, %s512
    %s513 = sphi 0, %s510
    %s514 = sphi 0, %s513
    %s530 = sphi 0, %s514
    %s536 = sphi 0, %s538
    %s539 = sphi 0, %s536
    %s540 = sphi 0, %s539
    %s556 = sphi 0, %s540
    %s562 = sphi 0, %s564
    %s565 = sphi 0, %s562
    %s566 = sphi 0, %s565
    %s582 = sphi 0, %s566
    %s588 = sphi 0, %s590
    %s591 = sphi 0, %s588
    %s592 = sphi 0, %s591
    %s608 = sphi 0, %s592
    %s614 = sphi 0, %s616
    %s617 = sphi 0, %s614
    %s618 = sphi 0, %s617
    %s634 = sphi 0, %s618
    %s638 = sphi 0, %s638
    %s640 = sphi 0, %s638
    %s641 = sphi 0, %s640
    %s655 = sphi 0, %s641
  $region4: #{hjepa_forward.3} parent=0 // loop_header_branch
    %33 = sbr.rel (%p31) target = $region8
  $region5: #{hjepa_forward.3} parent=0 // loop_body
    %s35 = ssub.s32 %s30, 1
    %s36 = ssub.s32 %s30, 2
    %s37 = sadd.s32 %s30, 1
    %s38 = sadd.s32 %s30, 1
    %s39 = sadd.s32 %s37, 1
    %s40 = ssub.s32 %s38, %s39
    %p41 = scmp.eq.s32.totalorder %s40, 0
    %s43 = sadd.s32 %s42, 1
    %s44 = scalar_select %p41, %s42, %s43
    %p47 = pneg %p41
    %p48 = scmp.eq.s32.totalorder %s30, 2
    %p49 = por %p47, %p48
    %p50 = scmp.ne.s32.totalorder %s42, %s45
    %p51 = scmp.eq.s32.totalorder %s30, 0
    %p52 = por %p50, %p51
    %p53 = scmp.ne.s32.totalorder %s42, %s45
    %p54 = scmp.eq.s32.totalorder %s35, 2
    %p55 = por %p53, %p54
    %p56 = scmp.ne.s32.totalorder %s45, %s46
    %p57 = scmp.eq.s32.totalorder %s35, 0
    %p58 = por %p56, %p57
    %p59 = scmp.ne.s32.totalorder %s45, %s46
    %p60 = scmp.eq.s32.totalorder %s36, 2
    %p61 = por %p59, %p60
    %p63 = scmp.ne.s32.totalorder %s46, %s62
    %p64 = scmp.eq.s32.totalorder %s36, 0
    %p65 = por %p63, %p64
    %s66 = ssub.s32 %s30, %s37
    %p67 = scmp.eq.s32.totalorder %s66, 0
    %s69 = sadd.s32 %s68, 1
    %s70 = scalar_select %p67, %s68, %s69
    %p73 = pneg %p67
    %p74 = scmp.eq.s32.totalorder %s30, 2
    %p75 = por %p73, %p74
    %p76 = scmp.ne.s32.totalorder %s68, %s71
    %p77 = scmp.eq.s32.totalorder %s30, 0
    %p78 = por %p76, %p77
    %p79 = scmp.ne.s32.totalorder %s68, %s71
    %p80 = scmp.eq.s32.totalorder %s35, 2
    %p81 = por %p79, %p80
    %p82 = scmp.ne.s32.totalorder %s71, %s72
    %p83 = scmp.eq.s32.totalorder %s35, 0
    %p84 = por %p82, %p83
    %p85 = scmp.ne.s32.totalorder %s71, %s72
    %p86 = scmp.eq.s32.totalorder %s36, 2
    %p87 = por %p85, %p86
    %p89 = scmp.ne.s32.totalorder %s72, %s88
    %p90 = scmp.eq.s32.totalorder %s36, 0
    %p91 = por %p89, %p90
    %s92 = ssub.s32 %s30, %s37
    %p93 = scmp.eq.s32.totalorder %s92, 0
    %s95 = sadd.s32 %s94, 1
    %s96 = scalar_select %p93, %s94, %s95
    %p99 = pneg %p93
    %p100 = scmp.eq.s32.totalorder %s30, 2
    %p101 = por %p99, %p100
    %p102 = scmp.ne.s32.totalorder %s94, %s97
    %p103 = scmp.eq.s32.totalorder %s30, 0
    %p104 = por %p102, %p103
    %p105 = scmp.ne.s32.totalorder %s94, %s97
    %p106 = scmp.eq.s32.totalorder %s35, 2
    %p107 = por %p105, %p106
    %p108 = scmp.ne.s32.totalorder %s97, %s98
    %p109 = scmp.eq.s32.totalorder %s35, 0
    %p110 = por %p108, %p109
    %p111 = scmp.ne.s32.totalorder %s97, %s98
    %p112 = scmp.eq.s32.totalorder %s36, 2
    %p113 = por %p111, %p112
    %p115 = scmp.ne.s32.totalorder %s98, %s114
    %p116 = scmp.eq.s32.totalorder %s36, 0
    %p117 = por %p115, %p116
    %s118 = ssub.s32 %s30, %s37
    %p119 = scmp.eq.s32.totalorder %s118, 0
    %s121 = sadd.s32 %s120, 1
    %s122 = scalar_select %p119, %s120, %s121
    %p125 = pneg %p119
    %p126 = scmp.eq.s32.totalorder %s30, 2
    %p127 = por %p125, %p126
    %p128 = scmp.ne.s32.totalorder %s120, %s123
    %p129 = scmp.eq.s32.totalorder %s30, 0
    %p130 = por %p128, %p129
    %p131 = scmp.ne.s32.totalorder %s120, %s123
    %p132 = scmp.eq.s32.totalorder %s35, 2
    %p133 = por %p131, %p132
    %p134 = scmp.ne.s32.totalorder %s123, %s124
    %p135 = scmp.eq.s32.totalorder %s35, 0
    %p136 = por %p134, %p135
    %p137 = scmp.ne.s32.totalorder %s123, %s124
    %p138 = scmp.eq.s32.totalorder %s36, 2
    %p139 = por %p137, %p138
    %p141 = scmp.ne.s32.totalorder %s124, %s140
    %p142 = scmp.eq.s32.totalorder %s36, 0
    %p143 = por %p141, %p142
    %s144 = ssub.s32 %s30, %s37
    %p145 = scmp.eq.s32.totalorder %s144, 0
    %s147 = sadd.s32 %s146, 1
    %s148 = scalar_select %p145, %s146, %s147
    %p151 = pneg %p145
    %p152 = scmp.eq.s32.totalorder %s30, 2
    %p153 = por %p151, %p152
    %p154 = scmp.ne.s32.totalorder %s146, %s149
    %p155 = scmp.eq.s32.totalorder %s30, 0
    %p156 = por %p154, %p155
    %p157 = scmp.ne.s32.totalorder %s146, %s149
    %p158 = scmp.eq.s32.totalorder %s35, 2
    %p159 = por %p157, %p158
    %p160 = scmp.ne.s32.totalorder %s149, %s150
    %p161 = scmp.eq.s32.totalorder %s35, 0
    %p162 = por %p160, %p161
    %p163 = scmp.ne.s32.totalorder %s149, %s150
    %p164 = scmp.eq.s32.totalorder %s36, 2
    %p165 = por %p163, %p164
    %p167 = scmp.ne.s32.totalorder %s150, %s166
    %p168 = scmp.eq.s32.totalorder %s36, 0
    %p169 = por %p167, %p168
    %s170 = ssub.s32 %s30, %s37
    %p171 = scmp.eq.s32.totalorder %s170, 0
    %s173 = sadd.s32 %s172, 1
    %s174 = scalar_select %p171, %s172, %s173
    %p177 = pneg %p171
    %p178 = scmp.eq.s32.totalorder %s30, 2
    %p179 = por %p177, %p178
    %p180 = scmp.ne.s32.totalorder %s172, %s175
    %p181 = scmp.eq.s32.totalorder %s30, 0
    %p182 = por %p180, %p181
    %p183 = scmp.ne.s32.totalorder %s172, %s175
    %p184 = scmp.eq.s32.totalorder %s35, 2
    %p185 = por %p183, %p184
    %p186 = scmp.ne.s32.totalorder %s175, %s176
    %p187 = scmp.eq.s32.totalorder %s35, 0
    %p188 = por %p186, %p187
    %p189 = scmp.ne.s32.totalorder %s175, %s176
    %p190 = scmp.eq.s32.totalorder %s36, 2
    %p191 = por %p189, %p190
    %p193 = scmp.ne.s32.totalorder %s176, %s192
    %p194 = scmp.eq.s32.totalorder %s36, 0
    %p195 = por %p193, %p194
    %s196 = ssub.s32 %s30, %s37
    %p197 = scmp.eq.s32.totalorder %s196, 0
    %s199 = sadd.s32 %s198, 1
    %s200 = scalar_select %p197, %s198, %s199
    %p203 = pneg %p197
    %p204 = scmp.eq.s32.totalorder %s30, 2
    %p205 = por %p203, %p204
    %p206 = scmp.ne.s32.totalorder %s198, %s201
    %p207 = scmp.eq.s32.totalorder %s30, 0
    %p208 = por %p206, %p207
    %p209 = scmp.ne.s32.totalorder %s198, %s201
    %p210 = scmp.eq.s32.totalorder %s35, 2
    %p211 = por %p209, %p210
    %p212 = scmp.ne.s32.totalorder %s201, %s202
    %p213 = scmp.eq.s32.totalorder %s35, 0
    %p214 = por %p212, %p213
    %p215 = scmp.ne.s32.totalorder %s201, %s202
    %p216 = scmp.eq.s32.totalorder %s36, 2
    %p217 = por %p215, %p216
    %p219 = scmp.ne.s32.totalorder %s202, %s218
    %p220 = scmp.eq.s32.totalorder %s36, 0
    %p221 = por %p219, %p220
    %s222 = ssub.s32 %s30, %s37
    %p223 = scmp.eq.s32.totalorder %s222, 0
    %s225 = sadd.s32 %s224, 1
    %s226 = scalar_select %p223, %s224, %s225
    %p229 = pneg %p223
    %p230 = scmp.eq.s32.totalorder %s30, 2
    %p231 = por %p229, %p230
    %p232 = scmp.ne.s32.totalorder %s224, %s227
    %p233 = scmp.eq.s32.totalorder %s30, 0
    %p234 = por %p232, %p233
    %p235 = scmp.ne.s32.totalorder %s224, %s227
    %p236 = scmp.eq.s32.totalorder %s35, 2
    %p237 = por %p235, %p236
    %p238 = scmp.ne.s32.totalorder %s227, %s228
    %p239 = scmp.eq.s32.totalorder %s35, 0
    %p240 = por %p238, %p239
    %p241 = scmp.ne.s32.totalorder %s227, %s228
    %p242 = scmp.eq.s32.totalorder %s36, 2
    %p243 = por %p241, %p242
    %p245 = scmp.ne.s32.totalorder %s228, %s244
    %p246 = scmp.eq.s32.totalorder %s36, 0
    %p247 = por %p245, %p246
    %s248 = ssub.s32 %s30, %s37
    %p249 = scmp.eq.s32.totalorder %s248, 0
    %s251 = sadd.s32 %s250, 1
    %s252 = scalar_select %p249, %s250, %s251
    %p255 = pneg %p249
    %p256 = scmp.eq.s32.totalorder %s30, 2
    %p257 = por %p255, %p256
    %p258 = scmp.ne.s32.totalorder %s250, %s253
    %p259 = scmp.eq.s32.totalorder %s30, 0
    %p260 = por %p258, %p259
    %p261 = scmp.ne.s32.totalorder %s250, %s253
    %p262 = scmp.eq.s32.totalorder %s35, 2
    %p263 = por %p261, %p262
    %p264 = scmp.ne.s32.totalorder %s253, %s254
    %p265 = scmp.eq.s32.totalorder %s35, 0
    %p266 = por %p264, %p265
    %p267 = scmp.ne.s32.totalorder %s253, %s254
    %p268 = scmp.eq.s32.totalorder %s36, 2
    %p269 = por %p267, %p268
    %p271 = scmp.ne.s32.totalorder %s254, %s270
    %p272 = scmp.eq.s32.totalorder %s36, 0
    %p273 = por %p271, %p272
    %s274 = ssub.s32 %s30, %s37
    %p275 = scmp.eq.s32.totalorder %s274, 0
    %s277 = sadd.s32 %s276, 1
    %s278 = scalar_select %p275, %s276, %s277
    %p281 = pneg %p275
    %p282 = scmp.eq.s32.totalorder %s30, 2
    %p283 = por %p281, %p282
    %p284 = scmp.ne.s32.totalorder %s276, %s279
    %p285 = scmp.eq.s32.totalorder %s30, 0
    %p286 = por %p284, %p285
    %p287 = scmp.ne.s32.totalorder %s276, %s279
    %p288 = scmp.eq.s32.totalorder %s35, 2
    %p289 = por %p287, %p288
    %p290 = scmp.ne.s32.totalorder %s279, %s280
    %p291 = scmp.eq.s32.totalorder %s35, 0
    %p292 = por %p290, %p291
    %p293 = scmp.ne.s32.totalorder %s279, %s280
    %p294 = scmp.eq.s32.totalorder %s36, 2
    %p295 = por %p293, %p294
    %p297 = scmp.ne.s32.totalorder %s280, %s296
    %p298 = scmp.eq.s32.totalorder %s36, 0
    %p299 = por %p297, %p298
    %s300 = ssub.s32 %s30, %s37
    %p301 = scmp.eq.s32.totalorder %s300, 0
    %s303 = sadd.s32 %s302, 1
    %s304 = scalar_select %p301, %s302, %s303
    %p307 = pneg %p301
    %p308 = scmp.eq.s32.totalorder %s30, 2
    %p309 = por %p307, %p308
    %p310 = scmp.ne.s32.totalorder %s302, %s305
    %p311 = scmp.eq.s32.totalorder %s30, 0
    %p312 = por %p310, %p311
    %p313 = scmp.ne.s32.totalorder %s302, %s305
    %p314 = scmp.eq.s32.totalorder %s35, 2
    %p315 = por %p313, %p314
    %p316 = scmp.ne.s32.totalorder %s305, %s306
    %p317 = scmp.eq.s32.totalorder %s35, 0
    %p318 = por %p316, %p317
    %p319 = scmp.ne.s32.totalorder %s305, %s306
    %p320 = scmp.eq.s32.totalorder %s36, 2
    %p321 = por %p319, %p320
    %p323 = scmp.ne.s32.totalorder %s306, %s322
    %p324 = scmp.eq.s32.totalorder %s36, 0
    %p325 = por %p323, %p324
    %s326 = ssub.s32 %s30, %s37
    %p327 = scmp.eq.s32.totalorder %s326, 0
    %s329 = sadd.s32 %s328, 1
    %s330 = scalar_select %p327, %s328, %s329
    %p333 = pneg %p327
    %p334 = scmp.eq.s32.totalorder %s30, 2
    %p335 = por %p333, %p334
    %p336 = scmp.ne.s32.totalorder %s328, %s331
    %p337 = scmp.eq.s32.totalorder %s30, 0
    %p338 = por %p336, %p337
    %p339 = scmp.ne.s32.totalorder %s328, %s331
    %p340 = scmp.eq.s32.totalorder %s35, 2
    %p341 = por %p339, %p340
    %p342 = scmp.ne.s32.totalorder %s331, %s332
    %p343 = scmp.eq.s32.totalorder %s35, 0
    %p344 = por %p342, %p343
    %p345 = scmp.ne.s32.totalorder %s331, %s332
    %p346 = scmp.eq.s32.totalorder %s36, 2
    %p347 = por %p345, %p346
    %p349 = scmp.ne.s32.totalorder %s332, %s348
    %p350 = scmp.eq.s32.totalorder %s36, 0
    %p351 = por %p349, %p350
    %s352 = ssub.s32 %s30, %s37
    %p353 = scmp.eq.s32.totalorder %s352, 0
    %s355 = sadd.s32 %s354, 1
    %s356 = scalar_select %p353, %s354, %s355
    %p359 = pneg %p353
    %p360 = scmp.eq.s32.totalorder %s30, 2
    %p361 = por %p359, %p360
    %p362 = scmp.ne.s32.totalorder %s354, %s357
    %p363 = scmp.eq.s32.totalorder %s30, 0
    %p364 = por %p362, %p363
    %p365 = scmp.ne.s32.totalorder %s354, %s357
    %p366 = scmp.eq.s32.totalorder %s35, 2
    %p367 = por %p365, %p366
    %p368 = scmp.ne.s32.totalorder %s357, %s358
    %p369 = scmp.eq.s32.totalorder %s35, 0
    %p370 = por %p368, %p369
    %p371 = scmp.ne.s32.totalorder %s357, %s358
    %p372 = scmp.eq.s32.totalorder %s36, 2
    %p373 = por %p371, %p372
    %p375 = scmp.ne.s32.totalorder %s358, %s374
    %p376 = scmp.eq.s32.totalorder %s36, 0
    %p377 = por %p375, %p376
    %s378 = ssub.s32 %s30, %s37
    %p379 = scmp.eq.s32.totalorder %s378, 0
    %s381 = sadd.s32 %s380, 1
    %s382 = scalar_select %p379, %s380, %s381
    %p385 = pneg %p379
    %p386 = scmp.eq.s32.totalorder %s30, 2
    %p387 = por %p385, %p386
    %p388 = scmp.ne.s32.totalorder %s380, %s383
    %p389 = scmp.eq.s32.totalorder %s30, 0
    %p390 = por %p388, %p389
    %p391 = scmp.ne.s32.totalorder %s380, %s383
    %p392 = scmp.eq.s32.totalorder %s35, 2
    %p393 = por %p391, %p392
    %p394 = scmp.ne.s32.totalorder %s383, %s384
    %p395 = scmp.eq.s32.totalorder %s35, 0
    %p396 = por %p394, %p395
    %p397 = scmp.ne.s32.totalorder %s383, %s384
    %p398 = scmp.eq.s32.totalorder %s36, 2
    %p399 = por %p397, %p398
    %p401 = scmp.ne.s32.totalorder %s384, %s400
    %p402 = scmp.eq.s32.totalorder %s36, 0
    %p403 = por %p401, %p402
    %s404 = ssub.s32 %s30, %s37
    %p405 = scmp.eq.s32.totalorder %s404, 0
    %s407 = sadd.s32 %s406, 1
    %s408 = scalar_select %p405, %s406, %s407
    %p411 = pneg %p405
    %p412 = scmp.eq.s32.totalorder %s30, 2
    %p413 = por %p411, %p412
    %p414 = scmp.ne.s32.totalorder %s406, %s409
    %p415 = scmp.eq.s32.totalorder %s30, 0
    %p416 = por %p414, %p415
    %p417 = scmp.ne.s32.totalorder %s406, %s409
    %p418 = scmp.eq.s32.totalorder %s35, 2
    %p419 = por %p417, %p418
    %p420 = scmp.ne.s32.totalorder %s409, %s410
    %p421 = scmp.eq.s32.totalorder %s35, 0
    %p422 = por %p420, %p421
    %p423 = scmp.ne.s32.totalorder %s409, %s410
    %p424 = scmp.eq.s32.totalorder %s36, 2
    %p425 = por %p423, %p424
    %p427 = scmp.ne.s32.totalorder %s410, %s426
    %p428 = scmp.eq.s32.totalorder %s36, 0
    %p429 = por %p427, %p428
    %s430 = ssub.s32 %s30, %s37
    %p431 = scmp.eq.s32.totalorder %s430, 0
    %s433 = sadd.s32 %s432, 1
    %s434 = scalar_select %p431, %s432, %s433
    %p437 = pneg %p431
    %p438 = scmp.eq.s32.totalorder %s30, 2
    %p439 = por %p437, %p438
    %p440 = scmp.ne.s32.totalorder %s432, %s435
    %p441 = scmp.eq.s32.totalorder %s30, 0
    %p442 = por %p440, %p441
    %p443 = scmp.ne.s32.totalorder %s432, %s435
    %p444 = scmp.eq.s32.totalorder %s35, 2
    %p445 = por %p443, %p444
    %p446 = scmp.ne.s32.totalorder %s435, %s436
    %p447 = scmp.eq.s32.totalorder %s35, 0
    %p448 = por %p446, %p447
    %p449 = scmp.ne.s32.totalorder %s435, %s436
    %p450 = scmp.eq.s32.totalorder %s36, 2
    %p451 = por %p449, %p450
    %p453 = scmp.ne.s32.totalorder %s436, %s452
    %p454 = scmp.eq.s32.totalorder %s36, 0
    %p455 = por %p453, %p454
    %s456 = ssub.s32 %s30, %s37
    %p457 = scmp.eq.s32.totalorder %s456, 0
    %s459 = sadd.s32 %s458, 1
    %s460 = scalar_select %p457, %s458, %s459
    %p463 = pneg %p457
    %p464 = scmp.eq.s32.totalorder %s30, 2
    %p465 = por %p463, %p464
    %p466 = scmp.ne.s32.totalorder %s458, %s461
    %p467 = scmp.eq.s32.totalorder %s30, 0
    %p468 = por %p466, %p467
    %p469 = scmp.ne.s32.totalorder %s458, %s461
    %p470 = scmp.eq.s32.totalorder %s35, 2
    %p471 = por %p469, %p470
    %p472 = scmp.ne.s32.totalorder %s461, %s462
    %p473 = scmp.eq.s32.totalorder %s35, 0
    %p474 = por %p472, %p473
    %p475 = scmp.ne.s32.totalorder %s461, %s462
    %p476 = scmp.eq.s32.totalorder %s36, 2
    %p477 = por %p475, %p476
    %p479 = scmp.ne.s32.totalorder %s462, %s478
    %p480 = scmp.eq.s32.totalorder %s36, 0
    %p481 = por %p479, %p480
    %s482 = ssub.s32 %s30, %s37
    %p483 = scmp.eq.s32.totalorder %s482, 0
    %s485 = sadd.s32 %s484, 1
    %s486 = scalar_select %p483, %s484, %s485
    %p489 = pneg %p483
    %p490 = scmp.eq.s32.totalorder %s30, 2
    %p491 = por %p489, %p490
    %p492 = scmp.ne.s32.totalorder %s484, %s487
    %p493 = scmp.eq.s32.totalorder %s30, 0
    %p494 = por %p492, %p493
    %p495 = scmp.ne.s32.totalorder %s484, %s487
    %p496 = scmp.eq.s32.totalorder %s35, 2
    %p497 = por %p495, %p496
    %p498 = scmp.ne.s32.totalorder %s487, %s488
    %p499 = scmp.eq.s32.totalorder %s35, 0
    %p500 = por %p498, %p499
    %p501 = scmp.ne.s32.totalorder %s487, %s488
    %p502 = scmp.eq.s32.totalorder %s36, 2
    %p503 = por %p501, %p502
    %p505 = scmp.ne.s32.totalorder %s488, %s504
    %p506 = scmp.eq.s32.totalorder %s36, 0
    %p507 = por %p505, %p506
    %s508 = ssub.s32 %s30, %s37
    %p509 = scmp.eq.s32.totalorder %s508, 0
    %s511 = sadd.s32 %s510, 1
    %s512 = scalar_select %p509, %s510, %s511
    %p515 = pneg %p509
    %p516 = scmp.eq.s32.totalorder %s30, 2
    %p517 = por %p515, %p516
    %p518 = scmp.ne.s32.totalorder %s510, %s513
    %p519 = scmp.eq.s32.totalorder %s30, 0
    %p520 = por %p518, %p519
    %p521 = scmp.ne.s32.totalorder %s510, %s513
    %p522 = scmp.eq.s32.totalorder %s35, 2
    %p523 = por %p521, %p522
    %p524 = scmp.ne.s32.totalorder %s513, %s514
    %p525 = scmp.eq.s32.totalorder %s35, 0
    %p526 = por %p524, %p525
    %p527 = scmp.ne.s32.totalorder %s513, %s514
    %p528 = scmp.eq.s32.totalorder %s36, 2
    %p529 = por %p527, %p528
    %p531 = scmp.ne.s32.totalorder %s514, %s530
    %p532 = scmp.eq.s32.totalorder %s36, 0
    %p533 = por %p531, %p532
    %s534 = ssub.s32 %s30, %s37
    %p535 = scmp.eq.s32.totalorder %s534, 0
    %s537 = sadd.s32 %s536, 1
    %s538 = scalar_select %p535, %s536, %s537
    %p541 = pneg %p535
    %p542 = scmp.eq.s32.totalorder %s30, 2
    %p543 = por %p541, %p542
    %p544 = scmp.ne.s32.totalorder %s536, %s539
    %p545 = scmp.eq.s32.totalorder %s30, 0
    %p546 = por %p544, %p545
    %p547 = scmp.ne.s32.totalorder %s536, %s539
    %p548 = scmp.eq.s32.totalorder %s35, 2
    %p549 = por %p547, %p548
    %p550 = scmp.ne.s32.totalorder %s539, %s540
    %p551 = scmp.eq.s32.totalorder %s35, 0
    %p552 = por %p550, %p551
    %p553 = scmp.ne.s32.totalorder %s539, %s540
    %p554 = scmp.eq.s32.totalorder %s36, 2
    %p555 = por %p553, %p554
    %p557 = scmp.ne.s32.totalorder %s540, %s556
    %p558 = scmp.eq.s32.totalorder %s36, 0
    %p559 = por %p557, %p558
    %s560 = ssub.s32 %s30, %s37
    %p561 = scmp.eq.s32.totalorder %s560, 0
    %s563 = sadd.s32 %s562, 1
    %s564 = scalar_select %p561, %s562, %s563
    %p567 = pneg %p561
    %p568 = scmp.eq.s32.totalorder %s30, 2
    %p569 = por %p567, %p568
    %p570 = scmp.ne.s32.totalorder %s562, %s565
    %p571 = scmp.eq.s32.totalorder %s30, 0
    %p572 = por %p570, %p571
    %p573 = scmp.ne.s32.totalorder %s562, %s565
    %p574 = scmp.eq.s32.totalorder %s35, 2
    %p575 = por %p573, %p574
    %p576 = scmp.ne.s32.totalorder %s565, %s566
    %p577 = scmp.eq.s32.totalorder %s35, 0
    %p578 = por %p576, %p577
    %p579 = scmp.ne.s32.totalorder %s565, %s566
    %p580 = scmp.eq.s32.totalorder %s36, 2
    %p581 = por %p579, %p580
    %p583 = scmp.ne.s32.totalorder %s566, %s582
    %p584 = scmp.eq.s32.totalorder %s36, 0
    %p585 = por %p583, %p584
    %s586 = ssub.s32 %s30, %s37
    %p587 = scmp.eq.s32.totalorder %s586, 0
    %s589 = sadd.s32 %s588, 1
    %s590 = scalar_select %p587, %s588, %s589
    %p593 = pneg %p587
    %p594 = scmp.eq.s32.totalorder %s30, 2
    %p595 = por %p593, %p594
    %p596 = scmp.ne.s32.totalorder %s588, %s591
    %p597 = scmp.eq.s32.totalorder %s30, 0
    %p598 = por %p596, %p597
    %p599 = scmp.ne.s32.totalorder %s588, %s591
    %p600 = scmp.eq.s32.totalorder %s35, 2
    %p601 = por %p599, %p600
    %p602 = scmp.ne.s32.totalorder %s591, %s592
    %p603 = scmp.eq.s32.totalorder %s35, 0
    %p604 = por %p602, %p603
    %p605 = scmp.ne.s32.totalorder %s591, %s592
    %p606 = scmp.eq.s32.totalorder %s36, 2
    %p607 = por %p605, %p606
    %p609 = scmp.ne.s32.totalorder %s592, %s608
    %p610 = scmp.eq.s32.totalorder %s36, 0
    %p611 = por %p609, %p610
    %s612 = ssub.s32 %s30, %s37
    %p613 = scmp.eq.s32.totalorder %s612, 0
    %s615 = sadd.s32 %s614, 1
    %s616 = scalar_select %p613, %s614, %s615
    %p619 = pneg %p613
    %p620 = scmp.eq.s32.totalorder %s30, 2
    %p621 = por %p619, %p620
    %p622 = scmp.ne.s32.totalorder %s614, %s617
    %p623 = scmp.eq.s32.totalorder %s30, 0
    %p624 = por %p622, %p623
    %p625 = scmp.ne.s32.totalorder %s614, %s617
    %p626 = scmp.eq.s32.totalorder %s35, 2
    %p627 = por %p625, %p626
    %p628 = scmp.ne.s32.totalorder %s617, %s618
    %p629 = scmp.eq.s32.totalorder %s35, 0
    %p630 = por %p628, %p629
    %p631 = scmp.ne.s32.totalorder %s617, %s618
    %p632 = scmp.eq.s32.totalorder %s36, 2
    %p633 = por %p631, %p632
    %p635 = scmp.ne.s32.totalorder %s618, %s634
    %p636 = scmp.eq.s32.totalorder %s36, 0
    %p637 = por %p635, %p636
    %s639 = sadd.s32 %s638, 1
    %p642 = scmp.eq.s32.totalorder %s30, 2
    %p643 = scmp.ne.s32.totalorder %s638, %s640
    %p644 = scmp.eq.s32.totalorder %s30, 0
    %p645 = por %p643, %p644
    %p646 = scmp.ne.s32.totalorder %s638, %s640
    %p647 = scmp.eq.s32.totalorder %s35, 2
    %p648 = por %p646, %p647
    %p649 = scmp.ne.s32.totalorder %s640, %s641
    %p650 = scmp.eq.s32.totalorder %s35, 0
    %p651 = por %p649, %p650
    %p652 = scmp.ne.s32.totalorder %s640, %s641
    %p653 = scmp.eq.s32.totalorder %s36, 2
    %p654 = por %p652, %p653
    %p656 = scmp.ne.s32.totalorder %s641, %s655
    %p657 = scmp.eq.s32.totalorder %s36, 0
    %p658 = por %p656, %p657
    %p659 = scmp.le.s32.totalorder 1, %s30
    %p660 = scmp.lt.s32.totalorder %s30, 4
    %p661 = pnand %p659, %p660
    %p662 = pneg %p661
    // Predicated region
    $region9: #{hjepa_forward.3} parent=5 // pred_check
      _
    $region10: #{hjepa_forward.3} parent=5 // pred_check_branch
      %664 = sbr.rel (%p661) target = $region12
    $region11: #{hjepa_forward.3} parent=5 // pred_region
      %s665 = ssub.s32 %s30, 1
    $region12: #{hjepa_forward.3} parent=5 // pred_fallthru
      _
    %p666 = scmp.lt.s32.totalorder %s30, 3
    // Predicated region
    $region13: #{hjepa_forward.3} parent=5 // pred_check
      %p667 = pneg %p666
    $region14: #{hjepa_forward.3} parent=5 // pred_check_branch
      %669 = sbr.rel (%p667) target = $region16
    $region15: #{hjepa_forward.3} parent=5 // pred_region
      // Predicated region
      $region17: #{hjepa_forward.3} parent=15 // pred_check
        %p670 = pneg %p52
      $region18: #{hjepa_forward.3} parent=15 // pred_check_branch
        %672 = sbr.rel (%p670) target = $region20
      $region19: #{hjepa_forward.3} parent=15 // pred_region
        %s673 = sadd.s32 %s30, 1
        %p674 = scmp.lt.s32.totalorder %s673, 3
        %s675 = scalar_select %p674, %s673, 3
        %s676 = smul.addr %s675, 4
        %s677 = smul.addr %s676, 8
        %s678 = scalar_lea.vmem %s0, %s677
        %s679 = sadd.s32 %s30, 1
      $region20: #{hjepa_forward.3} parent=15 // pred_fallthru
        _
      // Predicated region
      $region21: #{hjepa_forward.3} parent=15 // pred_check
        %p680 = pneg %p78
      $region22: #{hjepa_forward.3} parent=15 // pred_check_branch
        %682 = sbr.rel (%p680) target = $region24
      $region23: #{hjepa_forward.3} parent=15 // pred_region
        %p683 = scmp.lt.s32.totalorder %s30, 3
        %s684 = scalar_select %p683, %s30, 3
        %s685 = smul.addr %s684, 4
        %s686 = smul.addr %s685, 8
        %s687 = scalar_lea.vmem %s1, %s686
      $region24: #{hjepa_forward.3} parent=15 // pred_fallthru
        _
      // Predicated region
      $region25: #{hjepa_forward.3} parent=15 // pred_check
        %p688 = pneg %p104
      $region26: #{hjepa_forward.3} parent=15 // pred_check_branch
        %690 = sbr.rel (%p688) target = $region28
      $region27: #{hjepa_forward.3} parent=15 // pred_region
        %p691 = scmp.lt.s32.totalorder %s30, 2
        %s692 = scalar_select %p691, %s30, 2
        %s693 = smul.addr %s692, 4
        %s694 = smul.addr %s693, 8
        %s695 = scalar_lea.vmem %s2, %s694
      $region28: #{hjepa_forward.3} parent=15 // pred_fallthru
        _
      // Predicated region
      $region29: #{hjepa_forward.3} parent=15 // pred_check
        %p696 = pneg %p130
      $region30: #{hjepa_forward.3} parent=15 // pred_check_branch
        %698 = sbr.rel (%p696) target = $region32
      $region31: #{hjepa_forward.3} parent=15 // pred_region
        %p699 = scmp.lt.s32.totalorder %s30, 2
        %s700 = scalar_select %p699, %s30, 2
        %s701 = scalar_lea.vmem %s3, %s700
      $region32: #{hjepa_forward.3} parent=15 // pred_fallthru
        _
      // Predicated region
      $region33: #{hjepa_forward.3} parent=15 // pred_check
        %p702 = pneg %p156
      $region34: #{hjepa_forward.3} parent=15 // pred_check_branch
        %704 = sbr.rel (%p702) target = $region36
      $region35: #{hjepa_forward.3} parent=15 // pred_region
        %p705 = scmp.lt.s32.totalorder %s30, 2
        %s706 = scalar_select %p705, %s30, 2
        %s707 = smul.addr %s706, 4
        %s708 = smul.addr %s707, 8
        %s709 = scalar_lea.vmem %s4, %s708
      $region36: #{hjepa_forward.3} parent=15 // pred_fallthru
        _
      // Predicated region
      $region37: #{hjepa_forward.3} parent=15 // pred_check
        %p710 = pneg %p182
      $region38: #{hjepa_forward.3} parent=15 // pred_check_branch
        %712 = sbr.rel (%p710) target = $region40
      $region39: #{hjepa_forward.3} parent=15 // pred_region
        %p713 = scmp.lt.s32.totalorder %s30, 2
        %s714 = scalar_select %p713, %s30, 2
        %s715 = scalar_lea.vmem %s5, %s714
      $region40: #{hjepa_forward.3} parent=15 // pred_fallthru
        _
      // Predicated region
      $region41: #{hjepa_forward.3} parent=15 // pred_check
        %p716 = pneg %p208
      $region42: #{hjepa_forward.3} parent=15 // pred_check_branch
        %718 = sbr.rel (%p716) target = $region44
      $region43: #{hjepa_forward.3} parent=15 // pred_region
        %p719 = scmp.lt.s32.totalorder %s30, 2
        %s720 = scalar_select %p719, %s30, 2
        %s721 = smul.addr %s720, 4
        %s722 = smul.addr %s721, 8
        %s723 = scalar_lea.vmem %s6, %s722
      $region44: #{hjepa_forward.3} parent=15 // pred_fallthru
        _
      // Predicated region
      $region45: #{hjepa_forward.3} parent=15 // pred_check
        %p724 = pneg %p234
      $region46: #{hjepa_forward.3} parent=15 // pred_check_branch
        %726 = sbr.rel (%p724) target = $region48
      $region47: #{hjepa_forward.3} parent=15 // pred_region
        %p727 = scmp.lt.s32.totalorder %s30, 2
        %s728 = scalar_select %p727, %s30, 2
        %s729 = scalar_lea.vmem %s7, %s728
      $region48: #{hjepa_forward.3} parent=15 // pred_fallthru
        _
      // Predicated region
      $region49: #{hjepa_forward.3} parent=15 // pred_check
        %p730 = pneg %p260
      $region50: #{hjepa_forward.3} parent=15 // pred_check_branch
        %732 = sbr.rel (%p730) target = $region52
      $region51: #{hjepa_forward.3} parent=15 // pred_region
        %p733 = scmp.lt.s32.totalorder %s30, 2
        %s734 = scalar_select %p733, %s30, 2
        %s735 = smul.addr %s734, 4
        %s736 = smul.addr %s735, 8
        %s737 = scalar_lea.vmem %s8, %s736
      $region52: #{hjepa_forward.3} parent=15 // pred_fallthru
        _
      // Predicated region
      $region53: #{hjepa_forward.3} parent=15 // pred_check
        %p738 = pneg %p286
      $region54: #{hjepa_forward.3} parent=15 // pred_check_branch
        %740 = sbr.rel (%p738) target = $region56
      $region55: #{hjepa_forward.3} parent=15 // pred_region
        %p741 = scmp.lt.s32.totalorder %s30, 2
        %s742 = scalar_select %p741, %s30, 2
        %s743 = scalar_lea.vmem %s9, %s742
      $region56: #{hjepa_forward.3} parent=15 // pred_fallthru
        _
      // Predicated region
      $region57: #{hjepa_forward.3} parent=15 // pred_check
        %p744 = pneg %p312
      $region58: #{hjepa_forward.3} parent=15 // pred_check_branch
        %746 = sbr.rel (%p744) target = $region60
      $region59: #{hjepa_forward.3} parent=15 // pred_region
        %p747 = scmp.lt.s32.totalorder %s30, 2
        %s748 = scalar_select %p747, %s30, 2
        %s749 = scalar_lea.vmem %s10, %s748
      $region60: #{hjepa_forward.3} parent=15 // pred_fallthru
        _
      // Predicated region
      $region61: #{hjepa_forward.3} parent=15 // pred_check
        %p750 = pneg %p338
      $region62: #{hjepa_forward.3} parent=15 // pred_check_branch
        %752 = sbr.rel (%p750) target = $region64
      $region63: #{hjepa_forward.3} parent=15 // pred_region
        %p753 = scmp.lt.s32.totalorder %s30, 2
        %s754 = scalar_select %p753, %s30, 2
        %s755 = scalar_lea.vmem %s11, %s754
      $region64: #{hjepa_forward.3} parent=15 // pred_fallthru
        _
      // Predicated region
      $region65: #{hjepa_forward.3} parent=15 // pred_check
        %p756 = pneg %p364
      $region66: #{hjepa_forward.3} parent=15 // pred_check_branch
        %758 = sbr.rel (%p756) target = $region68
      $region67: #{hjepa_forward.3} parent=15 // pred_region
        %p759 = scmp.lt.s32.totalorder %s30, 2
        %s760 = scalar_select %p759, %s30, 2
        %s761 = smul.addr %s760, 16
        %s762 = smul.addr %s761, 8
        %s763 = scalar_lea.vmem %s12, %s762
      $region68: #{hjepa_forward.3} parent=15 // pred_fallthru
        _
      // Predicated region
      $region69: #{hjepa_forward.3} parent=15 // pred_check
        %p764 = pneg %p390
      $region70: #{hjepa_forward.3} parent=15 // pred_check_branch
        %766 = sbr.rel (%p764) target = $region72
      $region71: #{hjepa_forward.3} parent=15 // pred_region
        %p767 = scmp.lt.s32.totalorder %s30, 2
        %s768 = scalar_select %p767, %s30, 2
        %s769 = smul.addr %s768, 4
        %s770 = scalar_lea.vmem %s13, %s769
      $region72: #{hjepa_forward.3} parent=15 // pred_fallthru
        _
      // Predicated region
      $region73: #{hjepa_forward.3} parent=15 // pred_check
        %p771 = pneg %p416
      $region74: #{hjepa_forward.3} parent=15 // pred_check_branch
        %773 = sbr.rel (%p771) target = $region76
      $region75: #{hjepa_forward.3} parent=15 // pred_region
        %p774 = scmp.lt.s32.totalorder %s30, 2
        %s775 = scalar_select %p774, %s30, 2
        %s776 = smul.addr %s775, 4
        %s777 = scalar_lea.vmem %s14, %s776
      $region76: #{hjepa_forward.3} parent=15 // pred_fallthru
        _
      // Predicated region
      $region77: #{hjepa_forward.3} parent=15 // pred_check
        %p778 = pneg %p442
      $region78: #{hjepa_forward.3} parent=15 // pred_check_branch
        %780 = sbr.rel (%p778) target = $region80
      $region79: #{hjepa_forward.3} parent=15 // pred_region
        %p781 = scmp.lt.s32.totalorder %s30, 2
        %s782 = scalar_select %p781, %s30, 2
        %s783 = smul.addr %s782, 4
        %s784 = scalar_lea.vmem %s15, %s783
      $region80: #{hjepa_forward.3} parent=15 // pred_fallthru
        _
      // Predicated region
      $region81: #{hjepa_forward.3} parent=15 // pred_check
        %p785 = pneg %p468
      $region82: #{hjepa_forward.3} parent=15 // pred_check_branch
        %787 = sbr.rel (%p785) target = $region84
      $region83: #{hjepa_forward.3} parent=15 // pred_region
        %p788 = scmp.lt.s32.totalorder %s30, 2
        %s789 = scalar_select %p788, %s30, 2
        %s790 = smul.addr %s789, 64
        %s791 = smul.addr %s790, 8
        %s792 = scalar_lea.vmem %s16, %s791
      $region84: #{hjepa_forward.3} parent=15 // pred_fallthru
        _
      // Predicated region
      $region85: #{hjepa_forward.3} parent=15 // pred_check
        %p793 = pneg %p494
      $region86: #{hjepa_forward.3} parent=15 // pred_check_branch
        %795 = sbr.rel (%p793) target = $region88
      $region87: #{hjepa_forward.3} parent=15 // pred_region
        %p796 = scmp.lt.s32.totalorder %s30, 2
        %s797 = scalar_select %p796, %s30, 2
        %s798 = smul.addr %s797, 2
        %s799 = scalar_lea.vmem %s17, %s798
      $region88: #{hjepa_forward.3} parent=15 // pred_fallthru
        _
      // Predicated region
      $region89: #{hjepa_forward.3} parent=15 // pred_check
        %p800 = pneg %p520
      $region90: #{hjepa_forward.3} parent=15 // pred_check_branch
        %802 = sbr.rel (%p800) target = $region92
      $region91: #{hjepa_forward.3} parent=15 // pred_region
        %p803 = scmp.lt.s32.totalorder %s30, 2
        %s804 = scalar_select %p803, %s30, 2
        %s805 = smul.addr %s804, 4
        %s806 = smul.addr %s805, 8
        %s807 = scalar_lea.vmem %s18, %s806
      $region92: #{hjepa_forward.3} parent=15 // pred_fallthru
        _
      // Predicated region
      $region93: #{hjepa_forward.3} parent=15 // pred_check
        %p808 = pneg %p546
      $region94: #{hjepa_forward.3} parent=15 // pred_check_branch
        %810 = sbr.rel (%p808) target = $region96
      $region95: #{hjepa_forward.3} parent=15 // pred_region
        %p811 = scmp.lt.s32.totalorder %s30, 2
        %s812 = scalar_select %p811, %s30, 2
        %s813 = scalar_lea.vmem %s19, %s812
      $region96: #{hjepa_forward.3} parent=15 // pred_fallthru
        _
    $region16: #{hjepa_forward.3} parent=5 // pred_fallthru
      _
    %p814 = scmp.le.s32.totalorder 1, %s30
    %p815 = scmp.lt.s32.totalorder %s30, 4
    %p816 = pnand %p814, %p815
    %p817 = pneg %p816
    // Predicated region
    $region97: #{hjepa_forward.3} parent=5 // pred_check
      _
    $region98: #{hjepa_forward.3} parent=5 // pred_check_branch
      %819 = sbr.rel (%p816) target = $region100
    $region99: #{hjepa_forward.3} parent=5 // pred_region
      %s820 = ssub.s32 %s30, 1
      %s821 = sadd.s32 %s35, 1
      %p822 = scmp.lt.s32.totalorder %s821, 3
      %s823 = scalar_select %p822, %s821, 3
      %s824 = smul.addr %s823, 4
      %s825 = smul.addr %s824, 8
      %s826 = scalar_lea.vmem %s0, %s825
      %p827 = pneg %p58
      %p828 = pneg %p55
      %p829 = scmp.lt.s32.totalorder %s35, 3
      %s830 = scalar_select %p829, %s35, 3
      %s831 = smul.addr %s830, 4
      %s832 = smul.addr %s831, 8
      %s833 = scalar_lea.vmem %s1, %s832
      %p834 = pneg %p84
      %p835 = pneg %p81
      %p836 = scmp.lt.s32.totalorder %s35, 2
      %s837 = scalar_select %p836, %s35, 2
      %s838 = smul.addr %s837, 4
      %s839 = smul.addr %s838, 8
      %s840 = scalar_lea.vmem %s2, %s839
      %p841 = pneg %p110
      %p842 = pneg %p107
      %p843 = scmp.lt.s32.totalorder %s35, 2
      %s844 = scalar_select %p843, %s35, 2
      %s845 = scalar_lea.vmem %s3, %s844
      %p846 = pneg %p136
      %p847 = pneg %p133
      %p848 = scmp.lt.s32.totalorder %s35, 2
      %s849 = scalar_select %p848, %s35, 2
      %s850 = smul.addr %s849, 4
      %s851 = smul.addr %s850, 8
      %s852 = scalar_lea.vmem %s4, %s851
      %p853 = pneg %p162
      %p854 = pneg %p159
      %p855 = scmp.lt.s32.totalorder %s35, 2
      %s856 = scalar_select %p855, %s35, 2
      %s857 = scalar_lea.vmem %s5, %s856
      %p858 = pneg %p188
      %p859 = pneg %p185
      %p860 = scmp.lt.s32.totalorder %s35, 2
      %s861 = scalar_select %p860, %s35, 2
      %s862 = smul.addr %s861, 4
      %s863 = smul.addr %s862, 8
      %s864 = scalar_lea.vmem %s6, %s863
      %p865 = pneg %p214
      %p866 = pneg %p211
      %p867 = scmp.lt.s32.totalorder %s35, 2
      %s868 = scalar_select %p867, %s35, 2
      %s869 = scalar_lea.vmem %s7, %s868
      %p870 = pneg %p240
      %p871 = pneg %p237
      %p872 = scmp.lt.s32.totalorder %s35, 2
      %s873 = scalar_select %p872, %s35, 2
      %s874 = smul.addr %s873, 4
      %s875 = smul.addr %s874, 8
      %s876 = scalar_lea.vmem %s8, %s875
      %p877 = pneg %p266
      %p878 = pneg %p263
      %p879 = scmp.lt.s32.totalorder %s35, 2
      %s880 = scalar_select %p879, %s35, 2
      %s881 = scalar_lea.vmem %s9, %s880
      %p882 = pneg %p292
      %p883 = pneg %p289
      %p884 = scmp.lt.s32.totalorder %s35, 2
      %s885 = scalar_select %p884, %s35, 2
      %s886 = scalar_lea.vmem %s10, %s885
      %p887 = pneg %p318
      %p888 = pneg %p315
      %p889 = scmp.lt.s32.totalorder %s35, 2
      %s890 = scalar_select %p889, %s35, 2
      %s891 = scalar_lea.vmem %s11, %s890
      %p892 = pneg %p344
      %p893 = pneg %p341
      %p894 = scmp.lt.s32.totalorder %s35, 2
      %s895 = scalar_select %p894, %s35, 2
      %s896 = smul.addr %s895, 16
      %s897 = smul.addr %s896, 8
      %s898 = scalar_lea.vmem %s12, %s897
      %p899 = pneg %p370
      %p900 = pneg %p367
      %p901 = scmp.lt.s32.totalorder %s35, 2
      %s902 = scalar_select %p901, %s35, 2
      %s903 = smul.addr %s902, 4
      %s904 = scalar_lea.vmem %s13, %s903
      %p905 = pneg %p396
      %p906 = pneg %p393
      %p907 = scmp.lt.s32.totalorder %s35, 2
      %s908 = scalar_select %p907, %s35, 2
      %s909 = smul.addr %s908, 4
      %s910 = scalar_lea.vmem %s14, %s909
      %p911 = pneg %p422
      %p912 = pneg %p419
      %p913 = scmp.lt.s32.totalorder %s35, 2
      %s914 = scalar_select %p913, %s35, 2
      %s915 = smul.addr %s914, 4
      %s916 = scalar_lea.vmem %s15, %s915
      %p917 = pneg %p448
      %p918 = pneg %p445
      %p919 = scmp.lt.s32.totalorder %s35, 2
      %s920 = scalar_select %p919, %s35, 2
      %s921 = smul.addr %s920, 64
      %s922 = smul.addr %s921, 8
      %s923 = scalar_lea.vmem %s16, %s922
      %p924 = pneg %p474
      %p925 = pneg %p471
      %p926 = scmp.lt.s32.totalorder %s35, 2
      %s927 = scalar_select %p926, %s35, 2
      %s928 = smul.addr %s927, 2
      %s929 = scalar_lea.vmem %s17, %s928
      %p930 = pneg %p500
      %p931 = pneg %p497
      %p932 = scmp.lt.s32.totalorder %s35, 2
      %s933 = scalar_select %p932, %s35, 2
      %s934 = smul.addr %s933, 4
      %s935 = smul.addr %s934, 8
      %s936 = scalar_lea.vmem %s18, %s935
      %p937 = pneg %p526
      %p938 = pneg %p523
      %p939 = scmp.lt.s32.totalorder %s35, 2
      %s940 = scalar_select %p939, %s35, 2
      %s941 = scalar_lea.vmem %s19, %s940
      %p942 = pneg %p552
      %p943 = pneg %p549
      %p944 = pneg %p578
      %p945 = pneg %p575
      %p946 = scmp.lt.s32.totalorder %s35, 2
      %s947 = scalar_select %p946, %s35, 2
      %s948 = smul.addr %s947, 4
      %s949 = smul.addr %s948, 8
      %s950 = scalar_lea.vmem %s20, %s949
      %p951 = pneg %p604
      %p952 = pneg %p601
      %p953 = scmp.lt.s32.totalorder %s35, 2
      %s954 = scalar_select %p953, %s35, 2
      %s955 = smul.addr %s954, 4
      %s956 = smul.addr %s955, 8
      %s957 = scalar_lea.vmem %s21, %s956
      %p958 = pneg %p630
      %p959 = pneg %p627
      %p960 = scmp.lt.s32.totalorder %s35, 2
      %s961 = scalar_select %p960, %s35, 2
      %s962 = smul.addr %s961, 4
      %s963 = smul.addr %s962, 8
      %s964 = scalar_lea.vmem %s22, %s963
      %p965 = pneg %p651
      %p966 = pneg %p648
      %s967 = sadd.s32 %s35, 1
      %p968 = scmp.lt.s32.totalorder %s967, 3
      %s969 = scalar_select %p968, %s967, 3
      %s970 = smul.addr %s969, 4
      %s971 = smul.addr %s970, 8
      %s972 = scalar_lea.vmem %s0, %s971
      %s973 = sadd.s32 %s35, 1
      %p974 = scmp.lt.s32.totalorder %s35, 3
      %s975 = scalar_select %p974, %s35, 3
      %s976 = smul.addr %s975, 4
      %s977 = smul.addr %s976, 8
      %s978 = scalar_lea.vmem %s1, %s977
      %p979 = scmp.lt.s32.totalorder %s35, 2
      %s980 = scalar_select %p979, %s35, 2
      %s981 = smul.addr %s980, 4
      %s982 = smul.addr %s981, 8
      %s983 = scalar_lea.vmem %s2, %s982
      %p984 = scmp.lt.s32.totalorder %s35, 2
      %s985 = scalar_select %p984, %s35, 2
      %s986 = scalar_lea.vmem %s3, %s985
      %p987 = scmp.lt.s32.totalorder %s35, 2
      %s988 = scalar_select %p987, %s35, 2
      %s989 = smul.addr %s988, 4
      %s990 = smul.addr %s989, 8
      %s991 = scalar_lea.vmem %s4, %s990
      %p992 = scmp.lt.s32.totalorder %s35, 2
      %s993 = scalar_select %p992, %s35, 2
      %s994 = scalar_lea.vmem %s5, %s993
      %p995 = scmp.lt.s32.totalorder %s35, 2
      %s996 = scalar_select %p995, %s35, 2
      %s997 = smul.addr %s996, 4
      %s998 = smul.addr %s997, 8
      %s999 = scalar_lea.vmem %s6, %s998
      %p1000 = scmp.lt.s32.totalorder %s35, 2
      %s1001 = scalar_select %p1000, %s35, 2
      %s1002 = scalar_lea.vmem %s7, %s1001
      %p1003 = scmp.lt.s32.totalorder %s35, 2
      %s1004 = scalar_select %p1003, %s35, 2
      %s1005 = smul.addr %s1004, 4
      %s1006 = smul.addr %s1005, 8
      %s1007 = scalar_lea.vmem %s8, %s1006
      %p1008 = scmp.lt.s32.totalorder %s35, 2
      %s1009 = scalar_select %p1008, %s35, 2
      %s1010 = scalar_lea.vmem %s9, %s1009
      %p1011 = scmp.lt.s32.totalorder %s35, 2
      %s1012 = scalar_select %p1011, %s35, 2
      %s1013 = scalar_lea.vmem %s10, %s1012
      %p1014 = scmp.lt.s32.totalorder %s35, 2
      %s1015 = scalar_select %p1014, %s35, 2
      %s1016 = scalar_lea.vmem %s11, %s1015
      %p1017 = scmp.lt.s32.totalorder %s35, 2
      %s1018 = scalar_select %p1017, %s35, 2
      %s1019 = smul.addr %s1018, 16
      %s1020 = smul.addr %s1019, 8
      %s1021 = scalar_lea.vmem %s12, %s1020
      %p1022 = scmp.lt.s32.totalorder %s35, 2
      %s1023 = scalar_select %p1022, %s35, 2
      %s1024 = smul.addr %s1023, 4
      %s1025 = scalar_lea.vmem %s13, %s1024
      %p1026 = scmp.lt.s32.totalorder %s35, 2
      %s1027 = scalar_select %p1026, %s35, 2
      %s1028 = smul.addr %s1027, 4
      %s1029 = scalar_lea.vmem %s14, %s1028
      %p1030 = scmp.lt.s32.totalorder %s35, 2
      %s1031 = scalar_select %p1030, %s35, 2
      %s1032 = smul.addr %s1031, 4
      %s1033 = scalar_lea.vmem %s15, %s1032
      %p1034 = scmp.lt.s32.totalorder %s35, 2
      %s1035 = scalar_select %p1034, %s35, 2
      %s1036 = smul.addr %s1035, 64
      %s1037 = smul.addr %s1036, 8
      %s1038 = scalar_lea.vmem %s16, %s1037
      %p1039 = scmp.lt.s32.totalorder %s35, 2
      %s1040 = scalar_select %p1039, %s35, 2
      %s1041 = smul.addr %s1040, 2
      %s1042 = scalar_lea.vmem %s17, %s1041
      %p1043 = scmp.lt.s32.totalorder %s35, 2
      %s1044 = scalar_select %p1043, %s35, 2
      %s1045 = smul.addr %s1044, 4
      %s1046 = smul.addr %s1045, 8
      %s1047 = scalar_lea.vmem %s18, %s1046
      %p1048 = scmp.lt.s32.totalorder %s35, 2
      %s1049 = scalar_select %p1048, %s35, 2
      %s1050 = scalar_lea.vmem %s19, %s1049
      %p1051 = scmp.lt.s32.totalorder %s35, 2
      %s1052 = scalar_select %p1051, %s35, 2
      %s1053 = smul.addr %s1052, 4
      %s1054 = smul.addr %s1053, 8
      %s1055 = scalar_lea.vmem %s20, %s1054
      %p1056 = scmp.lt.s32.totalorder %s35, 2
      %s1057 = scalar_select %p1056, %s35, 2
      %s1058 = smul.addr %s1057, 4
      %s1059 = smul.addr %s1058, 8
      %s1060 = scalar_lea.vmem %s21, %s1059
      %p1061 = scmp.lt.s32.totalorder %s35, 2
      %s1062 = scalar_select %p1061, %s35, 2
      %s1063 = smul.addr %s1062, 4
      %s1064 = smul.addr %s1063, 8
      %s1065 = scalar_lea.vmem %s22, %s1064
      %p1066 = scmp.eq.s32.totalorder %s35, 0
      // Predicated region
      $region101: #{hjepa_forward.3} parent=99 // pred_check
        %p1067 = pneg %p1066
      $region102: #{hjepa_forward.3} parent=99 // pred_check_branch
        %1069 = sbr.rel (%p1067) target = $region104
      $region103: #{hjepa_forward.3} parent=99 // pred_region
        %vm1070 = vcmask 261120
        %1071 = vst.msk [vmem:[#allocation2] sm:$0xff] %vm1070, 0.0
        %1072 = vst.msk [vmem:[#allocation2 + $0x8] sm:$0xff] %vm1070, 0.0
        %1073 = vst.msk [vmem:[#allocation2 + $0x10] sm:$0xff] %vm1070, 0.0
        %1074 = vst.msk [vmem:[#allocation2 + $0x18] sm:$0xff] %vm1070, 0.0
        %1075 = vst.msk [vmem:[#allocation3] sm:$0xff] %vm1070, 0.0
        %1076 = vst.msk [vmem:[#allocation3 + $0x8] sm:$0xff] %vm1070, 0.0
        %1077 = vst.msk [vmem:[#allocation3 + $0x10] sm:$0xff] %vm1070, 0.0
        %1078 = vst.msk [vmem:[#allocation3 + $0x18] sm:$0xff] %vm1070, 0.0
        %vm1079 = vcmask 16384
        %1080 = vst.msk [vmem:[%s23] sm:$0x1] %vm1079, 0.0
      $region104: #{hjepa_forward.3} parent=99 // pred_fallthru
        _
      %v1081 = vld [vmem:[%s1013] sm:$0x1]
      %v1082 = vld [vmem:[%s1016] sm:$0x1]
      %s1083 = sadd.s32 %s35, 1
      %s1084 = scvt.s32.f32 %s1083
      %v1085 = vstv %s1084
      %v1086 = vrcp.pop %v1085
      %s1087 = vtos %v1086
      %v1088 = vld [vmem:[%s972] sm:$0xff]
      %v1089 = vld [vmem:[%s972 + $0x8] sm:$0xff]
      %v1090 = vld [vmem:[%s972 + $0x10] sm:$0xff]
      %v1091 = vld [vmem:[%s972 + $0x18] sm:$0xff]
      %v1092 = vld [vmem:[%s983] sm:$0xff]
      %v1093 = vld [vmem:[%s983 + $0x8] sm:$0xff]
      %v1094 = vld [vmem:[%s983 + $0x10] sm:$0xff]
      %v1095 = vld [vmem:[%s983 + $0x18] sm:$0xff]
      %v1096 = vld [vmem:[%s986] sm:$0x1]
      %v1098 = vlaneseq
      %v1099 = vshrl.u32 %v1098, 7
      %v1100 = vsub.s32 0, %v1099
      %v1101 = vrot.slane %v1096, %v1100
      %vm1103 = vcmask 261120
      %v1105 = vsel %vm1103, %v1088, 0
      %v1108 = vsel %vm1103, %v1089, 0
      %v1111 = vsel %vm1103, %v1090, 0
      %v1114 = vsel %vm1103, %v1091, 0
      %1116 = vmatprep.subr.mxu0 0.0
      %1117 = vmatpush1.msra.mxu0 %v1092
      %1118 = vmatprep.subr.mxu0 0.0
      %1119 = vmatpush1.msra.mxu0 %v1093
      %1120 = vmatprep.subr.mxu0 0.0
      %1121 = vmatpush1.msra.mxu0 %v1094
      %1122 = vmatprep.subr.mxu0 0.0
      %1123 = vmatpush1.msra.mxu0 %v1095
      %1124 = vmatprep.subr.mxu0 0.0
      %1125 = vmatpush1.msra.mxu0 0.0
      %1126 = vmatprep.subr.mxu0 0.0
      %1127 = vmatpush1.msra.mxu0 0.0
      %1128 = vmatprep.subr.mxu0 0.0
      %1129 = vmatpush1.msra.mxu0 0.0
      %1130 = vmatprep.subr.mxu0 0.0
      %1131 = vmatpush1.msra.mxu0 0.0
      %1132 = vmatprep.subr.mxu0 0.0
      %1133 = vmatpush1.msra.mxu0 0.0
      %1134 = vmatprep.subr.mxu0 0.0
      %1135 = vmatpush1.msra.mxu0 0.0
      %1136 = vmatprep.subr.mxu0 0.0
      %1137 = vmatpush1.msra.mxu0 0.0
      %1138 = vmatprep.subr.mxu0 0.0
      %1139 = vmatpush1.msra.mxu0 0.0
      %1140 = vmatprep.subr.mxu0 0.0
      %1141 = vmatpush1.msra.mxu0 0.0
      %1142 = vmatprep.subr.mxu0 0.0
      %1143 = vmatpush1.msra.mxu0 0.0
      %1144 = vmatprep.subr.mxu0 0.0
      %1145 = vmatpush1.msra.mxu0 0.0
      %1146 = vmatprep.subr.mxu0 0.0
      %1147 = vmatpush1.msra.mxu0 0.0
      %1148 = vmatprep.subr.mxu0 0.0
      %1149 = vmatpush1.msra.mxu0 0.0
      %1150 = vmatprep.subr.mxu0 0.0
      %1151 = vmatpush1.msra.mxu0 0.0
      %1152 = vmatprep.subr.mxu0 0.0
      %1153 = vmatpush1.msra.mxu0 0.0
      %1154 = vmatprep.subr.mxu0 0.0
      %1155 = vmatpush1.msra.mxu0 0.0
      %1156 = vmatprep.subr.mxu0 0.0
      %1157 = vmatpush1.msra.mxu0 0.0
      %1158 = vmatprep.subr.mxu0 0.0
      %1159 = vmatpush1.msra.mxu0 0.0
      %1160 = vmatprep.subr.mxu0 0.0
      %1161 = vmatpush1.msra.mxu0 0.0
      %1162 = vmatprep.subr.mxu0 0.0
      %1163 = vmatpush1.msra.mxu0 0.0
      %1164 = vmatprep.subr.mxu0 0.0
      %1165 = vmatpush1.msra.mxu0 0.0
      %1166 = vmatprep.subr.mxu0 0.0
      %1167 = vmatpush1.msra.mxu0 0.0
      %1168 = vmatprep.subr.mxu0 0.0
      %1169 = vmatpush1.msra.mxu0 0.0
      %1170 = vmatprep.subr.mxu0 0.0
      %1171 = vmatpush1.msra.mxu0 0.0
      %1172 = vmatprep.subr.mxu0 0.0
      %1173 = vmatpush1.msra.mxu0 0.0
      %1174 = vmatprep.subr.mxu0 0.0
      %1175 = vmatpush1.msra.mxu0 0.0
      %1176 = vmatprep.subr.mxu0 0.0
      %1177 = vmatpush1.msra.mxu0 0.0
      %1178 = vmatprep.subr.mxu0 0.0
      %1179 = vmatpush1.msra.mxu0 0.0
      %1180 = vmatprep.mubr.f32.mxu0 0.0
      %1181 = vmatmul.mubr.f32.gmra.mrb[0].mxu0 %v1105
      %v1182 = vpop.f32.mrb[0].mxu0
      %v1183 = vadd.f32 %v1101, %v1182
      %v1184 = vpop.f32.mrb[0].mxu0
      %1185 = vmatprep.mubr.f32.mxu0 0.0
      %1186 = vmatmul.mubr.f32.gmra.mrb[0].mxu0 %v1108
      %v1187 = vpop.f32.mrb[0].mxu0
      %v1188 = vadd.f32 %v1101, %v1187
      %v1189 = vpop.f32.mrb[0].mxu0
      %1190 = vmatprep.mubr.f32.mxu0 0.0
      %1191 = vmatmul.mubr.f32.gmra.mrb[0].mxu0 %v1111
      %v1192 = vpop.f32.mrb[0].mxu0
      %v1193 = vadd.f32 %v1101, %v1192
      %v1194 = vpop.f32.mrb[0].mxu0
      %1195 = vmatprep.mubr.f32.mxu0 0.0
      %1196 = vmatmul.mubr.f32.gmra.mrb[0].mxu0 %v1114
      %v1197 = vpop.f32.mrb[0].mxu0
      %v1198 = vadd.f32 %v1101, %v1197
      %v1199 = vpop.f32.mrb[0].mxu0
      %1200 = vdwg.mxu0
      %v1201 = vsel %vm1103, %v1183, 0.0
      %1202 = vadd.xlane.f32.xlu0 %v1201
      %v1203 = vpop.xlane.xlu0 %1202
      %v1204 = vsel %vm1103, %v1188, 0.0
      %1205 = vadd.xlane.f32.xlu0 %v1204
      %v1206 = vpop.xlane.xlu0 %1205
      %v1207 = vsel %vm1103, %v1193, 0.0
      %1208 = vadd.xlane.f32.xlu0 %v1207
      %v1209 = vpop.xlane.xlu0 %1208
      %v1210 = vsel %vm1103, %v1198, 0.0
      %1211 = vadd.xlane.f32.xlu0 %v1210
      %v1212 = vpop.xlane.xlu0 %1211
      %v1213 = vrcp.pop 32.0
      %v1214 = vmul.f32 %v1203, %v1213
      %v1215 = vmul.f32 %v1206, %v1213
      %v1216 = vmul.f32 %v1209, %v1213
      %v1217 = vmul.f32 %v1212, %v1213
      %v1218 = vsub.f32 %v1183, %v1214
      %v1219 = vsub.f32 %v1188, %v1215
      %v1220 = vsub.f32 %v1193, %v1216
      %v1221 = vsub.f32 %v1198, %v1217
      %v1222 = vmul.f32 %v1218, %v1218
      %v1223 = vmul.f32 %v1219, %v1219
      %v1224 = vmul.f32 %v1220, %v1220
      %v1225 = vmul.f32 %v1221, %v1221
      %v1226 = vsel %vm1103, %v1222, 0.0
      %1227 = vadd.xlane.f32.xlu0 %v1226
      %v1228 = vpop.xlane.xlu0 %1227
      %v1229 = vsel %vm1103, %v1223, 0.0
      %1230 = vadd.xlane.f32.xlu0 %v1229
      %v1231 = vpop.xlane.xlu0 %1230
      %v1232 = vsel %vm1103, %v1224, 0.0
      %1233 = vadd.xlane.f32.xlu0 %v1232
      %v1234 = vpop.xlane.xlu0 %1233
      %v1235 = vsel %vm1103, %v1225, 0.0
      %1236 = vadd.xlane.f32.xlu0 %v1235
      %v1237 = vpop.xlane.xlu0 %1236
      %v1238 = vmul.f32 %v1228, %v1213
      %v1239 = vmul.f32 %v1231, %v1213
      %v1240 = vmul.f32 %v1234, %v1213
      %v1241 = vmul.f32 %v1237, %v1213
      %v1242 = vadd.f32 %v1238, 1e-05
      %v1243 = vadd.f32 %v1239, 1e-05
      %v1244 = vadd.f32 %v1240, 1e-05
      %v1245 = vadd.f32 %v1241, 1e-05
      %v1246 = vrsqrt.pop %v1242
      %v1247 = vrsqrt.pop %v1243
      %v1248 = vrsqrt.pop %v1244
      %v1249 = vrsqrt.pop %v1245
      %v1250 = vmul.f32 %v1218, %v1246
      %v1251 = vmul.f32 %v1219, %v1247
      %v1252 = vmul.f32 %v1220, %v1248
      %v1253 = vmul.f32 %v1221, %v1249
      %v1255 = vlaneseq
      %v1256 = vshrl.u32 %v1255, 7
      %v1257 = vsub.s32 0, %v1256
      %v1258 = vrot.slane %v1081, %v1257
      %v1260 = vmul.f32 %v1250, %v1258
      %v1261 = vmul.f32 %v1251, %v1258
      %v1262 = vmul.f32 %v1252, %v1258
      %v1263 = vmul.f32 %v1253, %v1258
      %v1265 = vlaneseq
      %v1266 = vshrl.u32 %v1265, 7
      %v1267 = vsub.s32 0, %v1266
      %v1268 = vrot.slane %v1082, %v1267
      %v1270 = vadd.f32 %v1260, %v1268
      %v1271 = vadd.f32 %v1261, %v1268
      %v1272 = vadd.f32 %v1262, %v1268
      %v1273 = vadd.f32 %v1263, %v1268
      %v1274 = vld [vmem:[#allocation2] sm:$0xff]
      %v1275 = vld [vmem:[#allocation2 + $0x8] sm:$0xff]
      %v1276 = vld [vmem:[#allocation2 + $0x10] sm:$0xff]
      %v1277 = vld [vmem:[#allocation2 + $0x18] sm:$0xff]
      %v1278 = vadd.f32 %v1274, %v1270
      %v1279 = vadd.f32 %v1275, %v1271
      %v1280 = vadd.f32 %v1276, %v1272
      %v1281 = vadd.f32 %v1277, %v1273
      %1282 = vst.msk [vmem:[#allocation2] sm:$0xff] %vm1103, %v1278
      %1283 = vst.msk [vmem:[#allocation2 + $0x8] sm:$0xff] %vm1103, %v1279
      %1284 = vst.msk [vmem:[#allocation2 + $0x10] sm:$0xff] %vm1103, %v1280
      %1285 = vst.msk [vmem:[#allocation2 + $0x18] sm:$0xff] %vm1103, %v1281
      %v1286 = vld [vmem:[#allocation2] sm:$0xff]
      %v1287 = vld [vmem:[#allocation2 + $0x8] sm:$0xff]
      %v1288 = vld [vmem:[#allocation2 + $0x10] sm:$0xff]
      %v1289 = vld [vmem:[#allocation2 + $0x18] sm:$0xff]
      %v1290 = vstv %s1087
      %v1291 = vmul.f32 %v1286, %v1290
      %v1292 = vmul.f32 %v1287, %v1290
      %v1293 = vmul.f32 %v1288, %v1290
      %v1294 = vmul.f32 %v1289, %v1290
      %v1295 = vld [vmem:[%s999] sm:$0xff]
      %v1296 = vld [vmem:[%s999 + $0x8] sm:$0xff]
      %v1297 = vld [vmem:[%s999 + $0x10] sm:$0xff]
      %v1298 = vld [vmem:[%s999 + $0x18] sm:$0xff]
      %v1299 = vld [vmem:[%s1002] sm:$0x1]
      %v1301 = vlaneseq
      %v1302 = vshrl.u32 %v1301, 7
      %v1303 = vsub.s32 0, %v1302
      %v1304 = vrot.slane %v1299, %v1303
      %v1307 = vsel %vm1103, %v1291, 0
      %v1310 = vsel %vm1103, %v1292, 0
      %v1313 = vsel %vm1103, %v1293, 0
      %v1316 = vsel %vm1103, %v1294, 0
      %1318 = vmatprep.subr.mxu0 0.0
      %1319 = vmatpush1.msra.mxu0 %v1295
      %1320 = vmatprep.subr.mxu0 0.0
      %1321 = vmatpush1.msra.mxu0 %v1296
      %1322 = vmatprep.subr.mxu0 0.0
      %1323 = vmatpush1.msra.mxu0 %v1297
      %1324 = vmatprep.subr.mxu0 0.0
      %1325 = vmatpush1.msra.mxu0 %v1298
      %1326 = vmatprep.subr.mxu0 0.0
      %1327 = vmatpush1.msra.mxu0 0.0
      %1328 = vmatprep.subr.mxu0 0.0
      %1329 = vmatpush1.msra.mxu0 0.0
      %1330 = vmatprep.subr.mxu0 0.0
      %1331 = vmatpush1.msra.mxu0 0.0
      %1332 = vmatprep.subr.mxu0 0.0
      %1333 = vmatpush1.msra.mxu0 0.0
      %1334 = vmatprep.subr.mxu0 0.0
      %1335 = vmatpush1.msra.mxu0 0.0
      %1336 = vmatprep.subr.mxu0 0.0
      %1337 = vmatpush1.msra.mxu0 0.0
      %1338 = vmatprep.subr.mxu0 0.0
      %1339 = vmatpush1.msra.mxu0 0.0
      %1340 = vmatprep.subr.mxu0 0.0
      %1341 = vmatpush1.msra.mxu0 0.0
      %1342 = vmatprep.subr.mxu0 0.0
      %1343 = vmatpush1.msra.mxu0 0.0
      %1344 = vmatprep.subr.mxu0 0.0
      %1345 = vmatpush1.msra.mxu0 0.0
      %1346 = vmatprep.subr.mxu0 0.0
      %1347 = vmatpush1.msra.mxu0 0.0
      %1348 = vmatprep.subr.mxu0 0.0
      %1349 = vmatpush1.msra.mxu0 0.0
      %1350 = vmatprep.subr.mxu0 0.0
      %1351 = vmatpush1.msra.mxu0 0.0
      %1352 = vmatprep.subr.mxu0 0.0
      %1353 = vmatpush1.msra.mxu0 0.0
      %1354 = vmatprep.subr.mxu0 0.0
      %1355 = vmatpush1.msra.mxu0 0.0
      %1356 = vmatprep.subr.mxu0 0.0
      %1357 = vmatpush1.msra.mxu0 0.0
      %1358 = vmatprep.subr.mxu0 0.0
      %1359 = vmatpush1.msra.mxu0 0.0
      %1360 = vmatprep.subr.mxu0 0.0
      %1361 = vmatpush1.msra.mxu0 0.0
      %1362 = vmatprep.subr.mxu0 0.0
      %1363 = vmatpush1.msra.mxu0 0.0
      %1364 = vmatprep.subr.mxu0 0.0
      %1365 = vmatpush1.msra.mxu0 0.0
      %1366 = vmatprep.subr.mxu0 0.0
      %1367 = vmatpush1.msra.mxu0 0.0
      %1368 = vmatprep.subr.mxu0 0.0
      %1369 = vmatpush1.msra.mxu0 0.0
      %1370 = vmatprep.subr.mxu0 0.0
      %1371 = vmatpush1.msra.mxu0 0.0
      %1372 = vmatprep.subr.mxu0 0.0
      %1373 = vmatpush1.msra.mxu0 0.0
      %1374 = vmatprep.subr.mxu0 0.0
      %1375 = vmatpush1.msra.mxu0 0.0
      %1376 = vmatprep.subr.mxu0 0.0
      %1377 = vmatpush1.msra.mxu0 0.0
      %1378 = vmatprep.subr.mxu0 0.0
      %1379 = vmatpush1.msra.mxu0 0.0
      %1380 = vmatprep.subr.mxu0 0.0
      %1381 = vmatpush1.msra.mxu0 0.0
      %1382 = vmatprep.mubr.f32.mxu0 0.0
      %1383 = vmatmul.mubr.f32.gmra.mrb[0].mxu0 %v1307
      %v1384 = vpop.f32.mrb[0].mxu0
      %v1385 = vadd.f32 %v1304, %v1384
      %v1386 = vpop.f32.mrb[0].mxu0
      %1387 = vmatprep.mubr.f32.mxu0 0.0
      %1388 = vmatmul.mubr.f32.gmra.mrb[0].mxu0 %v1310
      %v1389 = vpop.f32.mrb[0].mxu0
      %v1390 = vadd.f32 %v1304, %v1389
      %v1391 = vpop.f32.mrb[0].mxu0
      %1392 = vmatprep.mubr.f32.mxu0 0.0
      %1393 = vmatmul.mubr.f32.gmra.mrb[0].mxu0 %v1313
      %v1394 = vpop.f32.mrb[0].mxu0
      %v1395 = vadd.f32 %v1304, %v1394
      %v1396 = vpop.f32.mrb[0].mxu0
      %1397 = vmatprep.mubr.f32.mxu0 0.0
      %1398 = vmatmul.mubr.f32.gmra.mrb[0].mxu0 %v1316
      %v1399 = vpop.f32.mrb[0].mxu0
      %v1400 = vadd.f32 %v1304, %v1399
      %v1401 = vpop.f32.mrb[0].mxu0
      %1402 = vdwg.mxu0
      %v1403 = vsel %vm1103, %v1385, 0.0
      %1404 = vadd.xlane.f32.xlu0 %v1403
      %v1405 = vpop.xlane.xlu0 %1404
      %v1406 = vsel %vm1103, %v1390, 0.0
      %1407 = vadd.xlane.f32.xlu0 %v1406
      %v1408 = vpop.xlane.xlu0 %1407
      %v1409 = vsel %vm1103, %v1395, 0.0
      %1410 = vadd.xlane.f32.xlu0 %v1409
      %v1411 = vpop.xlane.xlu0 %1410
      %v1412 = vsel %vm1103, %v1400, 0.0
      %1413 = vadd.xlane.f32.xlu0 %v1412
      %v1414 = vpop.xlane.xlu0 %1413
      %v1415 = vmul.f32 %v1405, %v1213
      %v1416 = vmul.f32 %v1408, %v1213
      %v1417 = vmul.f32 %v1411, %v1213
      %v1418 = vmul.f32 %v1414, %v1213
      %v1419 = vsub.f32 %v1385, %v1415
      %v1420 = vsub.f32 %v1390, %v1416
      %v1421 = vsub.f32 %v1395, %v1417
      %v1422 = vsub.f32 %v1400, %v1418
      %v1423 = vmul.f32 %v1419, %v1419
      %v1424 = vmul.f32 %v1420, %v1420
      %v1425 = vmul.f32 %v1421, %v1421
      %v1426 = vmul.f32 %v1422, %v1422
      %v1427 = vsel %vm1103, %v1423, 0.0
      %1428 = vadd.xlane.f32.xlu0 %v1427
      %v1429 = vpop.xlane.xlu0 %1428
      %v1430 = vsel %vm1103, %v1424, 0.0
      %1431 = vadd.xlane.f32.xlu0 %v1430
      %v1432 = vpop.xlane.xlu0 %1431
      %v1433 = vsel %vm1103, %v1425, 0.0
      %1434 = vadd.xlane.f32.xlu0 %v1433
      %v1435 = vpop.xlane.xlu0 %1434
      %v1436 = vsel %vm1103, %v1426, 0.0
      %1437 = vadd.xlane.f32.xlu0 %v1436
      %v1438 = vpop.xlane.xlu0 %1437
      %v1439 = vmul.f32 %v1429, %v1213
      %v1440 = vmul.f32 %v1432, %v1213
      %v1441 = vmul.f32 %v1435, %v1213
      %v1442 = vmul.f32 %v1438, %v1213
      %v1443 = vadd.f32 %v1439, 1e-05
      %v1444 = vadd.f32 %v1440, 1e-05
      %v1445 = vadd.f32 %v1441, 1e-05
      %v1446 = vadd.f32 %v1442, 1e-05
      %v1447 = vrsqrt.pop %v1443
      %v1448 = vrsqrt.pop %v1444
      %v1449 = vrsqrt.pop %v1445
      %v1450 = vrsqrt.pop %v1446
      %v1451 = vmul.f32 %v1419, %v1447
      %v1452 = vmul.f32 %v1420, %v1448
      %v1453 = vmul.f32 %v1421, %v1449
      %v1454 = vmul.f32 %v1422, %v1450
      %v1455 = vmul.f32 %v1451, %v1258
      %v1456 = vmul.f32 %v1452, %v1258
      %v1457 = vmul.f32 %v1453, %v1258
      %v1458 = vmul.f32 %v1454, %v1258
      %v1459 = vadd.f32 %v1455, %v1268
      %v1460 = vadd.f32 %v1456, %v1268
      %v1461 = vadd.f32 %v1457, %v1268
      %v1462 = vadd.f32 %v1458, %v1268
      %v1463 = vld [vmem:[%s978] sm:$0xff]
      %v1464 = vld [vmem:[%s978 + $0x8] sm:$0xff]
      %v1465 = vld [vmem:[%s978 + $0x10] sm:$0xff]
      %v1466 = vld [vmem:[%s978 + $0x18] sm:$0xff]
      %v1467 = vld [vmem:[%s991] sm:$0xff]
      %v1468 = vld [vmem:[%s991 + $0x8] sm:$0xff]
      %v1469 = vld [vmem:[%s991 + $0x10] sm:$0xff]
      %v1470 = vld [vmem:[%s991 + $0x18] sm:$0xff]
      %v1471 = vld [vmem:[%s994] sm:$0x1]
      %v1473 = vlaneseq
      %v1474 = vshrl.u32 %v1473, 7
      %v1475 = vsub.s32 0, %v1474
      %v1476 = vrot.slane %v1471, %v1475
      %v1479 = vsel %vm1103, %v1463, 0
      %v1482 = vsel %vm1103, %v1464, 0
      %v1485 = vsel %vm1103, %v1465, 0
      %v1488 = vsel %vm1103, %v1466, 0
      %1490 = vmatprep.subr.mxu0 0.0
      %1491 = vmatpush1.msra.mxu0 %v1467
      %1492 = vmatprep.subr.mxu0 0.0
      %1493 = vmatpush1.msra.mxu0 %v1468
      %1494 = vmatprep.subr.mxu0 0.0
      %1495 = vmatpush1.msra.mxu0 %v1469
      %1496 = vmatprep.subr.mxu0 0.0
      %1497 = vmatpush1.msra.mxu0 %v1470
      %1498 = vmatprep.subr.mxu0 0.0
      %1499 = vmatpush1.msra.mxu0 0.0
      %1500 = vmatprep.subr.mxu0 0.0
      %1501 = vmatpush1.msra.mxu0 0.0
      %1502 = vmatprep.subr.mxu0 0.0
      %1503 = vmatpush1.msra.mxu0 0.0
      %1504 = vmatprep.subr.mxu0 0.0
      %1505 = vmatpush1.msra.mxu0 0.0
      %1506 = vmatprep.subr.mxu0 0.0
      %1507 = vmatpush1.msra.mxu0 0.0
      %1508 = vmatprep.subr.mxu0 0.0
      %1509 = vmatpush1.msra.mxu0 0.0
      %1510 = vmatprep.subr.mxu0 0.0
      %1511 = vmatpush1.msra.mxu0 0.0
      %1512 = vmatprep.subr.mxu0 0.0
      %1513 = vmatpush1.msra.mxu0 0.0
      %1514 = vmatprep.subr.mxu0 0.0
      %1515 = vmatpush1.msra.mxu0 0.0
      %1516 = vmatprep.subr.mxu0 0.0
      %1517 = vmatpush1.msra.mxu0 0.0
      %1518 = vmatprep.subr.mxu0 0.0
      %1519 = vmatpush1.msra.mxu0 0.0
      %1520 = vmatprep.subr.mxu0 0.0
      %1521 = vmatpush1.msra.mxu0 0.0
      %1522 = vmatprep.subr.mxu0 0.0
      %1523 = vmatpush1.msra.mxu0 0.0
      %1524 = vmatprep.subr.mxu0 0.0
      %1525 = vmatpush1.msra.mxu0 0.0
      %1526 = vmatprep.subr.mxu0 0.0
      %1527 = vmatpush1.msra.mxu0 0.0
      %1528 = vmatprep.subr.mxu0 0.0
      %1529 = vmatpush1.msra.mxu0 0.0
      %1530 = vmatprep.subr.mxu0 0.0
      %1531 = vmatpush1.msra.mxu0 0.0
      %1532 = vmatprep.subr.mxu0 0.0
      %1533 = vmatpush1.msra.mxu0 0.0
      %1534 = vmatprep.subr.mxu0 0.0
      %1535 = vmatpush1.msra.mxu0 0.0
      %1536 = vmatprep.subr.mxu0 0.0
      %1537 = vmatpush1.msra.mxu0 0.0
      %1538 = vmatprep.subr.mxu0 0.0
      %1539 = vmatpush1.msra.mxu0 0.0
      %1540 = vmatprep.subr.mxu0 0.0
      %1541 = vmatpush1.msra.mxu0 0.0
      %1542 = vmatprep.subr.mxu0 0.0
      %1543 = vmatpush1.msra.mxu0 0.0
      %1544 = vmatprep.subr.mxu0 0.0
      %1545 = vmatpush1.msra.mxu0 0.0
      %1546 = vmatprep.subr.mxu0 0.0
      %1547 = vmatpush1.msra.mxu0 0.0
      %1548 = vmatprep.subr.mxu0 0.0
      %1549 = vmatpush1.msra.mxu0 0.0
      %1550 = vmatprep.subr.mxu0 0.0
      %1551 = vmatpush1.msra.mxu0 0.0
      %1552 = vmatprep.subr.mxu0 0.0
      %1553 = vmatpush1.msra.mxu0 0.0
      %1554 = vmatprep.mubr.f32.mxu0 0.0
      %1555 = vmatmul.mubr.f32.gmra.mrb[0].mxu0 %v1479
      %v1556 = vpop.f32.mrb[0].mxu0
      %v1557 = vadd.f32 %v1476, %v1556
      %v1558 = vpop.f32.mrb[0].mxu0
      %1559 = vmatprep.mubr.f32.mxu0 0.0
      %1560 = vmatmul.mubr.f32.gmra.mrb[0].mxu0 %v1482
      %v1561 = vpop.f32.mrb[0].mxu0
      %v1562 = vadd.f32 %v1476, %v1561
      %v1563 = vpop.f32.mrb[0].mxu0
      %1564 = vmatprep.mubr.f32.mxu0 0.0
      %1565 = vmatmul.mubr.f32.gmra.mrb[0].mxu0 %v1485
      %v1566 = vpop.f32.mrb[0].mxu0
      %v1567 = vadd.f32 %v1476, %v1566
      %v1568 = vpop.f32.mrb[0].mxu0
      %1569 = vmatprep.mubr.f32.mxu0 0.0
      %1570 = vmatmul.mubr.f32.gmra.mrb[0].mxu0 %v1488
      %v1571 = vpop.f32.mrb[0].mxu0
      %v1572 = vadd.f32 %v1476, %v1571
      %v1573 = vpop.f32.mrb[0].mxu0
      %1574 = vdwg.mxu0
      %v1575 = vsel %vm1103, %v1557, 0.0
      %1576 = vadd.xlane.f32.xlu0 %v1575
      %v1577 = vpop.xlane.xlu0 %1576
      %v1578 = vsel %vm1103, %v1562, 0.0
      %1579 = vadd.xlane.f32.xlu0 %v1578
      %v1580 = vpop.xlane.xlu0 %1579
      %v1581 = vsel %vm1103, %v1567, 0.0
      %1582 = vadd.xlane.f32.xlu0 %v1581
      %v1583 = vpop.xlane.xlu0 %1582
      %v1584 = vsel %vm1103, %v1572, 0.0
      %1585 = vadd.xlane.f32.xlu0 %v1584
      %v1586 = vpop.xlane.xlu0 %1585
      %v1587 = vmul.f32 %v1577, %v1213
      %v1588 = vmul.f32 %v1580, %v1213
      %v1589 = vmul.f32 %v1583, %v1213
      %v1590 = vmul.f32 %v1586, %v1213
      %v1591 = vsub.f32 %v1557, %v1587
      %v1592 = vsub.f32 %v1562, %v1588
      %v1593 = vsub.f32 %v1567, %v1589
      %v1594 = vsub.f32 %v1572, %v1590
      %v1595 = vmul.f32 %v1591, %v1591
      %v1596 = vmul.f32 %v1592, %v1592
      %v1597 = vmul.f32 %v1593, %v1593
      %v1598 = vmul.f32 %v1594, %v1594
      %v1599 = vsel %vm1103, %v1595, 0.0
      %1600 = vadd.xlane.f32.xlu0 %v1599
      %v1601 = vpop.xlane.xlu0 %1600
      %v1602 = vsel %vm1103, %v1596, 0.0
      %1603 = vadd.xlane.f32.xlu0 %v1602
      %v1604 = vpop.xlane.xlu0 %1603
      %v1605 = vsel %vm1103, %v1597, 0.0
      %1606 = vadd.xlane.f32.xlu0 %v1605
      %v1607 = vpop.xlane.xlu0 %1606
      %v1608 = vsel %vm1103, %v1598, 0.0
      %1609 = vadd.xlane.f32.xlu0 %v1608
      %v1610 = vpop.xlane.xlu0 %1609
      %v1611 = vmul.f32 %v1601, %v1213
      %v1612 = vmul.f32 %v1604, %v1213
      %v1613 = vmul.f32 %v1607, %v1213
      %v1614 = vmul.f32 %v1610, %v1213
      %v1615 = vadd.f32 %v1611, 1e-05
      %v1616 = vadd.f32 %v1612, 1e-05
      %v1617 = vadd.f32 %v1613, 1e-05
      %v1618 = vadd.f32 %v1614, 1e-05
      %v1619 = vrsqrt.pop %v1615
      %v1620 = vrsqrt.pop %v1616
      %v1621 = vrsqrt.pop %v1617
      %v1622 = vrsqrt.pop %v1618
      %v1623 = vmul.f32 %v1591, %v1619
      %v1624 = vmul.f32 %v1592, %v1620
      %v1625 = vmul.f32 %v1593, %v1621
      %v1626 = vmul.f32 %v1594, %v1622
      %v1627 = vmul.f32 %v1623, %v1258
      %v1628 = vmul.f32 %v1624, %v1258
      %v1629 = vmul.f32 %v1625, %v1258
      %v1630 = vmul.f32 %v1626, %v1258
      %v1631 = vadd.f32 %v1627, %v1268
      %v1632 = vadd.f32 %v1628, %v1268
      %v1633 = vadd.f32 %v1629, %v1268
      %v1634 = vadd.f32 %v1630, %v1268
      %v1635 = vld [vmem:[#allocation3] sm:$0xff]
      %v1636 = vld [vmem:[#allocation3 + $0x8] sm:$0xff]
      %v1637 = vld [vmem:[#allocation3 + $0x10] sm:$0xff]
      %v1638 = vld [vmem:[#allocation3 + $0x18] sm:$0xff]
      %v1639 = vadd.f32 %v1635, %v1631
      %v1640 = vadd.f32 %v1636, %v1632
      %v1641 = vadd.f32 %v1637, %v1633
      %v1642 = vadd.f32 %v1638, %v1634
      %1643 = vst.msk [vmem:[#allocation3] sm:$0xff] %vm1103, %v1639
      %1644 = vst.msk [vmem:[#allocation3 + $0x8] sm:$0xff] %vm1103, %v1640
      %1645 = vst.msk [vmem:[#allocation3 + $0x10] sm:$0xff] %vm1103, %v1641
      %1646 = vst.msk [vmem:[#allocation3 + $0x18] sm:$0xff] %vm1103, %v1642
      %v1647 = vld [vmem:[#allocation3] sm:$0xff]
      %v1648 = vld [vmem:[#allocation3 + $0x8] sm:$0xff]
      %v1649 = vld [vmem:[#allocation3 + $0x10] sm:$0xff]
      %v1650 = vld [vmem:[#allocation3 + $0x18] sm:$0xff]
      %v1651 = vmul.f32 %v1647, %v1290
      %v1652 = vmul.f32 %v1648, %v1290
      %v1653 = vmul.f32 %v1649, %v1290
      %v1654 = vmul.f32 %v1650, %v1290
      %v1655 = vld [vmem:[%s1007] sm:$0xff]
      %v1656 = vld [vmem:[%s1007 + $0x8] sm:$0xff]
      %v1657 = vld [vmem:[%s1007 + $0x10] sm:$0xff]
      %v1658 = vld [vmem:[%s1007 + $0x18] sm:$0xff]
      %v1659 = vld [vmem:[%s1010] sm:$0x1]
      %v1661 = vlaneseq
      %v1662 = vshrl.u32 %v1661, 7
      %v1663 = vsub.s32 0, %v1662
      %v1664 = vrot.slane %v1659, %v1663
      %v1667 = vsel %vm1103, %v1651, 0
      %v1670 = vsel %vm1103, %v1652, 0
      %v1673 = vsel %vm1103, %v1653, 0
      %v1676 = vsel %vm1103, %v1654, 0
      %1678 = vmatprep.subr.mxu0 0.0
      %1679 = vmatpush1.msra.mxu0 %v1655
      %1680 = vmatprep.subr.mxu0 0.0
      %1681 = vmatpush1.msra.mxu0 %v1656
      %1682 = vmatprep.subr.mxu0 0.0
      %1683 = vmatpush1.msra.mxu0 %v1657
      %1684 = vmatprep.subr.mxu0 0.0
      %1685 = vmatpush1.msra.mxu0 %v1658
      %1686 = vmatprep.subr.mxu0 0.0
      %1687 = vmatpush1.msra.mxu0 0.0
      %1688 = vmatprep.subr.mxu0 0.0
      %1689 = vmatpush1.msra.mxu0 0.0
      %1690 = vmatprep.subr.mxu0 0.0
      %1691 = vmatpush1.msra.mxu0 0.0
      %1692 = vmatprep.subr.mxu0 0.0
      %1693 = vmatpush1.msra.mxu0 0.0
      %1694 = vmatprep.subr.mxu0 0.0
      %1695 = vmatpush1.msra.mxu0 0.0
      %1696 = vmatprep.subr.mxu0 0.0
      %1697 = vmatpush1.msra.mxu0 0.0
      %1698 = vmatprep.subr.mxu0 0.0
      %1699 = vmatpush1.msra.mxu0 0.0
      %1700 = vmatprep.subr.mxu0 0.0
      %1701 = vmatpush1.msra.mxu0 0.0
      %1702 = vmatprep.subr.mxu0 0.0
      %1703 = vmatpush1.msra.mxu0 0.0
      %1704 = vmatprep.subr.mxu0 0.0
      %1705 = vmatpush1.msra.mxu0 0.0
      %1706 = vmatprep.subr.mxu0 0.0
      %1707 = vmatpush1.msra.mxu0 0.0
      %1708 = vmatprep.subr.mxu0 0.0
      %1709 = vmatpush1.msra.mxu0 0.0
      %1710 = vmatprep.subr.mxu0 0.0
      %1711 = vmatpush1.msra.mxu0 0.0
      %1712 = vmatprep.subr.mxu0 0.0
      %1713 = vmatpush1.msra.mxu0 0.0
      %1714 = vmatprep.subr.mxu0 0.0
      %1715 = vmatpush1.msra.mxu0 0.0
      %1716 = vmatprep.subr.mxu0 0.0
      %1717 = vmatpush1.msra.mxu0 0.0
      %1718 = vmatprep.subr.mxu0 0.0
      %1719 = vmatpush1.msra.mxu0 0.0
      %1720 = vmatprep.subr.mxu0 0.0
      %1721 = vmatpush1.msra.mxu0 0.0
      %1722 = vmatprep.subr.mxu0 0.0
      %1723 = vmatpush1.msra.mxu0 0.0
      %1724 = vmatprep.subr.mxu0 0.0
      %1725 = vmatpush1.msra.mxu0 0.0
      %1726 = vmatprep.subr.mxu0 0.0
      %1727 = vmatpush1.msra.mxu0 0.0
      %1728 = vmatprep.subr.mxu0 0.0
      %1729 = vmatpush1.msra.mxu0 0.0
      %1730 = vmatprep.subr.mxu0 0.0
      %1731 = vmatpush1.msra.mxu0 0.0
      %1732 = vmatprep.subr.mxu0 0.0
      %1733 = vmatpush1.msra.mxu0 0.0
      %1734 = vmatprep.subr.mxu0 0.0
      %1735 = vmatpush1.msra.mxu0 0.0
      %1736 = vmatprep.subr.mxu0 0.0
      %1737 = vmatpush1.msra.mxu0 0.0
      %1738 = vmatprep.subr.mxu0 0.0
      %1739 = vmatpush1.msra.mxu0 0.0
      %1740 = vmatprep.subr.mxu0 0.0
      %1741 = vmatpush1.msra.mxu0 0.0
      %1742 = vmatprep.mubr.f32.mxu0 0.0
      %1743 = vmatmul.mubr.f32.gmra.mrb[0].mxu0 %v1667
      %v1744 = vpop.f32.mrb[0].mxu0
      %v1745 = vadd.f32 %v1664, %v1744
      %v1746 = vpop.f32.mrb[0].mxu0
      %1747 = vmatprep.mubr.f32.mxu0 0.0
      %1748 = vmatmul.mubr.f32.gmra.mrb[0].mxu0 %v1670
      %v1749 = vpop.f32.mrb[0].mxu0
      %v1750 = vadd.f32 %v1664, %v1749
      %v1751 = vpop.f32.mrb[0].mxu0
      %1752 = vmatprep.mubr.f32.mxu0 0.0
      %1753 = vmatmul.mubr.f32.gmra.mrb[0].mxu0 %v1673
      %v1754 = vpop.f32.mrb[0].mxu0
      %v1755 = vadd.f32 %v1664, %v1754
      %v1756 = vpop.f32.mrb[0].mxu0
      %1757 = vmatprep.mubr.f32.mxu0 0.0
      %1758 = vmatmul.mubr.f32.gmra.mrb[0].mxu0 %v1676
      %v1759 = vpop.f32.mrb[0].mxu0
      %v1760 = vadd.f32 %v1664, %v1759
      %v1761 = vpop.f32.mrb[0].mxu0
      %1762 = vdwg.mxu0
      %v1763 = vsel %vm1103, %v1745, 0.0
      %1764 = vadd.xlane.f32.xlu0 %v1763
      %v1765 = vpop.xlane.xlu0 %1764
      %v1766 = vsel %vm1103, %v1750, 0.0
      %1767 = vadd.xlane.f32.xlu0 %v1766
      %v1768 = vpop.xlane.xlu0 %1767
      %v1769 = vsel %vm1103, %v1755, 0.0
      %1770 = vadd.xlane.f32.xlu0 %v1769
      %v1771 = vpop.xlane.xlu0 %1770
      %v1772 = vsel %vm1103, %v1760, 0.0
      %1773 = vadd.xlane.f32.xlu0 %v1772
      %v1774 = vpop.xlane.xlu0 %1773
      %v1775 = vmul.f32 %v1765, %v1213
      %v1776 = vmul.f32 %v1768, %v1213
      %v1777 = vmul.f32 %v1771, %v1213
      %v1778 = vmul.f32 %v1774, %v1213
      %v1779 = vsub.f32 %v1745, %v1775
      %v1780 = vsub.f32 %v1750, %v1776
      %v1781 = vsub.f32 %v1755, %v1777
      %v1782 = vsub.f32 %v1760, %v1778
      %v1783 = vmul.f32 %v1779, %v1779
      %v1784 = vmul.f32 %v1780, %v1780
      %v1785 = vmul.f32 %v1781, %v1781
      %v1786 = vmul.f32 %v1782, %v1782
      %v1787 = vsel %vm1103, %v1783, 0.0
      %1788 = vadd.xlane.f32.xlu0 %v1787
      %v1789 = vpop.xlane.xlu0 %1788
      %v1790 = vsel %vm1103, %v1784, 0.0
      %1791 = vadd.xlane.f32.xlu0 %v1790
      %v1792 = vpop.xlane.xlu0 %1791
      %v1793 = vsel %vm1103, %v1785, 0.0
      %1794 = vadd.xlane.f32.xlu0 %v1793
      %v1795 = vpop.xlane.xlu0 %1794
      %v1796 = vsel %vm1103, %v1786, 0.0
      %1797 = vadd.xlane.f32.xlu0 %v1796
      %v1798 = vpop.xlane.xlu0 %1797
      %v1799 = vmul.f32 %v1789, %v1213
      %v1800 = vmul.f32 %v1792, %v1213
      %v1801 = vmul.f32 %v1795, %v1213
      %v1802 = vmul.f32 %v1798, %v1213
      %v1803 = vadd.f32 %v1799, 1e-05
      %v1804 = vadd.f32 %v1800, 1e-05
      %v1805 = vadd.f32 %v1801, 1e-05
      %v1806 = vadd.f32 %v1802, 1e-05
      %v1807 = vrsqrt.pop %v1803
      %v1808 = vrsqrt.pop %v1804
      %v1809 = vrsqrt.pop %v1805
      %v1810 = vrsqrt.pop %v1806
      %v1811 = vmul.f32 %v1779, %v1807
      %v1812 = vmul.f32 %v1780, %v1808
      %v1813 = vmul.f32 %v1781, %v1809
      %v1814 = vmul.f32 %v1782, %v1810
      %v1815 = vmul.f32 %v1811, %v1258
      %v1816 = vmul.f32 %v1812, %v1258
      %v1817 = vmul.f32 %v1813, %v1258
      %v1818 = vmul.f32 %v1814, %v1258
      %v1819 = vadd.f32 %v1815, %v1268
      %v1820 = vadd.f32 %v1816, %v1268
      %v1821 = vadd.f32 %v1817, %v1268
      %v1822 = vadd.f32 %v1818, %v1268
      %v1823 = vld [vmem:[%s1021] sm:$0xff]
      %v1824 = vld [vmem:[%s1021 + $0x8] sm:$0xff]
      %v1825 = vld [vmem:[%s1021 + $0x10] sm:$0xff]
      %v1826 = vld [vmem:[%s1021 + $0x18] sm:$0xff]
      %v1827 = vld [vmem:[%s1021 + $0x20] sm:$0xff]
      %v1828 = vld [vmem:[%s1021 + $0x28] sm:$0xff]
      %v1829 = vld [vmem:[%s1021 + $0x30] sm:$0xff]
      %v1830 = vld [vmem:[%s1021 + $0x38] sm:$0xff]
      %v1831 = vld [vmem:[%s1025] sm:$0x3]
      %v1833 = vlaneseq
      %v1834 = vshrl.u32 %v1833, 7
      %v1835 = vsub.s32 0, %v1834
      %v1836 = vrot.slane %v1831, %v1835
      %v1837 = vlaneseq
      %v1838 = vshrl.u32 %v1837, 7
      %v1839 = vsub.s32 1, %v1838
      %v1840 = vrot.slane %v1831, %v1839
      %v1844 = vsel %vm1103, %v1459, 0
      %v1847 = vsel %vm1103, %v1460, 0
      %v1850 = vsel %vm1103, %v1461, 0
      %v1853 = vsel %vm1103, %v1462, 0
      %1855 = vmatprep.subr.mxu0 %v1824
      %1856 = vmatpush1.msra.mxu0 %v1823
      %1857 = vmatprep.subr.mxu0 %v1826
      %1858 = vmatpush1.msra.mxu0 %v1825
      %1859 = vmatprep.subr.mxu0 %v1828
      %1860 = vmatpush1.msra.mxu0 %v1827
      %1861 = vmatprep.subr.mxu0 %v1830
      %1862 = vmatpush1.msra.mxu0 %v1829
      %1863 = vmatprep.subr.mxu0 0.0
      %1864 = vmatpush1.msra.mxu0 0.0
      %1865 = vmatprep.subr.mxu0 0.0
      %1866 = vmatpush1.msra.mxu0 0.0
      %1867 = vmatprep.subr.mxu0 0.0
      %1868 = vmatpush1.msra.mxu0 0.0
      %1869 = vmatprep.subr.mxu0 0.0
      %1870 = vmatpush1.msra.mxu0 0.0
      %1871 = vmatprep.subr.mxu0 0.0
      %1872 = vmatpush1.msra.mxu0 0.0
      %1873 = vmatprep.subr.mxu0 0.0
      %1874 = vmatpush1.msra.mxu0 0.0
      %1875 = vmatprep.subr.mxu0 0.0
      %1876 = vmatpush1.msra.mxu0 0.0
      %1877 = vmatprep.subr.mxu0 0.0
      %1878 = vmatpush1.msra.mxu0 0.0
      %1879 = vmatprep.subr.mxu0 0.0
      %1880 = vmatpush1.msra.mxu0 0.0
      %1881 = vmatprep.subr.mxu0 0.0
      %1882 = vmatpush1.msra.mxu0 0.0
      %1883 = vmatprep.subr.mxu0 0.0
      %1884 = vmatpush1.msra.mxu0 0.0
      %1885 = vmatprep.subr.mxu0 0.0
      %1886 = vmatpush1.msra.mxu0 0.0
      %1887 = vmatprep.subr.mxu0 0.0
      %1888 = vmatpush1.msra.mxu0 0.0
      %1889 = vmatprep.subr.mxu0 0.0
      %1890 = vmatpush1.msra.mxu0 0.0
      %1891 = vmatprep.subr.mxu0 0.0
      %1892 = vmatpush1.msra.mxu0 0.0
      %1893 = vmatprep.subr.mxu0 0.0
      %1894 = vmatpush1.msra.mxu0 0.0
      %1895 = vmatprep.subr.mxu0 0.0
      %1896 = vmatpush1.msra.mxu0 0.0
      %1897 = vmatprep.subr.mxu0 0.0
      %1898 = vmatpush1.msra.mxu0 0.0
      %1899 = vmatprep.subr.mxu0 0.0
      %1900 = vmatpush1.msra.mxu0 0.0
      %1901 = vmatprep.subr.mxu0 0.0
      %1902 = vmatpush1.msra.mxu0 0.0
      %1903 = vmatprep.subr.mxu0 0.0
      %1904 = vmatpush1.msra.mxu0 0.0
      %1905 = vmatprep.subr.mxu0 0.0
      %1906 = vmatpush1.msra.mxu0 0.0
      %1907 = vmatprep.subr.mxu0 0.0
      %1908 = vmatpush1.msra.mxu0 0.0
      %1909 = vmatprep.subr.mxu0 0.0
      %1910 = vmatpush1.msra.mxu0 0.0
      %1911 = vmatprep.subr.mxu0 0.0
      %1912 = vmatpush1.msra.mxu0 0.0
      %1913 = vmatprep.subr.mxu0 0.0
      %1914 = vmatpush1.msra.mxu0 0.0
      %1915 = vmatprep.subr.mxu0 0.0
      %1916 = vmatpush1.msra.mxu0 0.0
      %1917 = vmatprep.subr.mxu0 0.0
      %1918 = vmatpush1.msra.mxu0 0.0
      %1919 = vmatprep.mubr.f32.mxu0 0.0
      %1920 = vmatmul.mubr.f32.gmra.mrb[0].mxu0 %v1844
      %v1921 = vpop.f32.mrb[0].mxu0
      %v1922 = vadd.f32 %v1836, %v1921
      %v1923 = vpop.f32.mrb[0].mxu0
      %v1924 = vadd.f32 %v1840, %v1923
      %1925 = vmatprep.mubr.f32.mxu0 0.0
      %1926 = vmatmul.mubr.f32.gmra.mrb[0].mxu0 %v1847
      %v1927 = vpop.f32.mrb[0].mxu0
      %v1928 = vadd.f32 %v1836, %v1927
      %v1929 = vpop.f32.mrb[0].mxu0
      %v1930 = vadd.f32 %v1840, %v1929
      %1931 = vmatprep.mubr.f32.mxu0 0.0
      %1932 = vmatmul.mubr.f32.gmra.mrb[0].mxu0 %v1850
      %v1933 = vpop.f32.mrb[0].mxu0
      %v1934 = vadd.f32 %v1836, %v1933
      %v1935 = vpop.f32.mrb[0].mxu0
      %v1936 = vadd.f32 %v1840, %v1935
      %1937 = vmatprep.mubr.f32.mxu0 0.0
      %1938 = vmatmul.mubr.f32.gmra.mrb[0].mxu0 %v1853
      %v1939 = vpop.f32.mrb[0].mxu0
      %v1940 = vadd.f32 %v1836, %v1939
      %v1941 = vpop.f32.mrb[0].mxu0
      %v1942 = vadd.f32 %v1840, %v1941
      %1943 = vdwg.mxu0
      %v1944 = vadd.f32 %v1922, %v1928
      %v1945 = vadd.f32 %v1944, %v1934
      %v1946 = vadd.f32 %v1945, %v1940
      %v1947 = vrot.slane %v1946, 4
      %v1948 = vadd.f32 %v1946, %v1947
      %v1949 = vrot.slane %v1948, 2
      %v1950 = vadd.f32 %v1948, %v1949
      %v1951 = vrot.slane %v1950, 1
      %v1952 = vadd.f32 %v1950, %v1951
      %v1953 = vadd.f32 %v1924, %v1930
      %v1954 = vadd.f32 %v1953, %v1936
      %v1955 = vadd.f32 %v1954, %v1942
      %v1956 = vrot.slane %v1955, 4
      %v1957 = vadd.f32 %v1955, %v1956
      %v1958 = vrot.slane %v1957, 2
      %v1959 = vadd.f32 %v1957, %v1958
      %v1960 = vrot.slane %v1959, 1
      %v1961 = vadd.f32 %v1959, %v1960
      %v1962 = vmul.f32 %v1952, %v1213
      %v1963 = vmul.f32 %v1961, %v1213
      %v1964 = vsub.f32 %v1922, %v1962
      %v1965 = vsub.f32 %v1924, %v1963
      %v1966 = vsub.f32 %v1928, %v1962
      %v1967 = vsub.f32 %v1930, %v1963
      %v1968 = vsub.f32 %v1934, %v1962
      %v1969 = vsub.f32 %v1936, %v1963
      %v1970 = vsub.f32 %v1940, %v1962
      %v1971 = vsub.f32 %v1942, %v1963
      %v1972 = vmul.f32 %v1964, %v1964
      %v1973 = vmul.f32 %v1965, %v1965
      %v1974 = vmul.f32 %v1966, %v1966
      %v1975 = vmul.f32 %v1967, %v1967
      %v1976 = vmul.f32 %v1968, %v1968
      %v1977 = vmul.f32 %v1969, %v1969
      %v1978 = vmul.f32 %v1970, %v1970
      %v1979 = vmul.f32 %v1971, %v1971
      %v1980 = vadd.f32 %v1972, %v1974
      %v1981 = vadd.f32 %v1980, %v1976
      %v1982 = vadd.f32 %v1981, %v1978
      %v1983 = vrot.slane %v1982, 4
      %v1984 = vadd.f32 %v1982, %v1983
      %v1985 = vrot.slane %v1984, 2
      %v1986 = vadd.f32 %v1984, %v1985
      %v1987 = vrot.slane %v1986, 1
      %v1988 = vadd.f32 %v1986, %v1987
      %v1989 = vadd.f32 %v1973, %v1975
      %v1990 = vadd.f32 %v1989, %v1977
      %v1991 = vadd.f32 %v1990, %v1979
      %v1992 = vrot.slane %v1991, 4
      %v1993 = vadd.f32 %v1991, %v1992
      %v1994 = vrot.slane %v1993, 2
      %v1995 = vadd.f32 %v1993, %v1994
      %v1996 = vrot.slane %v1995, 1
      %v1997 = vadd.f32 %v1995, %v1996
      %v1998 = vmul.f32 %v1988, %v1213
      %v1999 = vmul.f32 %v1997, %v1213
      %v2000 = vadd.f32 %v1998, 1e-05
      %v2001 = vadd.f32 %v1999, 1e-05
      %v2002 = vrsqrt.pop %v2000
      %v2003 = vrsqrt.pop %v2001
      %v2004 = vmul.f32 %v1964, %v2002
      %v2005 = vmul.f32 %v1965, %v2003
      %v2006 = vmul.f32 %v1966, %v2002
      %v2007 = vmul.f32 %v1967, %v2003
      %v2008 = vmul.f32 %v1968, %v2002
      %v2009 = vmul.f32 %v1969, %v2003
      %v2010 = vmul.f32 %v1970, %v2002
      %v2011 = vmul.f32 %v1971, %v2003
      %v2012 = vld [vmem:[%s1029] sm:$0x3]
      %v2014 = vlaneseq
      %v2015 = vshrl.u32 %v2014, 7
      %v2016 = vsub.s32 0, %v2015
      %v2017 = vrot.slane %v2012, %v2016
      %v2018 = vlaneseq
      %v2019 = vshrl.u32 %v2018, 7
      %v2020 = vsub.s32 1, %v2019
      %v2021 = vrot.slane %v2012, %v2020
      %v2024 = vmul.f32 %v2004, %v2017
      %v2025 = vmul.f32 %v2005, %v2021
      %v2026 = vmul.f32 %v2006, %v2017
      %v2027 = vmul.f32 %v2007, %v2021
      %v2028 = vmul.f32 %v2008, %v2017
      %v2029 = vmul.f32 %v2009, %v2021
      %v2030 = vmul.f32 %v2010, %v2017
      %v2031 = vmul.f32 %v2011, %v2021
      %v2032 = vld [vmem:[%s1033] sm:$0x3]
      %v2034 = vlaneseq
      %v2035 = vshrl.u32 %v2034, 7
      %v2036 = vsub.s32 0, %v2035
      %v2037 = vrot.slane %v2032, %v2036
      %v2038 = vlaneseq
      %v2039 = vshrl.u32 %v2038, 7
      %v2040 = vsub.s32 1, %v2039
      %v2041 = vrot.slane %v2032, %v2040
      %v2044 = vadd.f32 %v2024, %v2037
      %v2045 = vadd.f32 %v2025, %v2041
      %v2046 = vadd.f32 %v2026, %v2037
      %v2047 = vadd.f32 %v2027, %v2041
      %v2048 = vadd.f32 %v2028, %v2037
      %v2049 = vadd.f32 %v2029, %v2041
      %v2050 = vadd.f32 %v2030, %v2037
      %v2051 = vadd.f32 %v2031, %v2041
      %vm2052 = vcmp.gt.f32.partialorder %v2044, 0.0
      %vm2053 = vcmp.gt.f32.partialorder %v2045, 0.0
      %vm2054 = vcmp.gt.f32.partialorder %v2046, 0.0
      %vm2055 = vcmp.gt.f32.partialorder %v2047, 0.0
      %vm2056 = vcmp.gt.f32.partialorder %v2048, 0.0
      %vm2057 = vcmp.gt.f32.partialorder %v2049, 0.0
      %vm2058 = vcmp.gt.f32.partialorder %v2050, 0.0
      %vm2059 = vcmp.gt.f32.partialorder %v2051, 0.0
      %v2060 = vmul.f32 %v2044, 0.01
      %v2061 = vmul.f32 %v2045, 0.01
      %v2062 = vmul.f32 %v2046, 0.01
      %v2063 = vmul.f32 %v2047, 0.01
      %v2064 = vmul.f32 %v2048, 0.01
      %v2065 = vmul.f32 %v2049, 0.01
      %v2066 = vmul.f32 %v2050, 0.01
      %v2067 = vmul.f32 %v2051, 0.01
      %v2068 = vsel %vm2052, %v2044, %v2060
      %v2069 = vsel %vm2053, %v2045, %v2061
      %v2070 = vsel %vm2054, %v2046, %v2062
      %v2071 = vsel %vm2055, %v2047, %v2063
      %v2072 = vsel %vm2056, %v2048, %v2064
      %v2073 = vsel %vm2057, %v2049, %v2065
      %v2074 = vsel %vm2058, %v2050, %v2066
      %v2075 = vsel %vm2059, %v2051, %v2067
      %v2076 = vld [vmem:[%s1038] sm:$0xff]
      %v2077 = vld [vmem:[%s1038 + $0x8] sm:$0xff]
      %v2078 = vld [vmem:[%s1038 + $0x10] sm:$0xff]
      %v2079 = vld [vmem:[%s1038 + $0x18] sm:$0xff]
      %v2080 = vld [vmem:[%s1038 + $0x20] sm:$0xff]
      %v2081 = vld [vmem:[%s1038 + $0x28] sm:$0xff]
      %v2082 = vld [vmem:[%s1038 + $0x30] sm:$0xff]
      %v2083 = vld [vmem:[%s1038 + $0x38] sm:$0xff]
      %v2084 = vld [vmem:[%s1038 + $0x40] sm:$0xff]
      %v2085 = vld [vmem:[%s1038 + $0x48] sm:$0xff]
      %v2086 = vld [vmem:[%s1038 + $0x50] sm:$0xff]
      %v2087 = vld [vmem:[%s1038 + $0x58] sm:$0xff]
      %v2088 = vld [vmem:[%s1038 + $0x60] sm:$0xff]
      %v2089 = vld [vmem:[%s1038 + $0x68] sm:$0xff]
      %v2090 = vld [vmem:[%s1038 + $0x70] sm:$0xff]
      %v2091 = vld [vmem:[%s1038 + $0x78] sm:$0xff]
      %v2092 = vld [vmem:[%s1038 + $0x80] sm:$0xff]
      %v2093 = vld [vmem:[%s1038 + $0x88] sm:$0xff]
      %v2094 = vld [vmem:[%s1038 + $0x90] sm:$0xff]
      %v2095 = vld [vmem:[%s1038 + $0x98] sm:$0xff]
      %v2096 = vld [vmem:[%s1038 + $0xa0] sm:$0xff]
      %v2097 = vld [vmem:[%s1038 + $0xa8] sm:$0xff]
      %v2098 = vld [vmem:[%s1038 + $0xb0] sm:$0xff]
      %v2099 = vld [vmem:[%s1038 + $0xb8] sm:$0xff]
      %v2100 = vld [vmem:[%s1038 + $0xc0] sm:$0xff]
      %v2101 = vld [vmem:[%s1038 + $0xc8] sm:$0xff]
      %v2102 = vld [vmem:[%s1038 + $0xd0] sm:$0xff]
      %v2103 = vld [vmem:[%s1038 + $0xd8] sm:$0xff]
      %v2104 = vld [vmem:[%s1038 + $0xe0] sm:$0xff]
      %v2105 = vld [vmem:[%s1038 + $0xe8] sm:$0xff]
      %v2106 = vld [vmem:[%s1038 + $0xf0] sm:$0xff]
      %v2107 = vld [vmem:[%s1038 + $0xf8] sm:$0xff]
      %v2108 = vld [vmem:[%s1042] sm:$0x1]
      %v2110 = vlaneseq
      %v2111 = vshrl.u32 %v2110, 7
      %v2112 = vsub.s32 0, %v2111
      %v2113 = vrot.slane %v2108, %v2112
      %2115 = vmatprep.subr.mxu0 0.0
      %2116 = vmatpush1.msra.mxu0 %v2076
      %2117 = vmatprep.subr.mxu0 0.0
      %2118 = vmatpush1.msra.mxu0 %v2077
      %2119 = vmatprep.subr.mxu0 0.0
      %2120 = vmatpush1.msra.mxu0 %v2078
      %2121 = vmatprep.subr.mxu0 0.0
      %2122 = vmatpush1.msra.mxu0 %v2079
      %2123 = vmatprep.subr.mxu0 0.0
      %2124 = vmatpush1.msra.mxu0 %v2080
      %2125 = vmatprep.subr.mxu0 0.0
      %2126 = vmatpush1.msra.mxu0 %v2081
      %2127 = vmatprep.subr.mxu0 0.0
      %2128 = vmatpush1.msra.mxu0 %v2082
      %2129 = vmatprep.subr.mxu0 0.0
      %2130 = vmatpush1.msra.mxu0 %v2083
      %2131 = vmatprep.subr.mxu0 0.0
      %2132 = vmatpush1.msra.mxu0 %v2084
      %2133 = vmatprep.subr.mxu0 0.0
      %2134 = vmatpush1.msra.mxu0 %v2085
      %2135 = vmatprep.subr.mxu0 0.0
      %2136 = vmatpush1.msra.mxu0 %v2086
      %2137 = vmatprep.subr.mxu0 0.0
      %2138 = vmatpush1.msra.mxu0 %v2087
      %2139 = vmatprep.subr.mxu0 0.0
      %2140 = vmatpush1.msra.mxu0 %v2088
      %2141 = vmatprep.subr.mxu0 0.0
      %2142 = vmatpush1.msra.mxu0 %v2089
      %2143 = vmatprep.subr.mxu0 0.0
      %2144 = vmatpush1.msra.mxu0 %v2090
      %2145 = vmatprep.subr.mxu0 0.0
      %2146 = vmatpush1.msra.mxu0 %v2091
      %2147 = vmatprep.subr.mxu0 0.0
      %2148 = vmatpush1.msra.mxu0 %v2092
      %2149 = vmatprep.subr.mxu0 0.0
      %2150 = vmatpush1.msra.mxu0 %v2093
      %2151 = vmatprep.subr.mxu0 0.0
      %2152 = vmatpush1.msra.mxu0 %v2094
      %2153 = vmatprep.subr.mxu0 0.0
      %2154 = vmatpush1.msra.mxu0 %v2095
      %2155 = vmatprep.subr.mxu0 0.0
      %2156 = vmatpush1.msra.mxu0 %v2096
      %2157 = vmatprep.subr.mxu0 0.0
      %2158 = vmatpush1.msra.mxu0 %v2097
      %2159 = vmatprep.subr.mxu0 0.0
      %2160 = vmatpush1.msra.mxu0 %v2098
      %2161 = vmatprep.subr.mxu0 0.0
      %2162 = vmatpush1.msra.mxu0 %v2099
      %2163 = vmatprep.subr.mxu0 0.0
      %2164 = vmatpush1.msra.mxu0 %v2100
      %2165 = vmatprep.subr.mxu0 0.0
      %2166 = vmatpush1.msra.mxu0 %v2101
      %2167 = vmatprep.subr.mxu0 0.0
      %2168 = vmatpush1.msra.mxu0 %v2102
      %2169 = vmatprep.subr.mxu0 0.0
      %2170 = vmatpush1.msra.mxu0 %v2103
      %2171 = vmatprep.subr.mxu0 0.0
      %2172 = vmatpush1.msra.mxu0 %v2104
      %2173 = vmatprep.subr.mxu0 0.0
      %2174 = vmatpush1.msra.mxu0 %v2105
      %2175 = vmatprep.subr.mxu0 0.0
      %2176 = vmatpush1.msra.mxu0 %v2106
      %2177 = vmatprep.subr.mxu0 0.0
      %2178 = vmatpush1.msra.mxu0 %v2107
      %2179 = vmatprep.mubr.f32.mxu0 %v2069
      %2180 = vmatmul.mubr.f32.gmra.mrb[0].mxu0 %v2068
      %v2181 = vpop.f32.mrb[0].mxu0
      %v2182 = vadd.f32 %v2113, %v2181
      %v2183 = vpop.f32.mrb[0].mxu0
      %2184 = vmatprep.mubr.f32.mxu0 %v2071
      %2185 = vmatmul.mubr.f32.gmra.mrb[0].mxu0 %v2070
      %v2186 = vpop.f32.mrb[0].mxu0
      %v2187 = vadd.f32 %v2113, %v2186
      %v2188 = vpop.f32.mrb[0].mxu0
      %2189 = vmatprep.mubr.f32.mxu0 %v2073
      %2190 = vmatmul.mubr.f32.gmra.mrb[0].mxu0 %v2072
      %v2191 = vpop.f32.mrb[0].mxu0
      %v2192 = vadd.f32 %v2113, %v2191
      %v2193 = vpop.f32.mrb[0].mxu0
      %2194 = vmatprep.mubr.f32.mxu0 %v2075
      %2195 = vmatmul.mubr.f32.gmra.mrb[0].mxu0 %v2074
      %v2196 = vpop.f32.mrb[0].mxu0
      %v2197 = vadd.f32 %v2113, %v2196
      %v2198 = vpop.f32.mrb[0].mxu0
      %2199 = vdwg.mxu0
      %s2200 = scalar_lea.vmem %s1021, 64
      %v2201 = vld [vmem:[%s2200] sm:$0xff]
      %v2202 = vld [vmem:[%s2200 + $0x8] sm:$0xff]
      %v2203 = vld [vmem:[%s2200 + $0x10] sm:$0xff]
      %v2204 = vld [vmem:[%s2200 + $0x18] sm:$0xff]
      %v2205 = vld [vmem:[%s2200 + $0x20] sm:$0xff]
      %v2206 = vld [vmem:[%s2200 + $0x28] sm:$0xff]
      %v2207 = vld [vmem:[%s2200 + $0x30] sm:$0xff]
      %v2208 = vld [vmem:[%s2200 + $0x38] sm:$0xff]
      %s2209 = scalar_lea.vmem %s1025, 2
      %v2210 = vld [vmem:[%s2209] sm:$0x3]
      %v2212 = vlaneseq
      %v2213 = vshrl.u32 %v2212, 7
      %v2214 = vsub.s32 0, %v2213
      %v2215 = vrot.slane %v2210, %v2214
      %v2216 = vlaneseq
      %v2217 = vshrl.u32 %v2216, 7
      %v2218 = vsub.s32 1, %v2217
      %v2219 = vrot.slane %v2210, %v2218
      %v2223 = vsel %vm1103, %v2182, 0
      %v2226 = vsel %vm1103, %v2187, 0
      %v2229 = vsel %vm1103, %v2192, 0
      %v2232 = vsel %vm1103, %v2197, 0
      %2234 = vmatprep.subr.mxu0 %v2202
      %2235 = vmatpush1.msra.mxu0 %v2201
      %2236 = vmatprep.subr.mxu0 %v2204
      %2237 = vmatpush1.msra.mxu0 %v2203
      %2238 = vmatprep.subr.mxu0 %v2206
      %2239 = vmatpush1.msra.mxu0 %v2205
      %2240 = vmatprep.subr.mxu0 %v2208
      %2241 = vmatpush1.msra.mxu0 %v2207
      %2242 = vmatprep.subr.mxu0 0.0
      %2243 = vmatpush1.msra.mxu0 0.0
      %2244 = vmatprep.subr.mxu0 0.0
      %2245 = vmatpush1.msra.mxu0 0.0
      %2246 = vmatprep.subr.mxu0 0.0
      %2247 = vmatpush1.msra.mxu0 0.0
      %2248 = vmatprep.subr.mxu0 0.0
      %2249 = vmatpush1.msra.mxu0 0.0
      %2250 = vmatprep.subr.mxu0 0.0
      %2251 = vmatpush1.msra.mxu0 0.0
      %2252 = vmatprep.subr.mxu0 0.0
      %2253 = vmatpush1.msra.mxu0 0.0
      %2254 = vmatprep.subr.mxu0 0.0
      %2255 = vmatpush1.msra.mxu0 0.0
      %2256 = vmatprep.subr.mxu0 0.0
      %2257 = vmatpush1.msra.mxu0 0.0
      %2258 = vmatprep.subr.mxu0 0.0
      %2259 = vmatpush1.msra.mxu0 0.0
      %2260 = vmatprep.subr.mxu0 0.0
      %2261 = vmatpush1.msra.mxu0 0.0
      %2262 = vmatprep.subr.mxu0 0.0
      %2263 = vmatpush1.msra.mxu0 0.0
      %2264 = vmatprep.subr.mxu0 0.0
      %2265 = vmatpush1.msra.mxu0 0.0
      %2266 = vmatprep.subr.mxu0 0.0
      %2267 = vmatpush1.msra.mxu0 0.0
      %2268 = vmatprep.subr.mxu0 0.0
      %2269 = vmatpush1.msra.mxu0 0.0
      %2270 = vmatprep.subr.mxu0 0.0
      %2271 = vmatpush1.msra.mxu0 0.0
      %2272 = vmatprep.subr.mxu0 0.0
      %2273 = vmatpush1.msra.mxu0 0.0
      %2274 = vmatprep.subr.mxu0 0.0
      %2275 = vmatpush1.msra.mxu0 0.0
      %2276 = vmatprep.subr.mxu0 0.0
      %2277 = vmatpush1.msra.mxu0 0.0
      %2278 = vmatprep.subr.mxu0 0.0
      %2279 = vmatpush1.msra.mxu0 0.0
      %2280 = vmatprep.subr.mxu0 0.0
      %2281 = vmatpush1.msra.mxu0 0.0
      %2282 = vmatprep.subr.mxu0 0.0
      %2283 = vmatpush1.msra.mxu0 0.0
      %2284 = vmatprep.subr.mxu0 0.0
      %2285 = vmatpush1.msra.mxu0 0.0
      %2286 = vmatprep.subr.mxu0 0.0
      %2287 = vmatpush1.msra.mxu0 0.0
      %2288 = vmatprep.subr.mxu0 0.0
      %2289 = vmatpush1.msra.mxu0 0.0
      %2290 = vmatprep.subr.mxu0 0.0
      %2291 = vmatpush1.msra.mxu0 0.0
      %2292 = vmatprep.subr.mxu0 0.0
      %2293 = vmatpush1.msra.mxu0 0.0
      %2294 = vmatprep.subr.mxu0 0.0
      %2295 = vmatpush1.msra.mxu0 0.0
      %2296 = vmatprep.subr.mxu0 0.0
      %2297 = vmatpush1.msra.mxu0 0.0
      %2298 = vmatprep.mubr.f32.mxu0 0.0
      %2299 = vmatmul.mubr.f32.gmra.mrb[0].mxu0 %v2223
      %v2300 = vpop.f32.mrb[0].mxu0
      %v2301 = vadd.f32 %v2215, %v2300
      %v2302 = vpop.f32.mrb[0].mxu0
      %v2303 = vadd.f32 %v2219, %v2302
      %2304 = vmatprep.mubr.f32.mxu0 0.0
      %2305 = vmatmul.mubr.f32.gmra.mrb[0].mxu0 %v2226
      %v2306 = vpop.f32.mrb[0].mxu0
      %v2307 = vadd.f32 %v2215, %v2306
      %v2308 = vpop.f32.mrb[0].mxu0
      %v2309 = vadd.f32 %v2219, %v2308
      %2310 = vmatprep.mubr.f32.mxu0 0.0
      %2311 = vmatmul.mubr.f32.gmra.mrb[0].mxu0 %v2229
      %v2312 = vpop.f32.mrb[0].mxu0
      %v2313 = vadd.f32 %v2215, %v2312
      %v2314 = vpop.f32.mrb[0].mxu0
      %v2315 = vadd.f32 %v2219, %v2314
      %2316 = vmatprep.mubr.f32.mxu0 0.0
      %2317 = vmatmul.mubr.f32.gmra.mrb[0].mxu0 %v2232
      %v2318 = vpop.f32.mrb[0].mxu0
      %v2319 = vadd.f32 %v2215, %v2318
      %v2320 = vpop.f32.mrb[0].mxu0
      %v2321 = vadd.f32 %v2219, %v2320
      %2322 = vdwg.mxu0
      %v2323 = vadd.f32 %v2301, %v2307
      %v2324 = vadd.f32 %v2323, %v2313
      %v2325 = vadd.f32 %v2324, %v2319
      %v2326 = vrot.slane %v2325, 4
      %v2327 = vadd.f32 %v2325, %v2326
      %v2328 = vrot.slane %v2327, 2
      %v2329 = vadd.f32 %v2327, %v2328
      %v2330 = vrot.slane %v2329, 1
      %v2331 = vadd.f32 %v2329, %v2330
      %v2332 = vadd.f32 %v2303, %v2309
      %v2333 = vadd.f32 %v2332, %v2315
      %v2334 = vadd.f32 %v2333, %v2321
      %v2335 = vrot.slane %v2334, 4
      %v2336 = vadd.f32 %v2334, %v2335
      %v2337 = vrot.slane %v2336, 2
      %v2338 = vadd.f32 %v2336, %v2337
      %v2339 = vrot.slane %v2338, 1
      %v2340 = vadd.f32 %v2338, %v2339
      %v2341 = vmul.f32 %v2331, %v1213
      %v2342 = vmul.f32 %v2340, %v1213
      %v2343 = vsub.f32 %v2301, %v2341
      %v2344 = vsub.f32 %v2303, %v2342
      %v2345 = vsub.f32 %v2307, %v2341
      %v2346 = vsub.f32 %v2309, %v2342
      %v2347 = vsub.f32 %v2313, %v2341
      %v2348 = vsub.f32 %v2315, %v2342
      %v2349 = vsub.f32 %v2319, %v2341
      %v2350 = vsub.f32 %v2321, %v2342
      %v2351 = vmul.f32 %v2343, %v2343
      %v2352 = vmul.f32 %v2344, %v2344
      %v2353 = vmul.f32 %v2345, %v2345
      %v2354 = vmul.f32 %v2346, %v2346
      %v2355 = vmul.f32 %v2347, %v2347
      %v2356 = vmul.f32 %v2348, %v2348
      %v2357 = vmul.f32 %v2349, %v2349
      %v2358 = vmul.f32 %v2350, %v2350
      %v2359 = vadd.f32 %v2351, %v2353
      %v2360 = vadd.f32 %v2359, %v2355
      %v2361 = vadd.f32 %v2360, %v2357
      %v2362 = vrot.slane %v2361, 4
      %v2363 = vadd.f32 %v2361, %v2362
      %v2364 = vrot.slane %v2363, 2
      %v2365 = vadd.f32 %v2363, %v2364
      %v2366 = vrot.slane %v2365, 1
      %v2367 = vadd.f32 %v2365, %v2366
      %v2368 = vadd.f32 %v2352, %v2354
      %v2369 = vadd.f32 %v2368, %v2356
      %v2370 = vadd.f32 %v2369, %v2358
      %v2371 = vrot.slane %v2370, 4
      %v2372 = vadd.f32 %v2370, %v2371
      %v2373 = vrot.slane %v2372, 2
      %v2374 = vadd.f32 %v2372, %v2373
      %v2375 = vrot.slane %v2374, 1
      %v2376 = vadd.f32 %v2374, %v2375
      %v2377 = vmul.f32 %v2367, %v1213
      %v2378 = vmul.f32 %v2376, %v1213
      %v2379 = vadd.f32 %v2377, 1e-05
      %v2380 = vadd.f32 %v2378, 1e-05
      %v2381 = vrsqrt.pop %v2379
      %v2382 = vrsqrt.pop %v2380
      %v2383 = vmul.f32 %v2343, %v2381
      %v2384 = vmul.f32 %v2344, %v2382
      %v2385 = vmul.f32 %v2345, %v2381
      %v2386 = vmul.f32 %v2346, %v2382
      %v2387 = vmul.f32 %v2347, %v2381
      %v2388 = vmul.f32 %v2348, %v2382
      %v2389 = vmul.f32 %v2349, %v2381
      %v2390 = vmul.f32 %v2350, %v2382
      %s2391 = scalar_lea.vmem %s1029, 2
      %v2392 = vld [vmem:[%s2391] sm:$0x3]
      %v2394 = vlaneseq
      %v2395 = vshrl.u32 %v2394, 7
      %v2396 = vsub.s32 0, %v2395
      %v2397 = vrot.slane %v2392, %v2396
      %v2398 = vlaneseq
      %v2399 = vshrl.u32 %v2398, 7
      %v2400 = vsub.s32 1, %v2399
      %v2401 = vrot.slane %v2392, %v2400
      %v2404 = vmul.f32 %v2383, %v2397
      %v2405 = vmul.f32 %v2384, %v2401
      %v2406 = vmul.f32 %v2385, %v2397
      %v2407 = vmul.f32 %v2386, %v2401
      %v2408 = vmul.f32 %v2387, %v2397
      %v2409 = vmul.f32 %v2388, %v2401
      %v2410 = vmul.f32 %v2389, %v2397
      %v2411 = vmul.f32 %v2390, %v2401
      %s2412 = scalar_lea.vmem %s1033, 2
      %v2413 = vld [vmem:[%s2412] sm:$0x3]
      %v2415 = vlaneseq
      %v2416 = vshrl.u32 %v2415, 7
      %v2417 = vsub.s32 0, %v2416
      %v2418 = vrot.slane %v2413, %v2417
      %v2419 = vlaneseq
      %v2420 = vshrl.u32 %v2419, 7
      %v2421 = vsub.s32 1, %v2420
      %v2422 = vrot.slane %v2413, %v2421
      %v2425 = vadd.f32 %v2404, %v2418
      %v2426 = vadd.f32 %v2405, %v2422
      %v2427 = vadd.f32 %v2406, %v2418
      %v2428 = vadd.f32 %v2407, %v2422
      %v2429 = vadd.f32 %v2408, %v2418
      %v2430 = vadd.f32 %v2409, %v2422
      %v2431 = vadd.f32 %v2410, %v2418
      %v2432 = vadd.f32 %v2411, %v2422
      %vm2433 = vcmp.gt.f32.partialorder %v2425, 0.0
      %vm2434 = vcmp.gt.f32.partialorder %v2426, 0.0
      %vm2435 = vcmp.gt.f32.partialorder %v2427, 0.0
      %vm2436 = vcmp.gt.f32.partialorder %v2428, 0.0
      %vm2437 = vcmp.gt.f32.partialorder %v2429, 0.0
      %vm2438 = vcmp.gt.f32.partialorder %v2430, 0.0
      %vm2439 = vcmp.gt.f32.partialorder %v2431, 0.0
      %vm2440 = vcmp.gt.f32.partialorder %v2432, 0.0
      %v2441 = vmul.f32 %v2425, 0.01
      %v2442 = vmul.f32 %v2426, 0.01
      %v2443 = vmul.f32 %v2427, 0.01
      %v2444 = vmul.f32 %v2428, 0.01
      %v2445 = vmul.f32 %v2429, 0.01
      %v2446 = vmul.f32 %v2430, 0.01
      %v2447 = vmul.f32 %v2431, 0.01
      %v2448 = vmul.f32 %v2432, 0.01
      %v2449 = vsel %vm2433, %v2425, %v2441
      %v2450 = vsel %vm2434, %v2426, %v2442
      %v2451 = vsel %vm2435, %v2427, %v2443
      %v2452 = vsel %vm2436, %v2428, %v2444
      %v2453 = vsel %vm2437, %v2429, %v2445
      %v2454 = vsel %vm2438, %v2430, %v2446
      %v2455 = vsel %vm2439, %v2431, %v2447
      %v2456 = vsel %vm2440, %v2432, %v2448
      %s2457 = scalar_lea.vmem %s1038, 256
      %v2458 = vld [vmem:[%s2457] sm:$0xff]
      %v2459 = vld [vmem:[%s2457 + $0x8] sm:$0xff]
      %v2460 = vld [vmem:[%s2457 + $0x10] sm:$0xff]
      %v2461 = vld [vmem:[%s2457 + $0x18] sm:$0xff]
      %v2462 = vld [vmem:[%s2457 + $0x20] sm:$0xff]
      %v2463 = vld [vmem:[%s2457 + $0x28] sm:$0xff]
      %v2464 = vld [vmem:[%s2457 + $0x30] sm:$0xff]
      %v2465 = vld [vmem:[%s2457 + $0x38] sm:$0xff]
      %v2466 = vld [vmem:[%s2457 + $0x40] sm:$0xff]
      %v2467 = vld [vmem:[%s2457 + $0x48] sm:$0xff]
      %v2468 = vld [vmem:[%s2457 + $0x50] sm:$0xff]
      %v2469 = vld [vmem:[%s2457 + $0x58] sm:$0xff]
      %v2470 = vld [vmem:[%s2457 + $0x60] sm:$0xff]
      %v2471 = vld [vmem:[%s2457 + $0x68] sm:$0xff]
      %v2472 = vld [vmem:[%s2457 + $0x70] sm:$0xff]
      %v2473 = vld [vmem:[%s2457 + $0x78] sm:$0xff]
      %v2474 = vld [vmem:[%s2457 + $0x80] sm:$0xff]
      %v2475 = vld [vmem:[%s2457 + $0x88] sm:$0xff]
      %v2476 = vld [vmem:[%s2457 + $0x90] sm:$0xff]
      %v2477 = vld [vmem:[%s2457 + $0x98] sm:$0xff]
      %v2478 = vld [vmem:[%s2457 + $0xa0] sm:$0xff]
      %v2479 = vld [vmem:[%s2457 + $0xa8] sm:$0xff]
      %v2480 = vld [vmem:[%s2457 + $0xb0] sm:$0xff]
      %v2481 = vld [vmem:[%s2457 + $0xb8] sm:$0xff]
      %v2482 = vld [vmem:[%s2457 + $0xc0] sm:$0xff]
      %v2483 = vld [vmem:[%s2457 + $0xc8] sm:$0xff]
      %v2484 = vld [vmem:[%s2457 + $0xd0] sm:$0xff]
      %v2485 = vld [vmem:[%s2457 + $0xd8] sm:$0xff]
      %v2486 = vld [vmem:[%s2457 + $0xe0] sm:$0xff]
      %v2487 = vld [vmem:[%s2457 + $0xe8] sm:$0xff]
      %v2488 = vld [vmem:[%s2457 + $0xf0] sm:$0xff]
      %v2489 = vld [vmem:[%s2457 + $0xf8] sm:$0xff]
      %s2490 = scalar_lea.vmem %s1042, 1
      %v2491 = vld [vmem:[%s2490] sm:$0x1]
      %v2493 = vlaneseq
      %v2494 = vshrl.u32 %v2493, 7
      %v2495 = vsub.s32 0, %v2494
      %v2496 = vrot.slane %v2491, %v2495
      %2498 = vmatprep.subr.mxu0 0.0
      %2499 = vmatpush1.msra.mxu0 %v2458
      %2500 = vmatprep.subr.mxu0 0.0
      %2501 = vmatpush1.msra.mxu0 %v2459
      %2502 = vmatprep.subr.mxu0 0.0
      %2503 = vmatpush1.msra.mxu0 %v2460
      %2504 = vmatprep.subr.mxu0 0.0
      %2505 = vmatpush1.msra.mxu0 %v2461
      %2506 = vmatprep.subr.mxu0 0.0
      %2507 = vmatpush1.msra.mxu0 %v2462
      %2508 = vmatprep.subr.mxu0 0.0
      %2509 = vmatpush1.msra.mxu0 %v2463
      %2510 = vmatprep.subr.mxu0 0.0
      %2511 = vmatpush1.msra.mxu0 %v2464
      %2512 = vmatprep.subr.mxu0 0.0
      %2513 = vmatpush1.msra.mxu0 %v2465
      %2514 = vmatprep.subr.mxu0 0.0
      %2515 = vmatpush1.msra.mxu0 %v2466
      %2516 = vmatprep.subr.mxu0 0.0
      %2517 = vmatpush1.msra.mxu0 %v2467
      %2518 = vmatprep.subr.mxu0 0.0
      %2519 = vmatpush1.msra.mxu0 %v2468
      %2520 = vmatprep.subr.mxu0 0.0
      %2521 = vmatpush1.msra.mxu0 %v2469
      %2522 = vmatprep.subr.mxu0 0.0
      %2523 = vmatpush1.msra.mxu0 %v2470
      %2524 = vmatprep.subr.mxu0 0.0
      %2525 = vmatpush1.msra.mxu0 %v2471
      %2526 = vmatprep.subr.mxu0 0.0
      %2527 = vmatpush1.msra.mxu0 %v2472
      %2528 = vmatprep.subr.mxu0 0.0
      %2529 = vmatpush1.msra.mxu0 %v2473
      %2530 = vmatprep.subr.mxu0 0.0
      %2531 = vmatpush1.msra.mxu0 %v2474
      %2532 = vmatprep.subr.mxu0 0.0
      %2533 = vmatpush1.msra.mxu0 %v2475
      %2534 = vmatprep.subr.mxu0 0.0
      %2535 = vmatpush1.msra.mxu0 %v2476
      %2536 = vmatprep.subr.mxu0 0.0
      %2537 = vmatpush1.msra.mxu0 %v2477
      %2538 = vmatprep.subr.mxu0 0.0
      %2539 = vmatpush1.msra.mxu0 %v2478
      %2540 = vmatprep.subr.mxu0 0.0
      %2541 = vmatpush1.msra.mxu0 %v2479
      %2542 = vmatprep.subr.mxu0 0.0
      %2543 = vmatpush1.msra.mxu0 %v2480
      %2544 = vmatprep.subr.mxu0 0.0
      %2545 = vmatpush1.msra.mxu0 %v2481
      %2546 = vmatprep.subr.mxu0 0.0
      %2547 = vmatpush1.msra.mxu0 %v2482
      %2548 = vmatprep.subr.mxu0 0.0
      %2549 = vmatpush1.msra.mxu0 %v2483
      %2550 = vmatprep.subr.mxu0 0.0
      %2551 = vmatpush1.msra.mxu0 %v2484
      %2552 = vmatprep.subr.mxu0 0.0
      %2553 = vmatpush1.msra.mxu0 %v2485
      %2554 = vmatprep.subr.mxu0 0.0
      %2555 = vmatpush1.msra.mxu0 %v2486
      %2556 = vmatprep.subr.mxu0 0.0
      %2557 = vmatpush1.msra.mxu0 %v2487
      %2558 = vmatprep.subr.mxu0 0.0
      %2559 = vmatpush1.msra.mxu0 %v2488
      %2560 = vmatprep.subr.mxu0 0.0
      %2561 = vmatpush1.msra.mxu0 %v2489
      %2562 = vmatprep.mubr.f32.mxu0 %v2450
      %2563 = vmatmul.mubr.f32.gmra.mrb[0].mxu0 %v2449
      %v2564 = vpop.f32.mrb[0].mxu0
      %v2565 = vadd.f32 %v2496, %v2564
      %v2566 = vpop.f32.mrb[0].mxu0
      %2567 = vmatprep.mubr.f32.mxu0 %v2452
      %2568 = vmatmul.mubr.f32.gmra.mrb[0].mxu0 %v2451
      %v2569 = vpop.f32.mrb[0].mxu0
      %v2570 = vadd.f32 %v2496, %v2569
      %v2571 = vpop.f32.mrb[0].mxu0
      %2572 = vmatprep.mubr.f32.mxu0 %v2454
      %2573 = vmatmul.mubr.f32.gmra.mrb[0].mxu0 %v2453
      %v2574 = vpop.f32.mrb[0].mxu0
      %v2575 = vadd.f32 %v2496, %v2574
      %v2576 = vpop.f32.mrb[0].mxu0
      %2577 = vmatprep.mubr.f32.mxu0 %v2456
      %2578 = vmatmul.mubr.f32.gmra.mrb[0].mxu0 %v2455
      %v2579 = vpop.f32.mrb[0].mxu0
      %v2580 = vadd.f32 %v2496, %v2579
      %v2581 = vpop.f32.mrb[0].mxu0
      %2582 = vdwg.mxu0
      %v2583 = vand.u32 2147483647, %v2565
      %v2584 = vand.u32 2147483647, %v2570
      %v2585 = vand.u32 2147483647, %v2575
      %v2586 = vand.u32 2147483647, %v2580
      %v2587 = vsel %vm1103, %v2583, 0.0
      %v2588 = vsel %vm1103, %v2584, 0.0
      %v2589 = vadd.f32 %v2587, %v2588
      %v2590 = vsel %vm1103, %v2585, 0.0
      %v2591 = vadd.f32 %v2589, %v2590
      %v2592 = vsel %vm1103, %v2586, 0.0
      %v2593 = vadd.f32 %v2591, %v2592
      %2594 = vadd.xlane.f32.xlu0 %v2593
      %v2595 = vpop.xlane.xlu0 %2594
      %v2596 = vrot.slane %v2595, 4
      %v2597 = vadd.f32 %v2595, %v2596
      %v2598 = vrot.slane %v2597, 2
      %v2599 = vadd.f32 %v2597, %v2598
      %v2600 = vrot.slane %v2599, 1
      %v2601 = vadd.f32 %v2599, %v2600
      %s2602 = vtos %v2601
      %v2603 = vrcp.pop 64.0
      %s2604 = vtos %v2603
      %s2605 = smul.f32 %s2602, %s2604
      %v2606 = vlaneseq
      %v2607 = vand.u32 %v2606, 127
      %v2608 = vld [vmem:[%s23] sm:$0x1]
      %v2609 = vstv %s35
      %vm2610 = vcmp.eq.s32.totalorder %v2607, %v2609
      %v2611 = vstv %s2605
      %v2612 = vsel %vm2610, %v2611, 0.0
      %v2613 = vadd.f32 %v2608, %v2612
      %vm2614 = vcmask 16384
      %2615 = vst.msk [vmem:[%s23] sm:$0x1] %vm2614, %v2613
      %v2616 = vadd.f32 %v1459, %v2565
      %v2617 = vadd.f32 %v1460, %v2570
      %v2618 = vadd.f32 %v1461, %v2575
      %v2619 = vadd.f32 %v1462, %v2580
      %v2620 = vld [vmem:[%s1047] sm:$0xff]
      %v2621 = vld [vmem:[%s1047 + $0x8] sm:$0xff]
      %v2622 = vld [vmem:[%s1047 + $0x10] sm:$0xff]
      %v2623 = vld [vmem:[%s1047 + $0x18] sm:$0xff]
      %v2624 = vld [vmem:[%s1050] sm:$0x1]
      %v2626 = vlaneseq
      %v2627 = vshrl.u32 %v2626, 7
      %v2628 = vsub.s32 0, %v2627
      %v2629 = vrot.slane %v2624, %v2628
      %v2632 = vsel %vm1103, %v2616, 0
      %v2635 = vsel %vm1103, %v2617, 0
      %v2638 = vsel %vm1103, %v2618, 0
      %v2641 = vsel %vm1103, %v2619, 0
      %2643 = vmatprep.subr.mxu0 0.0
      %2644 = vmatpush1.msra.mxu0 %v2620
      %2645 = vmatprep.subr.mxu0 0.0
      %2646 = vmatpush1.msra.mxu0 %v2621
      %2647 = vmatprep.subr.mxu0 0.0
      %2648 = vmatpush1.msra.mxu0 %v2622
      %2649 = vmatprep.subr.mxu0 0.0
      %2650 = vmatpush1.msra.mxu0 %v2623
      %2651 = vmatprep.subr.mxu0 0.0
      %2652 = vmatpush1.msra.mxu0 0.0
      %2653 = vmatprep.subr.mxu0 0.0
      %2654 = vmatpush1.msra.mxu0 0.0
      %2655 = vmatprep.subr.mxu0 0.0
      %2656 = vmatpush1.msra.mxu0 0.0
      %2657 = vmatprep.subr.mxu0 0.0
      %2658 = vmatpush1.msra.mxu0 0.0
      %2659 = vmatprep.subr.mxu0 0.0
      %2660 = vmatpush1.msra.mxu0 0.0
      %2661 = vmatprep.subr.mxu0 0.0
      %2662 = vmatpush1.msra.mxu0 0.0
      %2663 = vmatprep.subr.mxu0 0.0
      %2664 = vmatpush1.msra.mxu0 0.0
      %2665 = vmatprep.subr.mxu0 0.0
      %2666 = vmatpush1.msra.mxu0 0.0
      %2667 = vmatprep.subr.mxu0 0.0
      %2668 = vmatpush1.msra.mxu0 0.0
      %2669 = vmatprep.subr.mxu0 0.0
      %2670 = vmatpush1.msra.mxu0 0.0
      %2671 = vmatprep.subr.mxu0 0.0
      %2672 = vmatpush1.msra.mxu0 0.0
      %2673 = vmatprep.subr.mxu0 0.0
      %2674 = vmatpush1.msra.mxu0 0.0
      %2675 = vmatprep.subr.mxu0 0.0
      %2676 = vmatpush1.msra.mxu0 0.0
      %2677 = vmatprep.subr.mxu0 0.0
      %2678 = vmatpush1.msra.mxu0 0.0
      %2679 = vmatprep.subr.mxu0 0.0
      %2680 = vmatpush1.msra.mxu0 0.0
      %2681 = vmatprep.subr.mxu0 0.0
      %2682 = vmatpush1.msra.mxu0 0.0
      %2683 = vmatprep.subr.mxu0 0.0
      %2684 = vmatpush1.msra.mxu0 0.0
      %2685 = vmatprep.subr.mxu0 0.0
      %2686 = vmatpush1.msra.mxu0 0.0
      %2687 = vmatprep.subr.mxu0 0.0
      %2688 = vmatpush1.msra.mxu0 0.0
      %2689 = vmatprep.subr.mxu0 0.0
      %2690 = vmatpush1.msra.mxu0 0.0
      %2691 = vmatprep.subr.mxu0 0.0
      %2692 = vmatpush1.msra.mxu0 0.0
      %2693 = vmatprep.subr.mxu0 0.0
      %2694 = vmatpush1.msra.mxu0 0.0
      %2695 = vmatprep.subr.mxu0 0.0
      %2696 = vmatpush1.msra.mxu0 0.0
      %2697 = vmatprep.subr.mxu0 0.0
      %2698 = vmatpush1.msra.mxu0 0.0
      %2699 = vmatprep.subr.mxu0 0.0
      %2700 = vmatpush1.msra.mxu0 0.0
      %2701 = vmatprep.subr.mxu0 0.0
      %2702 = vmatpush1.msra.mxu0 0.0
      %2703 = vmatprep.subr.mxu0 0.0
      %2704 = vmatpush1.msra.mxu0 0.0
      %2705 = vmatprep.subr.mxu0 0.0
      %2706 = vmatpush1.msra.mxu0 0.0
      %2707 = vmatprep.mubr.f32.mxu0 0.0
      %2708 = vmatmul.mubr.f32.gmra.mrb[0].mxu0 %v2632
      %v2709 = vpop.f32.mrb[0].mxu0
      %v2710 = vadd.f32 %v2629, %v2709
      %v2711 = vpop.f32.mrb[0].mxu0
      %2712 = vmatprep.mubr.f32.mxu0 0.0
      %2713 = vmatmul.mubr.f32.gmra.mrb[0].mxu0 %v2635
      %v2714 = vpop.f32.mrb[0].mxu0
      %v2715 = vadd.f32 %v2629, %v2714
      %v2716 = vpop.f32.mrb[0].mxu0
      %2717 = vmatprep.mubr.f32.mxu0 0.0
      %2718 = vmatmul.mubr.f32.gmra.mrb[0].mxu0 %v2638
      %v2719 = vpop.f32.mrb[0].mxu0
      %v2720 = vadd.f32 %v2629, %v2719
      %v2721 = vpop.f32.mrb[0].mxu0
      %2722 = vmatprep.mubr.f32.mxu0 0.0
      %2723 = vmatmul.mubr.f32.gmra.mrb[0].mxu0 %v2641
      %v2724 = vpop.f32.mrb[0].mxu0
      %v2725 = vadd.f32 %v2629, %v2724
      %v2726 = vpop.f32.mrb[0].mxu0
      %2727 = vdwg.mxu0
      %2728 = vst.msk [vmem:[%s1055] sm:$0xff] %vm1103, %v2710
      %2729 = vst.msk [vmem:[%s1055 + $0x8] sm:$0xff] %vm1103, %v2715
      %2730 = vst.msk [vmem:[%s1055 + $0x10] sm:$0xff] %vm1103, %v2720
      %2731 = vst.msk [vmem:[%s1055 + $0x18] sm:$0xff] %vm1103, %v2725
      %2732 = vst.msk [vmem:[%s1060] sm:$0xff] %vm1103, %v2616
      %2733 = vst.msk [vmem:[%s1060 + $0x8] sm:$0xff] %vm1103, %v2617
      %2734 = vst.msk [vmem:[%s1060 + $0x10] sm:$0xff] %vm1103, %v2618
      %2735 = vst.msk [vmem:[%s1060 + $0x18] sm:$0xff] %vm1103, %v2619
      %2736 = vst.msk [vmem:[%s1065] sm:$0xff] %vm1103, %v1819
      %2737 = vst.msk [vmem:[%s1065 + $0x8] sm:$0xff] %vm1103, %v1820
      %2738 = vst.msk [vmem:[%s1065 + $0x10] sm:$0xff] %vm1103, %v1821
      %2739 = vst.msk [vmem:[%s1065 + $0x18] sm:$0xff] %vm1103, %v1822
      %p2740 = scmp.lt.s32.totalorder %s35, 2
      %s2741 = scalar_select %p2740, %s35, 2
      %s2742 = smul.addr %s2741, 4
      %s2743 = smul.addr %s2742, 8
      %s2744 = scalar_lea.vmem %s20, %s2743
      %p2745 = scmp.lt.s32.totalorder %s35, 2
      %s2746 = scalar_select %p2745, %s35, 2
      %s2747 = smul.addr %s2746, 4
      %s2748 = smul.addr %s2747, 8
      %s2749 = scalar_lea.vmem %s21, %s2748
      %p2750 = scmp.lt.s32.totalorder %s35, 2
      %s2751 = scalar_select %p2750, %s35, 2
      %s2752 = smul.addr %s2751, 4
      %s2753 = smul.addr %s2752, 8
      %s2754 = scalar_lea.vmem %s22, %s2753
      // Predicated region
      $region105: #{hjepa_forward.3} parent=99 // pred_check
        %p2755 = pneg %p575
      $region106: #{hjepa_forward.3} parent=99 // pred_check_branch
        %2757 = sbr.rel (%p2755) target = $region108
      $region107: #{hjepa_forward.3} parent=99 // pred_region
        _
      $region108: #{hjepa_forward.3} parent=99 // pred_fallthru
        _
      // Predicated region
      $region109: #{hjepa_forward.3} parent=99 // pred_check
        %p2758 = pneg %p601
      $region110: #{hjepa_forward.3} parent=99 // pred_check_branch
        %2760 = sbr.rel (%p2758) target = $region112
      $region111: #{hjepa_forward.3} parent=99 // pred_region
        _
      $region112: #{hjepa_forward.3} parent=99 // pred_fallthru
        _
      // Predicated region
      $region113: #{hjepa_forward.3} parent=99 // pred_check
        %p2761 = pneg %p627
      $region114: #{hjepa_forward.3} parent=99 // pred_check_branch
        %2763 = sbr.rel (%p2761) target = $region116
      $region115: #{hjepa_forward.3} parent=99 // pred_region
        _
      $region116: #{hjepa_forward.3} parent=99 // pred_fallthru
        _
      // Predicated region
      $region117: #{hjepa_forward.3} parent=99 // pred_check
        %p2764 = pneg %p648
      $region118: #{hjepa_forward.3} parent=99 // pred_check_branch
        %2766 = sbr.rel (%p2764) target = $region120
      $region119: #{hjepa_forward.3} parent=99 // pred_region
        _
      $region120: #{hjepa_forward.3} parent=99 // pred_fallthru
        _
      // Predicated region
      $region121: #{hjepa_forward.3} parent=99 // pred_check
        %p2767 = pneg %p648
      $region122: #{hjepa_forward.3} parent=99 // pred_check_branch
        %2769 = sbr.rel (%p2767) target = $region124
      $region123: #{hjepa_forward.3} parent=99 // pred_region
        _
      $region124: #{hjepa_forward.3} parent=99 // pred_fallthru
        _
    $region100: #{hjepa_forward.3} parent=5 // pred_fallthru
      _
    %p2770 = scmp.le.s32.totalorder 2, %s30
    // Predicated region
    $region125: #{hjepa_forward.3} parent=5 // pred_check
      %p2771 = pneg %p2770
    $region126: #{hjepa_forward.3} parent=5 // pred_check_branch
      %2773 = sbr.rel (%p2771) target = $region128
    $region127: #{hjepa_forward.3} parent=5 // pred_region
      %s2774 = ssub.s32 %s30, 2
      // Predicated region
      $region129: #{hjepa_forward.3} parent=127 // pred_check
        %p2775 = pneg %p581
      $region130: #{hjepa_forward.3} parent=127 // pred_check_branch
        %2777 = sbr.rel (%p2775) target = $region132
      $region131: #{hjepa_forward.3} parent=127 // pred_region
        %p2778 = scmp.lt.s32.totalorder %s36, 2
        %s2779 = scalar_select %p2778, %s36, 2
        %s2780 = smul.addr %s2779, 4
        %s2781 = smul.addr %s2780, 8
        %s2782 = scalar_lea.vmem %s20, %s2781
      $region132: #{hjepa_forward.3} parent=127 // pred_fallthru
        _
      // Predicated region
      $region133: #{hjepa_forward.3} parent=127 // pred_check
        %p2783 = pneg %p607
      $region134: #{hjepa_forward.3} parent=127 // pred_check_branch
        %2785 = sbr.rel (%p2783) target = $region136
      $region135: #{hjepa_forward.3} parent=127 // pred_region
        %p2786 = scmp.lt.s32.totalorder %s36, 2
        %s2787 = scalar_select %p2786, %s36, 2
        %s2788 = smul.addr %s2787, 4
        %s2789 = smul.addr %s2788, 8
        %s2790 = scalar_lea.vmem %s21, %s2789
      $region136: #{hjepa_forward.3} parent=127 // pred_fallthru
        _
      // Predicated region
      $region137: #{hjepa_forward.3} parent=127 // pred_check
        %p2791 = pneg %p633
      $region138: #{hjepa_forward.3} parent=127 // pred_check_branch
        %2793 = sbr.rel (%p2791) target = $region140
      $region139: #{hjepa_forward.3} parent=127 // pred_region
        %p2794 = scmp.lt.s32.totalorder %s36, 2
        %s2795 = scalar_select %p2794, %s36, 2
        %s2796 = smul.addr %s2795, 4
        %s2797 = smul.addr %s2796, 8
        %s2798 = scalar_lea.vmem %s22, %s2797
      $region140: #{hjepa_forward.3} parent=127 // pred_fallthru
        _
    $region128: #{hjepa_forward.3} parent=5 // pred_fallthru
      _
  $region6: #{hjepa_forward.3} parent=0 // loop_footer
    %s34 = sadd.s32 1, %s30
  $region7: #{hjepa_forward.3} parent=0 // loop_footer_branch
    %29 = sbr.rel target = $region3
  $region8: #{hjepa_forward.3} parent=0 // loop_exit
    _

</llo_original>
